<compile_context>
chip_gen: v7x
topology: tpu7x:2x2x1
jax: 0.10.0
libtpu: 0.0.40
codegen_flags: <defaults>
</compile_context>

<pallas_src>
import functools

import jax
import jax.numpy as jnp
from jax.experimental import pallas as pl
from jax.experimental.pallas import tpu as pltpu

LANE = 128  # TPU lane width; last-dim tiles should be multiples of this.


def _round_up(x, m):
    return (x + m - 1) // m * m


def autoencoder_kernel(x_ref,
                       w1_ref, b1_ref,
                       w2_ref, b2_ref,
                       w3_ref, b3_ref,
                       w4_ref, b4_ref,
                       o_ref):
    """Fused 4x (bf16 MXU matmul + f32 bias + ReLU); all operands VMEM resident."""
    f32 = jnp.float32
    bf16 = jnp.bfloat16
    # encoder
    h = jnp.dot(x_ref[...], w1_ref[...], preferred_element_type=f32) + b1_ref[...]
    h = jnp.maximum(h, 0.0).astype(bf16)
    h = jnp.dot(h, w2_ref[...], preferred_element_type=f32) + b2_ref[...]
    h = jnp.maximum(h, 0.0).astype(bf16)
    # decoder
    h = jnp.dot(h, w3_ref[...], preferred_element_type=f32) + b3_ref[...]
    h = jnp.maximum(h, 0.0).astype(bf16)
    h = jnp.dot(h, w4_ref[...], preferred_element_type=f32) + b4_ref[...]
    o_ref[...] = jnp.maximum(h, 0.0).astype(o_ref.dtype)


@functools.partial(jax.jit, static_argnames=("batch_tile",))
def autoencoder_forward(x, params, *, batch_tile=256):
    """x: (B, 784) float32. params: dict w1..w4 (in,out), b1..b4 (1,out), float32."""
    assert batch_tile % 8 == 0, "batch_tile must be a multiple of 8 (sublane)"
    B, D_in = x.shape
    w1, b1 = params["w1"], params["b1"]
    w2, b2 = params["w2"], params["b2"]
    w3, b3 = params["w3"], params["b3"]
    w4, b4 = params["w4"], params["b4"]
    H = w2.shape[1]
    D_mid = w1.shape[1]          # 256 (already a lane multiple)
    D_out = w4.shape[1]

    f32, bf16 = jnp.float32, jnp.bfloat16

    # ---- wrapper-side layout plumbing: pad to lane/tile multiples, cast to bf16.
    d_in_p = _round_up(D_in, LANE)    # 784 -> 896
    d_out_p = _round_up(D_out, LANE)  # 784 -> 896
    h_p = _round_up(H, LANE)          # 32  -> 128
    b_p = _round_up(B, batch_tile)    # ragged batch -> tile multiple

    xp = jnp.zeros((b_p, d_in_p), bf16).at[:B, :D_in].set(x.astype(bf16))
    w1p = jnp.zeros((d_in_p, D_mid), bf16).at[:D_in, :].set(w1.astype(bf16))
    b1p = b1.astype(f32)
    w2p = jnp.zeros((D_mid, h_p), bf16).at[:, :H].set(w2.astype(bf16))
    b2p = jnp.zeros((1, h_p), f32).at[:, :H].set(b2.astype(f32))
    w3p = jnp.zeros((h_p, D_mid), bf16).at[:H, :].set(w3.astype(bf16))
    b3p = b3.astype(f32)
    w4p = jnp.zeros((D_mid, d_out_p), bf16).at[:, :D_out].set(w4.astype(bf16))
    b4p = jnp.zeros((1, d_out_p), f32).at[:, :D_out].set(b4.astype(f32))

    grid = (b_p // batch_tile,)

    # Weights / biases are small (<2 MiB total in bf16); load full arrays each step
    # (constant index_map -> DMA'd once, revisited from VMEM).
    full = lambda a: pl.BlockSpec(a.shape, lambda i: (0,) * a.ndim)

    out_p = pl.pallas_call(
        autoencoder_kernel,
        out_shape=jax.ShapeDtypeStruct((b_p, d_out_p), f32),
        grid_spec=pltpu.PrefetchScalarGridSpec(
            num_scalar_prefetch=0,
            grid=grid,
            in_specs=[
                pl.BlockSpec((batch_tile, d_in_p), lambda i: (i, 0)),  # x batch tile
                full(w1p), full(b1p),
                full(w2p), full(b2p),
                full(w3p), full(b3p),
                full(w4p), full(b4p),
            ],
            out_specs=pl.BlockSpec((batch_tile, d_out_p), lambda i: (i, 0)),
        ),
        compiler_params=pltpu.CompilerParams(
            dimension_semantics=("parallel",),           # shards batch grid on v7x
            vmem_limit_bytes=32 * 1024 * 1024,           # safe headroom on v5e..v7x
        ),
    )(xp, w1p, b1p, w2p, b2p, w3p, b3p, w4p, b4p)

    # Slice away batch / feature padding.
    return out_p[:B, :D_out]


def init_params(key, no_of_weights):
    """Deterministic synthetic parameters (same shapes as the PyTorch module)."""
    dims = [(28 * 28, 256), (256, no_of_weights), (no_of_weights, 256), (256, 28 * 28)]
    params = {}
    for idx, (din, dout) in enumerate(dims, start=1):
        key, kw, kb = jax.random.split(key, 3)
        scale = 1.0 / jnp.sqrt(jnp.float32(din))
        params[f"w{idx}"] = jax.random.uniform(
            kw, (din, dout), jnp.float32, minval=-scale, maxval=scale)
        params[f"b{idx}"] = jax.random.uniform(
            kb, (1, dout), jnp.float32, minval=-scale, maxval=scale)
    return params


def reference_forward(x, p):
    """Pure-JAX reference mirroring the kernel's bf16-storage / f32-accumulation."""
    bf16, f32 = jnp.bfloat16, jnp.float32
    h = x.astype(bf16)
    h = jnp.maximum(jnp.dot(h, p["w1"].astype(bf16), preferred_element_type=f32) + p["b1"], 0.0).astype(bf16)
    h = jnp.maximum(jnp.dot(h, p["w2"].astype(bf16), preferred_element_type=f32) + p["b2"], 0.0).astype(bf16)
    h = jnp.maximum(jnp.dot(h, p["w3"].astype(bf16), preferred_element_type=f32) + p["b3"], 0.0).astype(bf16)
    h = jnp.maximum(jnp.dot(h, p["w4"].astype(bf16), preferred_element_type=f32) + p["b4"], 0.0)
    return h.astype(f32)


if __name__ == "__main__":
    key = jax.random.PRNGKey(0)
    no_of_weights = 32    # bottleneck size (module's `no_of_weights`)
    batch = 384           # deliberately NOT a multiple of the 256-row tile

    key, kx = jax.random.split(key)
    x = jax.random.normal(kx, (batch, 28 * 28), jnp.float32)
    params = init_params(key, no_of_weights)

    out = autoencoder_forward(x, params, batch_tile=256)
    out = jax.block_until_ready(out)

    ref = reference_forward(x, params)
    assert out.shape == (batch, 28 * 28), out.shape
    max_err = float(jnp.max(jnp.abs(out - ref)))
    assert jnp.allclose(out, ref, atol=2e-2, rtol=2e-2), f"mismatch vs reference (max err {max_err})"

    print("KERNEL_OK")
</pallas_src>

<mosaic_0001>
module attributes {stable_mosaic.version = 11 : i64} {
  func.func @autoencoder_kernel(%arg0: i32, %arg1: memref<256x896xbf16, #tpu.memory_space<vmem>>, %arg2: memref<896x256xbf16, #tpu.memory_space<vmem>>, %arg3: memref<1x256xf32, #tpu.memory_space<vmem>>, %arg4: memref<256x128xbf16, #tpu.memory_space<vmem>>, %arg5: memref<1x128xf32, #tpu.memory_space<vmem>>, %arg6: memref<128x256xbf16, #tpu.memory_space<vmem>>, %arg7: memref<1x256xf32, #tpu.memory_space<vmem>>, %arg8: memref<256x896xbf16, #tpu.memory_space<vmem>>, %arg9: memref<1x896xf32, #tpu.memory_space<vmem>>, %arg10: memref<256x896xf32, #tpu.memory_space<vmem>>) attributes {dimension_semantics = [#tpu.dimension_semantics<parallel>], iteration_bounds = array<i64: 2>, scalar_prefetch = 0 : i64, scratch_operands = 0 : i64, tpu.core_type = #tpu.core_type<tc>, window_params = [{transform_indices = @transform_0, window_bounds = array<i64: 256, 896>}, {pipeline_mode = #tpu.pipeline_mode<synchronous>, transform_indices = @transform_1, window_bounds = array<i64: 896, 256>}, {pipeline_mode = #tpu.pipeline_mode<synchronous>, transform_indices = @transform_2, window_bounds = array<i64: 1, 256>}, {pipeline_mode = #tpu.pipeline_mode<synchronous>, transform_indices = @transform_3, window_bounds = array<i64: 256, 128>}, {pipeline_mode = #tpu.pipeline_mode<synchronous>, transform_indices = @transform_4, window_bounds = array<i64: 1, 128>}, {pipeline_mode = #tpu.pipeline_mode<synchronous>, transform_indices = @transform_5, window_bounds = array<i64: 128, 256>}, {pipeline_mode = #tpu.pipeline_mode<synchronous>, transform_indices = @transform_6, window_bounds = array<i64: 1, 256>}, {pipeline_mode = #tpu.pipeline_mode<synchronous>, transform_indices = @transform_7, window_bounds = array<i64: 256, 896>}, {pipeline_mode = #tpu.pipeline_mode<synchronous>, transform_indices = @transform_8, window_bounds = array<i64: 1, 896>}, {transform_indices = @transform_9, window_bounds = array<i64: 256, 896>}]} {
    %c0 = arith.constant 0 : index
    %c0_0 = arith.constant 0 : index
    %0 = vector.load %arg1[%c0, %c0_0] : memref<256x896xbf16, #tpu.memory_space<vmem>>, vector<256x896xbf16>
    %c0_1 = arith.constant 0 : index
    %c0_2 = arith.constant 0 : index
    %1 = vector.load %arg2[%c0_1, %c0_2] : memref<896x256xbf16, #tpu.memory_space<vmem>>, vector<896x256xbf16>
    %cst = arith.constant dense<0.000000e+00> : vector<256x256xf32>
    %2 = tpu.matmul %0, %1, %cst {dimension_numbers = #tpu.dot_dimension_numbers<[1], [0], [0], [1], [0, 0, 1, 1], [], []>} : vector<256x896xbf16>, vector<896x256xbf16>, vector<256x256xf32> -> vector<256x256xf32>
    %c0_3 = arith.constant 0 : index
    %c0_4 = arith.constant 0 : index
    %3 = vector.load %arg3[%c0_3, %c0_4] : memref<1x256xf32, #tpu.memory_space<vmem>>, vector<1x256xf32>
    %4 = vector.broadcast %3 : vector<1x256xf32> to vector<256x256xf32>
    %5 = arith.addf %2, %4 : vector<256x256xf32>
    %cst_5 = arith.constant 0.000000e+00 : f32
    %6 = vector.broadcast %cst_5 : f32 to vector<256x256xf32>
    %7 = arith.maximumf %5, %6 : vector<256x256xf32>
    %8 = arith.truncf %7 : vector<256x256xf32> to vector<256x256xbf16>
    %c0_6 = arith.constant 0 : index
    %c0_7 = arith.constant 0 : index
    %9 = vector.load %arg4[%c0_6, %c0_7] : memref<256x128xbf16, #tpu.memory_space<vmem>>, vector<256x128xbf16>
    %cst_8 = arith.constant dense<0.000000e+00> : vector<256x128xf32>
    %10 = tpu.matmul %8, %9, %cst_8 {dimension_numbers = #tpu.dot_dimension_numbers<[1], [0], [0], [1], [0, 0, 1, 1], [], []>} : vector<256x256xbf16>, vector<256x128xbf16>, vector<256x128xf32> -> vector<256x128xf32>
    %c0_9 = arith.constant 0 : index
    %c0_10 = arith.constant 0 : index
    %11 = vector.load %arg5[%c0_9, %c0_10] : memref<1x128xf32, #tpu.memory_space<vmem>>, vector<1x128xf32>
    %12 = vector.broadcast %11 : vector<1x128xf32> to vector<256x128xf32>
    %13 = arith.addf %10, %12 : vector<256x128xf32>
    %cst_11 = arith.constant 0.000000e+00 : f32
    %14 = vector.broadcast %cst_11 : f32 to vector<256x128xf32>
    %15 = arith.maximumf %13, %14 : vector<256x128xf32>
    %16 = arith.truncf %15 : vector<256x128xf32> to vector<256x128xbf16>
    %c0_12 = arith.constant 0 : index
    %c0_13 = arith.constant 0 : index
    %17 = vector.load %arg6[%c0_12, %c0_13] : memref<128x256xbf16, #tpu.memory_space<vmem>>, vector<128x256xbf16>
    %cst_14 = arith.constant dense<0.000000e+00> : vector<256x256xf32>
    %18 = tpu.matmul %16, %17, %cst_14 {dimension_numbers = #tpu.dot_dimension_numbers<[1], [0], [0], [1], [0, 0, 1, 1], [], []>} : vector<256x128xbf16>, vector<128x256xbf16>, vector<256x256xf32> -> vector<256x256xf32>
    %c0_15 = arith.constant 0 : index
    %c0_16 = arith.constant 0 : index
    %19 = vector.load %arg7[%c0_15, %c0_16] : memref<1x256xf32, #tpu.memory_space<vmem>>, vector<1x256xf32>
    %20 = vector.broadcast %19 : vector<1x256xf32> to vector<256x256xf32>
    %21 = arith.addf %18, %20 : vector<256x256xf32>
    %cst_17 = arith.constant 0.000000e+00 : f32
    %22 = vector.broadcast %cst_17 : f32 to vector<256x256xf32>
    %23 = arith.maximumf %21, %22 : vector<256x256xf32>
    %24 = arith.truncf %23 : vector<256x256xf32> to vector<256x256xbf16>
    %c0_18 = arith.constant 0 : index
    %c0_19 = arith.constant 0 : index
    %25 = vector.load %arg8[%c0_18, %c0_19] : memref<256x896xbf16, #tpu.memory_space<vmem>>, vector<256x896xbf16>
    %cst_20 = arith.constant dense<0.000000e+00> : vector<256x896xf32>
    %26 = tpu.matmul %24, %25, %cst_20 {dimension_numbers = #tpu.dot_dimension_numbers<[1], [0], [0], [1], [0, 0, 1, 1], [], []>} : vector<256x256xbf16>, vector<256x896xbf16>, vector<256x896xf32> -> vector<256x896xf32>
    %c0_21 = arith.constant 0 : index
    %c0_22 = arith.constant 0 : index
    %27 = vector.load %arg9[%c0_21, %c0_22] : memref<1x896xf32, #tpu.memory_space<vmem>>, vector<1x896xf32>
    %28 = vector.broadcast %27 : vector<1x896xf32> to vector<256x896xf32>
    %29 = arith.addf %26, %28 : vector<256x896xf32>
    %cst_23 = arith.constant 0.000000e+00 : f32
    %30 = vector.broadcast %cst_23 : f32 to vector<256x896xf32>
    %31 = arith.maximumf %29, %30 : vector<256x896xf32>
    %c0_24 = arith.constant 0 : index
    %c0_25 = arith.constant 0 : index
    %32 = vector.load %arg10[%c0_24, %c0_25] : memref<256x896xf32, #tpu.memory_space<vmem>>, vector<256x896xf32>
    tpu.vector_store %arg10[%c0_24, %c0_25], %31 {strides = array<i32>} : memref<256x896xf32, #tpu.memory_space<vmem>>, vector<256x896xf32>,
    return
  }
  func.func @transform_0(%arg0: i32) -> (i32, i32) {
    %c0_i32 = arith.constant 0 : i32
    %c0_i32_0 = arith.constant 0 : i32
    return %arg0, %c0_i32 : i32, i32
  }
  func.func @transform_1(%arg0: i32) -> (i32, i32) {
    %c0_i32 = arith.constant 0 : i32
    %c0_i32_0 = arith.constant 0 : i32
    %c0_i32_1 = arith.constant 0 : i32
    return %c0_i32, %c0_i32_0 : i32, i32
  }
  func.func @transform_2(%arg0: i32) -> (i32, i32) {
    %c0_i32 = arith.constant 0 : i32
    %c0_i32_0 = arith.constant 0 : i32
    %c0_i32_1 = arith.constant 0 : i32
    return %c0_i32, %c0_i32_0 : i32, i32
  }
  func.func @transform_3(%arg0: i32) -> (i32, i32) {
    %c0_i32 = arith.constant 0 : i32
    %c0_i32_0 = arith.constant 0 : i32
    %c0_i32_1 = arith.constant 0 : i32
    return %c0_i32, %c0_i32_0 : i32, i32
  }
  func.func @transform_4(%arg0: i32) -> (i32, i32) {
    %c0_i32 = arith.constant 0 : i32
    %c0_i32_0 = arith.constant 0 : i32
    %c0_i32_1 = arith.constant 0 : i32
    return %c0_i32, %c0_i32_0 : i32, i32
  }
  func.func @transform_5(%arg0: i32) -> (i32, i32) {
    %c0_i32 = arith.constant 0 : i32
    %c0_i32_0 = arith.constant 0 : i32
    %c0_i32_1 = arith.constant 0 : i32
    return %c0_i32, %c0_i32_0 : i32, i32
  }
  func.func @transform_6(%arg0: i32) -> (i32, i32) {
    %c0_i32 = arith.constant 0 : i32
    %c0_i32_0 = arith.constant 0 : i32
    %c0_i32_1 = arith.constant 0 : i32
    return %c0_i32, %c0_i32_0 : i32, i32
  }
  func.func @transform_7(%arg0: i32) -> (i32, i32) {
    %c0_i32 = arith.constant 0 : i32
    %c0_i32_0 = arith.constant 0 : i32
    %c0_i32_1 = arith.constant 0 : i32
    return %c0_i32, %c0_i32_0 : i32, i32
  }
  func.func @transform_8(%arg0: i32) -> (i32, i32) {
    %c0_i32 = arith.constant 0 : i32
    %c0_i32_0 = arith.constant 0 : i32
    %c0_i32_1 = arith.constant 0 : i32
    return %c0_i32, %c0_i32_0 : i32, i32
  }
  func.func @transform_9(%arg0: i32) -> (i32, i32) {
    %c0_i32 = arith.constant 0 : i32
    %c0_i32_0 = arith.constant 0 : i32
    return %arg0, %c0_i32 : i32, i32
  }
}

</mosaic_0001>

<llo_original>
// kernel: autoencoder_forward.1
$region0: #{autoencoder_forward.1}
  #allocation0 [shape = 'u32[]', space=smem, size = 0x4, offset = 0x4, fixed_abs, tag = 'smem constant byte address 0x4 - core index']
  #allocation1 [shape = 'u32[144,128]{1,0:T(1,128)}', space=vmem, size = 0x12000, scoped, tag = 'internal scratch']
  %s0 = inlined_call_operand.vmem [shape: bf16[512,896], index: 0, kind: input, shape index: {}]
  %s1 = inlined_call_operand.vmem [shape: bf16[896,256], index: 1, kind: input, shape index: {}]
  %s2 = inlined_call_operand.vmem [shape: f32[1,256], index: 2, kind: input, shape index: {}]
  %s3 = inlined_call_operand.vmem [shape: bf16[256,128], index: 3, kind: input, shape index: {}]
  %s4 = inlined_call_operand.vmem [shape: f32[1,128], index: 4, kind: input, shape index: {}]
  %s5 = inlined_call_operand.vmem [shape: bf16[128,256], index: 5, kind: input, shape index: {}]
  %s6 = inlined_call_operand.vmem [shape: f32[1,256], index: 6, kind: input, shape index: {}]
  %s7 = inlined_call_operand.vmem [shape: bf16[256,896], index: 7, kind: input, shape index: {}]
  %s8 = inlined_call_operand.vmem [shape: f32[1,896], index: 8, kind: input, shape index: {}]
  %s9 = inlined_call_operand.vmem [shape: f32[512,896], index: 9, kind: output, shape index: {}]
  %s10 = sld [smem:[#allocation0]]
  $region69: #{autoencoder_forward.1} parent=0
    _
  %s12 = ssub.s32 1, %s10
  %s13 = scalar_select 0, %s12, %s10
  loop: start=0, step=1, limit=4
  $region2: #{autoencoder_forward.1} parent=0 // loop_pre_header
    _
  $region3: #{autoencoder_forward.1} parent=0 // loop_header
    %s15 = sphi 0, %s19
    %p16 = scmp.ge.s32.totalorder %s15, 4
    %s25 = sphi 0, %s27
    %s28 = sphi 0, %s25
    %s29 = sphi 0, %s28
    %s45 = sphi 0, %s29
    %s49 = sphi 0, %s49
    %s51 = sphi 0, %s49
    %s52 = sphi 0, %s51
    %s66 = sphi 0, %s52
    %s70 = sphi 0, %s70
    %s72 = sphi 0, %s70
    %s73 = sphi 0, %s72
    %s87 = sphi 0, %s73
    %s91 = sphi 0, %s91
    %s93 = sphi 0, %s91
    %s94 = sphi 0, %s93
    %s108 = sphi 0, %s94
    %s112 = sphi 0, %s112
    %s114 = sphi 0, %s112
    %s115 = sphi 0, %s114
    %s129 = sphi 0, %s115
    %s133 = sphi 0, %s133
    %s135 = sphi 0, %s133
    %s136 = sphi 0, %s135
    %s150 = sphi 0, %s136
    %s154 = sphi 0, %s154
    %s156 = sphi 0, %s154
    %s157 = sphi 0, %s156
    %s171 = sphi 0, %s157
    %s175 = sphi 0, %s175
    %s177 = sphi 0, %s175
    %s178 = sphi 0, %s177
    %s192 = sphi 0, %s178
    %s196 = sphi 0, %s196
    %s198 = sphi 0, %s196
    %s199 = sphi 0, %s198
    %s213 = sphi 0, %s199
    %s219 = sphi 0, %s221
    %s222 = sphi 0, %s219
    %s223 = sphi 0, %s222
    %s239 = sphi 0, %s223
  $region4: #{autoencoder_forward.1} parent=0 // loop_header_branch
    %18 = sbr.rel (%p16) target = $region8
  $region5: #{autoencoder_forward.1} parent=0 // loop_body
    %s20 = ssub.s32 %s15, 1
    %s21 = ssub.s32 %s15, 2
    %s22 = sadd.s32 %s15, 1
    %s23 = ssub.s32 %s15, %s22
    %p24 = scmp.eq.s32.totalorder %s23, 0
    %s26 = sadd.s32 %s25, 1
    %s27 = scalar_select %p24, %s25, %s26
    %p30 = pneg %p24
    %p31 = scmp.eq.s32.totalorder %s15, 1
    %p32 = por %p30, %p31
    %p33 = scmp.ne.s32.totalorder %s25, %s28
    %p34 = scmp.eq.s32.totalorder %s15, 0
    %p35 = por %p33, %p34
    %p36 = scmp.ne.s32.totalorder %s25, %s28
    %p37 = scmp.eq.s32.totalorder %s20, 1
    %p38 = por %p36, %p37
    %p39 = scmp.ne.s32.totalorder %s28, %s29
    %p40 = scmp.eq.s32.totalorder %s20, 0
    %p41 = por %p39, %p40
    %p42 = scmp.ne.s32.totalorder %s28, %s29
    %p43 = scmp.eq.s32.totalorder %s21, 1
    %p44 = por %p42, %p43
    %p46 = scmp.ne.s32.totalorder %s29, %s45
    %p47 = scmp.eq.s32.totalorder %s21, 0
    %p48 = por %p46, %p47
    %s50 = sadd.s32 %s49, 1
    %p53 = scmp.eq.s32.totalorder %s15, 1
    %p54 = scmp.ne.s32.totalorder %s49, %s51
    %p55 = scmp.eq.s32.totalorder %s15, 0
    %p56 = por %p54, %p55
    %p57 = scmp.ne.s32.totalorder %s49, %s51
    %p58 = scmp.eq.s32.totalorder %s20, 1
    %p59 = por %p57, %p58
    %p60 = scmp.ne.s32.totalorder %s51, %s52
    %p61 = scmp.eq.s32.totalorder %s20, 0
    %p62 = por %p60, %p61
    %p63 = scmp.ne.s32.totalorder %s51, %s52
    %p64 = scmp.eq.s32.totalorder %s21, 1
    %p65 = por %p63, %p64
    %p67 = scmp.ne.s32.totalorder %s52, %s66
    %p68 = scmp.eq.s32.totalorder %s21, 0
    %p69 = por %p67, %p68
    %s71 = sadd.s32 %s70, 1
    %p74 = scmp.eq.s32.totalorder %s15, 1
    %p75 = scmp.ne.s32.totalorder %s70, %s72
    %p76 = scmp.eq.s32.totalorder %s15, 0
    %p77 = por %p75, %p76
    %p78 = scmp.ne.s32.totalorder %s70, %s72
    %p79 = scmp.eq.s32.totalorder %s20, 1
    %p80 = por %p78, %p79
    %p81 = scmp.ne.s32.totalorder %s72, %s73
    %p82 = scmp.eq.s32.totalorder %s20, 0
    %p83 = por %p81, %p82
    %p84 = scmp.ne.s32.totalorder %s72, %s73
    %p85 = scmp.eq.s32.totalorder %s21, 1
    %p86 = por %p84, %p85
    %p88 = scmp.ne.s32.totalorder %s73, %s87
    %p89 = scmp.eq.s32.totalorder %s21, 0
    %p90 = por %p88, %p89
    %s92 = sadd.s32 %s91, 1
    %p95 = scmp.eq.s32.totalorder %s15, 1
    %p96 = scmp.ne.s32.totalorder %s91, %s93
    %p97 = scmp.eq.s32.totalorder %s15, 0
    %p98 = por %p96, %p97
    %p99 = scmp.ne.s32.totalorder %s91, %s93
    %p100 = scmp.eq.s32.totalorder %s20, 1
    %p101 = por %p99, %p100
    %p102 = scmp.ne.s32.totalorder %s93, %s94
    %p103 = scmp.eq.s32.totalorder %s20, 0
    %p104 = por %p102, %p103
    %p105 = scmp.ne.s32.totalorder %s93, %s94
    %p106 = scmp.eq.s32.totalorder %s21, 1
    %p107 = por %p105, %p106
    %p109 = scmp.ne.s32.totalorder %s94, %s108
    %p110 = scmp.eq.s32.totalorder %s21, 0
    %p111 = por %p109, %p110
    %s113 = sadd.s32 %s112, 1
    %p116 = scmp.eq.s32.totalorder %s15, 1
    %p117 = scmp.ne.s32.totalorder %s112, %s114
    %p118 = scmp.eq.s32.totalorder %s15, 0
    %p119 = por %p117, %p118
    %p120 = scmp.ne.s32.totalorder %s112, %s114
    %p121 = scmp.eq.s32.totalorder %s20, 1
    %p122 = por %p120, %p121
    %p123 = scmp.ne.s32.totalorder %s114, %s115
    %p124 = scmp.eq.s32.totalorder %s20, 0
    %p125 = por %p123, %p124
    %p126 = scmp.ne.s32.totalorder %s114, %s115
    %p127 = scmp.eq.s32.totalorder %s21, 1
    %p128 = por %p126, %p127
    %p130 = scmp.ne.s32.totalorder %s115, %s129
    %p131 = scmp.eq.s32.totalorder %s21, 0
    %p132 = por %p130, %p131
    %s134 = sadd.s32 %s133, 1
    %p137 = scmp.eq.s32.totalorder %s15, 1
    %p138 = scmp.ne.s32.totalorder %s133, %s135
    %p139 = scmp.eq.s32.totalorder %s15, 0
    %p140 = por %p138, %p139
    %p141 = scmp.ne.s32.totalorder %s133, %s135
    %p142 = scmp.eq.s32.totalorder %s20, 1
    %p143 = por %p141, %p142
    %p144 = scmp.ne.s32.totalorder %s135, %s136
    %p145 = scmp.eq.s32.totalorder %s20, 0
    %p146 = por %p144, %p145
    %p147 = scmp.ne.s32.totalorder %s135, %s136
    %p148 = scmp.eq.s32.totalorder %s21, 1
    %p149 = por %p147, %p148
    %p151 = scmp.ne.s32.totalorder %s136, %s150
    %p152 = scmp.eq.s32.totalorder %s21, 0
    %p153 = por %p151, %p152
    %s155 = sadd.s32 %s154, 1
    %p158 = scmp.eq.s32.totalorder %s15, 1
    %p159 = scmp.ne.s32.totalorder %s154, %s156
    %p160 = scmp.eq.s32.totalorder %s15, 0
    %p161 = por %p159, %p160
    %p162 = scmp.ne.s32.totalorder %s154, %s156
    %p163 = scmp.eq.s32.totalorder %s20, 1
    %p164 = por %p162, %p163
    %p165 = scmp.ne.s32.totalorder %s156, %s157
    %p166 = scmp.eq.s32.totalorder %s20, 0
    %p167 = por %p165, %p166
    %p168 = scmp.ne.s32.totalorder %s156, %s157
    %p169 = scmp.eq.s32.totalorder %s21, 1
    %p170 = por %p168, %p169
    %p172 = scmp.ne.s32.totalorder %s157, %s171
    %p173 = scmp.eq.s32.totalorder %s21, 0
    %p174 = por %p172, %p173
    %s176 = sadd.s32 %s175, 1
    %p179 = scmp.eq.s32.totalorder %s15, 1
    %p180 = scmp.ne.s32.totalorder %s175, %s177
    %p181 = scmp.eq.s32.totalorder %s15, 0
    %p182 = por %p180, %p181
    %p183 = scmp.ne.s32.totalorder %s175, %s177
    %p184 = scmp.eq.s32.totalorder %s20, 1
    %p185 = por %p183, %p184
    %p186 = scmp.ne.s32.totalorder %s177, %s178
    %p187 = scmp.eq.s32.totalorder %s20, 0
    %p188 = por %p186, %p187
    %p189 = scmp.ne.s32.totalorder %s177, %s178
    %p190 = scmp.eq.s32.totalorder %s21, 1
    %p191 = por %p189, %p190
    %p193 = scmp.ne.s32.totalorder %s178, %s192
    %p194 = scmp.eq.s32.totalorder %s21, 0
    %p195 = por %p193, %p194
    %s197 = sadd.s32 %s196, 1
    %p200 = scmp.eq.s32.totalorder %s15, 1
    %p201 = scmp.ne.s32.totalorder %s196, %s198
    %p202 = scmp.eq.s32.totalorder %s15, 0
    %p203 = por %p201, %p202
    %p204 = scmp.ne.s32.totalorder %s196, %s198
    %p205 = scmp.eq.s32.totalorder %s20, 1
    %p206 = por %p204, %p205
    %p207 = scmp.ne.s32.totalorder %s198, %s199
    %p208 = scmp.eq.s32.totalorder %s20, 0
    %p209 = por %p207, %p208
    %p210 = scmp.ne.s32.totalorder %s198, %s199
    %p211 = scmp.eq.s32.totalorder %s21, 1
    %p212 = por %p210, %p211
    %p214 = scmp.ne.s32.totalorder %s199, %s213
    %p215 = scmp.eq.s32.totalorder %s21, 0
    %p216 = por %p214, %p215
    %s217 = ssub.s32 %s15, %s22
    %p218 = scmp.eq.s32.totalorder %s217, 0
    %s220 = sadd.s32 %s219, 1
    %s221 = scalar_select %p218, %s219, %s220
    %p224 = pneg %p218
    %p225 = scmp.eq.s32.totalorder %s15, 1
    %p226 = por %p224, %p225
    %p227 = scmp.ne.s32.totalorder %s219, %s222
    %p228 = scmp.eq.s32.totalorder %s15, 0
    %p229 = por %p227, %p228
    %p230 = scmp.ne.s32.totalorder %s219, %s222
    %p231 = scmp.eq.s32.totalorder %s20, 1
    %p232 = por %p230, %p231
    %p233 = scmp.ne.s32.totalorder %s222, %s223
    %p234 = scmp.eq.s32.totalorder %s20, 0
    %p235 = por %p233, %p234
    %p236 = scmp.ne.s32.totalorder %s222, %s223
    %p237 = scmp.eq.s32.totalorder %s21, 1
    %p238 = por %p236, %p237
    %p240 = scmp.ne.s32.totalorder %s223, %s239
    %p241 = scmp.eq.s32.totalorder %s21, 0
    %p242 = por %p240, %p241
    %p243 = scmp.le.s32.totalorder 1, %s15
    %p244 = scmp.lt.s32.totalorder %s15, 3
    %p245 = pnand %p243, %p244
    %p246 = pneg %p245
    // Predicated region
    $region9: #{autoencoder_forward.1} parent=5 // pred_check
      _
    $region10: #{autoencoder_forward.1} parent=5 // pred_check_branch
      %248 = sbr.rel (%p245) target = $region12
    $region11: #{autoencoder_forward.1} parent=5 // pred_region
      %s249 = ssub.s32 %s15, 1
      // Predicated region
      $region13: #{autoencoder_forward.1} parent=11 // pred_check
        %p250 = pneg %p62
      $region14: #{autoencoder_forward.1} parent=11 // pred_check_branch
        %252 = sbr.rel (%p250) target = $region16
      $region15: #{autoencoder_forward.1} parent=11 // pred_region
        _
      $region16: #{autoencoder_forward.1} parent=11 // pred_fallthru
        _
      // Predicated region
      $region17: #{autoencoder_forward.1} parent=11 // pred_check
        %p253 = pneg %p83
      $region18: #{autoencoder_forward.1} parent=11 // pred_check_branch
        %255 = sbr.rel (%p253) target = $region20
      $region19: #{autoencoder_forward.1} parent=11 // pred_region
        _
      $region20: #{autoencoder_forward.1} parent=11 // pred_fallthru
        _
      // Predicated region
      $region21: #{autoencoder_forward.1} parent=11 // pred_check
        %p256 = pneg %p104
      $region22: #{autoencoder_forward.1} parent=11 // pred_check_branch
        %258 = sbr.rel (%p256) target = $region24
      $region23: #{autoencoder_forward.1} parent=11 // pred_region
        _
      $region24: #{autoencoder_forward.1} parent=11 // pred_fallthru
        _
      // Predicated region
      $region25: #{autoencoder_forward.1} parent=11 // pred_check
        %p259 = pneg %p125
      $region26: #{autoencoder_forward.1} parent=11 // pred_check_branch
        %261 = sbr.rel (%p259) target = $region28
      $region27: #{autoencoder_forward.1} parent=11 // pred_region
        _
      $region28: #{autoencoder_forward.1} parent=11 // pred_fallthru
        _
      // Predicated region
      $region29: #{autoencoder_forward.1} parent=11 // pred_check
        %p262 = pneg %p146
      $region30: #{autoencoder_forward.1} parent=11 // pred_check_branch
        %264 = sbr.rel (%p262) target = $region32
      $region31: #{autoencoder_forward.1} parent=11 // pred_region
        _
      $region32: #{autoencoder_forward.1} parent=11 // pred_fallthru
        _
      // Predicated region
      $region33: #{autoencoder_forward.1} parent=11 // pred_check
        %p265 = pneg %p167
      $region34: #{autoencoder_forward.1} parent=11 // pred_check_branch
        %267 = sbr.rel (%p265) target = $region36
      $region35: #{autoencoder_forward.1} parent=11 // pred_region
        _
      $region36: #{autoencoder_forward.1} parent=11 // pred_fallthru
        _
      // Predicated region
      $region37: #{autoencoder_forward.1} parent=11 // pred_check
        %p268 = pneg %p188
      $region38: #{autoencoder_forward.1} parent=11 // pred_check_branch
        %270 = sbr.rel (%p268) target = $region40
      $region39: #{autoencoder_forward.1} parent=11 // pred_region
        _
      $region40: #{autoencoder_forward.1} parent=11 // pred_fallthru
        _
      // Predicated region
      $region41: #{autoencoder_forward.1} parent=11 // pred_check
        %p271 = pneg %p209
      $region42: #{autoencoder_forward.1} parent=11 // pred_check_branch
        %273 = sbr.rel (%p271) target = $region44
      $region43: #{autoencoder_forward.1} parent=11 // pred_region
        _
      $region44: #{autoencoder_forward.1} parent=11 // pred_fallthru
        _
    $region12: #{autoencoder_forward.1} parent=5 // pred_fallthru
      _
    %p274 = scmp.lt.s32.totalorder %s15, 2
    // Predicated region
    $region45: #{autoencoder_forward.1} parent=5 // pred_check
      %p275 = pneg %p274
    $region46: #{autoencoder_forward.1} parent=5 // pred_check_branch
      %277 = sbr.rel (%p275) target = $region48
    $region47: #{autoencoder_forward.1} parent=5 // pred_region
      // Predicated region
      $region49: #{autoencoder_forward.1} parent=47 // pred_check
        %p278 = pneg %p35
      $region50: #{autoencoder_forward.1} parent=47 // pred_check_branch
        %280 = sbr.rel (%p278) target = $region52
      $region51: #{autoencoder_forward.1} parent=47 // pred_region
        %s281 = smul.u32 32, %s15
        %p282 = scmp.lt.s32.totalorder %s281, 63
        %s283 = scalar_select %p282, %s281, 63
        %s284 = smul.addr %s283, 7
        %s285 = smul.addr %s284, 4
        %s286 = scalar_lea.vmem %s0, %s285
        %s287 = smul.u32 32, %s15
      $region52: #{autoencoder_forward.1} parent=47 // pred_fallthru
        _
    $region48: #{autoencoder_forward.1} parent=5 // pred_fallthru
      _
    %p288 = scmp.le.s32.totalorder 1, %s15
    %p289 = scmp.lt.s32.totalorder %s15, 3
    %p290 = pnand %p288, %p289
    %p291 = pneg %p290
    // Predicated region
    $region53: #{autoencoder_forward.1} parent=5 // pred_check
      _
    $region54: #{autoencoder_forward.1} parent=5 // pred_check_branch
      %293 = sbr.rel (%p290) target = $region56
    $region55: #{autoencoder_forward.1} parent=5 // pred_region
      %s294 = ssub.s32 %s15, 1
      %s295 = smul.u32 32, %s20
      %p296 = scmp.lt.s32.totalorder %s295, 63
      %s297 = scalar_select %p296, %s295, 63
      %s298 = smul.addr %s297, 7
      %s299 = smul.addr %s298, 4
      %s300 = scalar_lea.vmem %s0, %s299
      %p301 = pneg %p41
      %p302 = pneg %p38
      %p303 = pneg %p62
      %p304 = pneg %p59
      %p305 = pneg %p83
      %p306 = pneg %p80
      %p307 = pneg %p104
      %p308 = pneg %p101
      %p309 = pneg %p125
      %p310 = pneg %p122
      %p311 = pneg %p146
      %p312 = pneg %p143
      %p313 = pneg %p167
      %p314 = pneg %p164
      %p315 = pneg %p188
      %p316 = pneg %p185
      %p317 = pneg %p209
      %p318 = pneg %p206
      %p319 = pneg %p235
      %p320 = pneg %p232
      %s321 = smul.u32 32, %s20
      %p322 = scmp.lt.s32.totalorder %s321, 63
      %s323 = scalar_select %p322, %s321, 63
      %s324 = smul.addr %s323, 7
      %s325 = smul.addr %s324, 8
      %s326 = scalar_lea.vmem %s9, %s325
      %s327 = smul.u32 32, %s20
      %p328 = scmp.lt.s32.totalorder %s327, 63
      %s329 = scalar_select %p328, %s327, 63
      %s330 = smul.addr %s329, 7
      %s331 = smul.addr %s330, 4
      %s332 = scalar_lea.vmem %s0, %s331
      %s333 = smul.u32 32, %s20
      %s334 = smul.u32 32, %s20
      %p335 = scmp.lt.s32.totalorder %s334, 63
      %s336 = scalar_select %p335, %s334, 63
      %s337 = smul.addr %s336, 7
      %s338 = smul.addr %s337, 8
      %s339 = scalar_lea.vmem %s9, %s338
      %s340 = smul.u32 32, %s20
      %v342 = vld [vmem:[%s332] sm:$0xff]
      %v343 = vld [vmem:[%s332 + $0x8] sm:$0xff]
      %v344 = vld [vmem:[%s332 + $0x10] sm:$0xff]
      %v345 = vld [vmem:[%s332 + $0x18] sm:$0xf]
      %v346 = vld [vmem:[%s332 + $0x1c] sm:$0xff]
      %v347 = vld [vmem:[%s332 + $0x24] sm:$0xff]
      %v348 = vld [vmem:[%s332 + $0x2c] sm:$0xff]
      %v349 = vld [vmem:[%s332 + $0x34] sm:$0xf]
      %v350 = vld [vmem:[%s332 + $0x38] sm:$0xff]
      %v351 = vld [vmem:[%s332 + $0x40] sm:$0xff]
      %v352 = vld [vmem:[%s332 + $0x48] sm:$0xff]
      %v353 = vld [vmem:[%s332 + $0x50] sm:$0xf]
      %v354 = vld [vmem:[%s332 + $0x54] sm:$0xff]
      %v355 = vld [vmem:[%s332 + $0x5c] sm:$0xff]
      %v356 = vld [vmem:[%s332 + $0x64] sm:$0xff]
      %v357 = vld [vmem:[%s332 + $0x6c] sm:$0xf]
      %v358 = vld [vmem:[%s332 + $0x70] sm:$0xff]
      %v359 = vld [vmem:[%s332 + $0x78] sm:$0xff]
      %v360 = vld [vmem:[%s332 + $0x80] sm:$0xff]
      %v361 = vld [vmem:[%s332 + $0x88] sm:$0xf]
      %v362 = vld [vmem:[%s332 + $0x8c] sm:$0xff]
      %v363 = vld [vmem:[%s332 + $0x94] sm:$0xff]
      %v364 = vld [vmem:[%s332 + $0x9c] sm:$0xff]
      %v365 = vld [vmem:[%s332 + $0xa4] sm:$0xf]
      %v366 = vld [vmem:[%s332 + $0xa8] sm:$0xff]
      %v367 = vld [vmem:[%s332 + $0xb0] sm:$0xff]
      %v368 = vld [vmem:[%s332 + $0xb8] sm:$0xff]
      %v369 = vld [vmem:[%s332 + $0xc0] sm:$0xf]
      %v370 = vld [vmem:[%s332 + $0xc4] sm:$0xff]
      %v371 = vld [vmem:[%s332 + $0xcc] sm:$0xff]
      %v372 = vld [vmem:[%s332 + $0xd4] sm:$0xff]
      %v373 = vld [vmem:[%s332 + $0xdc] sm:$0xf]
      %v374 = vld [vmem:[%s332 + $0xe0] sm:$0xff]
      %v375 = vld [vmem:[%s332 + $0xe8] sm:$0xff]
      %v376 = vld [vmem:[%s332 + $0xf0] sm:$0xff]
      %v377 = vld [vmem:[%s332 + $0xf8] sm:$0xf]
      %v378 = vld [vmem:[%s332 + $0xfc] sm:$0xff]
      %v379 = vld [vmem:[%s332 + $0x104] sm:$0xff]
      %v380 = vld [vmem:[%s332 + $0x10c] sm:$0xff]
      %v381 = vld [vmem:[%s332 + $0x114] sm:$0xf]
      %v382 = vld [vmem:[%s332 + $0x118] sm:$0xff]
      %v383 = vld [vmem:[%s332 + $0x120] sm:$0xff]
      %v384 = vld [vmem:[%s332 + $0x128] sm:$0xff]
      %v385 = vld [vmem:[%s332 + $0x130] sm:$0xf]
      %v386 = vld [vmem:[%s332 + $0x134] sm:$0xff]
      %v387 = vld [vmem:[%s332 + $0x13c] sm:$0xff]
      %v388 = vld [vmem:[%s332 + $0x144] sm:$0xff]
      %v389 = vld [vmem:[%s332 + $0x14c] sm:$0xf]
      %v390 = vld [vmem:[%s332 + $0x150] sm:$0xff]
      %v391 = vld [vmem:[%s332 + $0x158] sm:$0xff]
      %v392 = vld [vmem:[%s332 + $0x160] sm:$0xff]
      %v393 = vld [vmem:[%s332 + $0x168] sm:$0xf]
      %v394 = vld [vmem:[%s332 + $0x16c] sm:$0xff]
      %v395 = vld [vmem:[%s332 + $0x174] sm:$0xff]
      %v396 = vld [vmem:[%s332 + $0x17c] sm:$0xff]
      %v397 = vld [vmem:[%s332 + $0x184] sm:$0xf]
      %v398 = vld [vmem:[%s332 + $0x188] sm:$0xff]
      %v399 = vld [vmem:[%s332 + $0x190] sm:$0xff]
      %v400 = vld [vmem:[%s332 + $0x198] sm:$0xff]
      %v401 = vld [vmem:[%s332 + $0x1a0] sm:$0xf]
      %v402 = vld [vmem:[%s332 + $0x1a4] sm:$0xff]
      %v403 = vld [vmem:[%s332 + $0x1ac] sm:$0xff]
      %v404 = vld [vmem:[%s332 + $0x1b4] sm:$0xff]
      %v405 = vld [vmem:[%s332 + $0x1bc] sm:$0xf]
      %v406 = vld [vmem:[%s332 + $0x1c0] sm:$0xff]
      %v407 = vld [vmem:[%s332 + $0x1c8] sm:$0xff]
      %v408 = vld [vmem:[%s332 + $0x1d0] sm:$0xff]
      %v409 = vld [vmem:[%s332 + $0x1d8] sm:$0xf]
      %v410 = vld [vmem:[%s332 + $0x1dc] sm:$0xff]
      %v411 = vld [vmem:[%s332 + $0x1e4] sm:$0xff]
      %v412 = vld [vmem:[%s332 + $0x1ec] sm:$0xff]
      %v413 = vld [vmem:[%s332 + $0x1f4] sm:$0xf]
      %v414 = vld [vmem:[%s332 + $0x1f8] sm:$0xff]
      %v415 = vld [vmem:[%s332 + $0x200] sm:$0xff]
      %v416 = vld [vmem:[%s332 + $0x208] sm:$0xff]
      %v417 = vld [vmem:[%s332 + $0x210] sm:$0xf]
      %v418 = vld [vmem:[%s332 + $0x214] sm:$0xff]
      %v419 = vld [vmem:[%s332 + $0x21c] sm:$0xff]
      %v420 = vld [vmem:[%s332 + $0x224] sm:$0xff]
      %v421 = vld [vmem:[%s332 + $0x22c] sm:$0xf]
      %v422 = vld [vmem:[%s332 + $0x230] sm:$0xff]
      %v423 = vld [vmem:[%s332 + $0x238] sm:$0xff]
      %v424 = vld [vmem:[%s332 + $0x240] sm:$0xff]
      %v425 = vld [vmem:[%s332 + $0x248] sm:$0xf]
      %v426 = vld [vmem:[%s332 + $0x24c] sm:$0xff]
      %v427 = vld [vmem:[%s332 + $0x254] sm:$0xff]
      %v428 = vld [vmem:[%s332 + $0x25c] sm:$0xff]
      %v429 = vld [vmem:[%s332 + $0x264] sm:$0xf]
      %v430 = vld [vmem:[%s332 + $0x268] sm:$0xff]
      %v431 = vld [vmem:[%s332 + $0x270] sm:$0xff]
      %v432 = vld [vmem:[%s332 + $0x278] sm:$0xff]
      %v433 = vld [vmem:[%s332 + $0x280] sm:$0xf]
      %v434 = vld [vmem:[%s332 + $0x284] sm:$0xff]
      %v435 = vld [vmem:[%s332 + $0x28c] sm:$0xff]
      %v436 = vld [vmem:[%s332 + $0x294] sm:$0xff]
      %v437 = vld [vmem:[%s332 + $0x29c] sm:$0xf]
      %v438 = vld [vmem:[%s332 + $0x2a0] sm:$0xff]
      %v439 = vld [vmem:[%s332 + $0x2a8] sm:$0xff]
      %v440 = vld [vmem:[%s332 + $0x2b0] sm:$0xff]
      %v441 = vld [vmem:[%s332 + $0x2b8] sm:$0xf]
      %v442 = vld [vmem:[%s332 + $0x2bc] sm:$0xff]
      %v443 = vld [vmem:[%s332 + $0x2c4] sm:$0xff]
      %v444 = vld [vmem:[%s332 + $0x2cc] sm:$0xff]
      %v445 = vld [vmem:[%s332 + $0x2d4] sm:$0xf]
      %v446 = vld [vmem:[%s332 + $0x2d8] sm:$0xff]
      %v447 = vld [vmem:[%s332 + $0x2e0] sm:$0xff]
      %v448 = vld [vmem:[%s332 + $0x2e8] sm:$0xff]
      %v449 = vld [vmem:[%s332 + $0x2f0] sm:$0xf]
      %v450 = vld [vmem:[%s332 + $0x2f4] sm:$0xff]
      %v451 = vld [vmem:[%s332 + $0x2fc] sm:$0xff]
      %v452 = vld [vmem:[%s332 + $0x304] sm:$0xff]
      %v453 = vld [vmem:[%s332 + $0x30c] sm:$0xf]
      %v454 = vld [vmem:[%s332 + $0x310] sm:$0xff]
      %v455 = vld [vmem:[%s332 + $0x318] sm:$0xff]
      %v456 = vld [vmem:[%s332 + $0x320] sm:$0xff]
      %v457 = vld [vmem:[%s332 + $0x328] sm:$0xf]
      %v458 = vld [vmem:[%s332 + $0x32c] sm:$0xff]
      %v459 = vld [vmem:[%s332 + $0x334] sm:$0xff]
      %v460 = vld [vmem:[%s332 + $0x33c] sm:$0xff]
      %v461 = vld [vmem:[%s332 + $0x344] sm:$0xf]
      %v462 = vld [vmem:[%s332 + $0x348] sm:$0xff]
      %v463 = vld [vmem:[%s332 + $0x350] sm:$0xff]
      %v464 = vld [vmem:[%s332 + $0x358] sm:$0xff]
      %v465 = vld [vmem:[%s332 + $0x360] sm:$0xf]
      %v466 = vld [vmem:[%s332 + $0x364] sm:$0xff]
      %v467 = vld [vmem:[%s332 + $0x36c] sm:$0xff]
      %v468 = vld [vmem:[%s332 + $0x374] sm:$0xff]
      %v469 = vld [vmem:[%s332 + $0x37c] sm:$0xf]
      %v470 = vld [vmem:[%s1] sm:$0xff]
      %v471 = vld [vmem:[%s1 + $0x8] sm:$0xff]
      %v472 = vld [vmem:[%s1 + $0x10] sm:$0xff]
      %v473 = vld [vmem:[%s1 + $0x18] sm:$0xff]
      %v474 = vld [vmem:[%s1 + $0x20] sm:$0xff]
      %v475 = vld [vmem:[%s1 + $0x28] sm:$0xff]
      %v476 = vld [vmem:[%s1 + $0x30] sm:$0xff]
      %v477 = vld [vmem:[%s1 + $0x38] sm:$0xff]
      %v478 = vld [vmem:[%s1 + $0x40] sm:$0xff]
      %v479 = vld [vmem:[%s1 + $0x48] sm:$0xff]
      %v480 = vld [vmem:[%s1 + $0x50] sm:$0xff]
      %v481 = vld [vmem:[%s1 + $0x58] sm:$0xff]
      %v482 = vld [vmem:[%s1 + $0x60] sm:$0xff]
      %v483 = vld [vmem:[%s1 + $0x68] sm:$0xff]
      %v484 = vld [vmem:[%s1 + $0x70] sm:$0xff]
      %v485 = vld [vmem:[%s1 + $0x78] sm:$0xff]
      %v486 = vld [vmem:[%s1 + $0x80] sm:$0xff]
      %v487 = vld [vmem:[%s1 + $0x88] sm:$0xff]
      %v488 = vld [vmem:[%s1 + $0x90] sm:$0xff]
      %v489 = vld [vmem:[%s1 + $0x98] sm:$0xff]
      %v490 = vld [vmem:[%s1 + $0xa0] sm:$0xff]
      %v491 = vld [vmem:[%s1 + $0xa8] sm:$0xff]
      %v492 = vld [vmem:[%s1 + $0xb0] sm:$0xff]
      %v493 = vld [vmem:[%s1 + $0xb8] sm:$0xff]
      %v494 = vld [vmem:[%s1 + $0xc0] sm:$0xff]
      %v495 = vld [vmem:[%s1 + $0xc8] sm:$0xff]
      %v496 = vld [vmem:[%s1 + $0xd0] sm:$0xff]
      %v497 = vld [vmem:[%s1 + $0xd8] sm:$0xff]
      %v498 = vld [vmem:[%s1 + $0xe0] sm:$0xff]
      %v499 = vld [vmem:[%s1 + $0xe8] sm:$0xff]
      %v500 = vld [vmem:[%s1 + $0xf0] sm:$0xff]
      %v501 = vld [vmem:[%s1 + $0xf8] sm:$0xff]
      %v502 = vld [vmem:[%s1 + $0x100] sm:$0xff]
      %v503 = vld [vmem:[%s1 + $0x108] sm:$0xff]
      %v504 = vld [vmem:[%s1 + $0x110] sm:$0xff]
      %v505 = vld [vmem:[%s1 + $0x118] sm:$0xff]
      %v506 = vld [vmem:[%s1 + $0x120] sm:$0xff]
      %v507 = vld [vmem:[%s1 + $0x128] sm:$0xff]
      %v508 = vld [vmem:[%s1 + $0x130] sm:$0xff]
      %v509 = vld [vmem:[%s1 + $0x138] sm:$0xff]
      %v510 = vld [vmem:[%s1 + $0x140] sm:$0xff]
      %v511 = vld [vmem:[%s1 + $0x148] sm:$0xff]
      %v512 = vld [vmem:[%s1 + $0x150] sm:$0xff]
      %v513 = vld [vmem:[%s1 + $0x158] sm:$0xff]
      %v514 = vld [vmem:[%s1 + $0x160] sm:$0xff]
      %v515 = vld [vmem:[%s1 + $0x168] sm:$0xff]
      %v516 = vld [vmem:[%s1 + $0x170] sm:$0xff]
      %v517 = vld [vmem:[%s1 + $0x178] sm:$0xff]
      %v518 = vld [vmem:[%s1 + $0x180] sm:$0xff]
      %v519 = vld [vmem:[%s1 + $0x188] sm:$0xff]
      %v520 = vld [vmem:[%s1 + $0x190] sm:$0xff]
      %v521 = vld [vmem:[%s1 + $0x198] sm:$0xff]
      %v522 = vld [vmem:[%s1 + $0x1a0] sm:$0xff]
      %v523 = vld [vmem:[%s1 + $0x1a8] sm:$0xff]
      %v524 = vld [vmem:[%s1 + $0x1b0] sm:$0xff]
      %v525 = vld [vmem:[%s1 + $0x1b8] sm:$0xff]
      %v526 = vld [vmem:[%s1 + $0x1c0] sm:$0xff]
      %v527 = vld [vmem:[%s1 + $0x1c8] sm:$0xff]
      %v528 = vld [vmem:[%s1 + $0x1d0] sm:$0xff]
      %v529 = vld [vmem:[%s1 + $0x1d8] sm:$0xff]
      %v530 = vld [vmem:[%s1 + $0x1e0] sm:$0xff]
      %v531 = vld [vmem:[%s1 + $0x1e8] sm:$0xff]
      %v532 = vld [vmem:[%s1 + $0x1f0] sm:$0xff]
      %v533 = vld [vmem:[%s1 + $0x1f8] sm:$0xff]
      %v534 = vld [vmem:[%s1 + $0x200] sm:$0xff]
      %v535 = vld [vmem:[%s1 + $0x208] sm:$0xff]
      %v536 = vld [vmem:[%s1 + $0x210] sm:$0xff]
      %v537 = vld [vmem:[%s1 + $0x218] sm:$0xff]
      %v538 = vld [vmem:[%s1 + $0x220] sm:$0xff]
      %v539 = vld [vmem:[%s1 + $0x228] sm:$0xff]
      %v540 = vld [vmem:[%s1 + $0x230] sm:$0xff]
      %v541 = vld [vmem:[%s1 + $0x238] sm:$0xff]
      %v542 = vld [vmem:[%s1 + $0x240] sm:$0xff]
      %v543 = vld [vmem:[%s1 + $0x248] sm:$0xff]
      %v544 = vld [vmem:[%s1 + $0x250] sm:$0xff]
      %v545 = vld [vmem:[%s1 + $0x258] sm:$0xff]
      %v546 = vld [vmem:[%s1 + $0x260] sm:$0xff]
      %v547 = vld [vmem:[%s1 + $0x268] sm:$0xff]
      %v548 = vld [vmem:[%s1 + $0x270] sm:$0xff]
      %v549 = vld [vmem:[%s1 + $0x278] sm:$0xff]
      %v550 = vld [vmem:[%s1 + $0x280] sm:$0xff]
      %v551 = vld [vmem:[%s1 + $0x288] sm:$0xff]
      %v552 = vld [vmem:[%s1 + $0x290] sm:$0xff]
      %v553 = vld [vmem:[%s1 + $0x298] sm:$0xff]
      %v554 = vld [vmem:[%s1 + $0x2a0] sm:$0xff]
      %v555 = vld [vmem:[%s1 + $0x2a8] sm:$0xff]
      %v556 = vld [vmem:[%s1 + $0x2b0] sm:$0xff]
      %v557 = vld [vmem:[%s1 + $0x2b8] sm:$0xff]
      %v558 = vld [vmem:[%s1 + $0x2c0] sm:$0xff]
      %v559 = vld [vmem:[%s1 + $0x2c8] sm:$0xff]
      %v560 = vld [vmem:[%s1 + $0x2d0] sm:$0xff]
      %v561 = vld [vmem:[%s1 + $0x2d8] sm:$0xff]
      %v562 = vld [vmem:[%s1 + $0x2e0] sm:$0xff]
      %v563 = vld [vmem:[%s1 + $0x2e8] sm:$0xff]
      %v564 = vld [vmem:[%s1 + $0x2f0] sm:$0xff]
      %v565 = vld [vmem:[%s1 + $0x2f8] sm:$0xff]
      %v566 = vld [vmem:[%s1 + $0x300] sm:$0xff]
      %v567 = vld [vmem:[%s1 + $0x308] sm:$0xff]
      %v568 = vld [vmem:[%s1 + $0x310] sm:$0xff]
      %v569 = vld [vmem:[%s1 + $0x318] sm:$0xff]
      %v570 = vld [vmem:[%s1 + $0x320] sm:$0xff]
      %v571 = vld [vmem:[%s1 + $0x328] sm:$0xff]
      %v572 = vld [vmem:[%s1 + $0x330] sm:$0xff]
      %v573 = vld [vmem:[%s1 + $0x338] sm:$0xff]
      %v574 = vld [vmem:[%s1 + $0x340] sm:$0xff]
      %v575 = vld [vmem:[%s1 + $0x348] sm:$0xff]
      %v576 = vld [vmem:[%s1 + $0x350] sm:$0xff]
      %v577 = vld [vmem:[%s1 + $0x358] sm:$0xff]
      %v578 = vld [vmem:[%s1 + $0x360] sm:$0xff]
      %v579 = vld [vmem:[%s1 + $0x368] sm:$0xff]
      %v580 = vld [vmem:[%s1 + $0x370] sm:$0xff]
      %v581 = vld [vmem:[%s1 + $0x378] sm:$0xff]
      %v582 = vld [vmem:[%s2] sm:$0x3]
      %v584 = vlaneseq
      %v585 = vshrl.u32 %v584, 7
      %v586 = vsub.s32 0, %v585
      %v587 = vrot.slane %v582, %v586
      %v588 = vlaneseq
      %v589 = vshrl.u32 %v588, 7
      %v590 = vsub.s32 1, %v589
      %v591 = vrot.slane %v582, %v590
      %v722 = vunpack.c.l.b16 %v342
      %v723 = vunpack.c.h.b16 %v342
      %v724 = vunpack.c.l.b16 %v343
      %v725 = vunpack.c.h.b16 %v343
      %v726 = vunpack.c.l.b16 %v344
      %v727 = vunpack.c.h.b16 %v344
      %v728 = vunpack.c.l.b16 %v345
      %v729 = vunpack.c.l.b16 %v346
      %v730 = vunpack.c.h.b16 %v346
      %v731 = vunpack.c.l.b16 %v347
      %v732 = vunpack.c.h.b16 %v347
      %v733 = vunpack.c.l.b16 %v348
      %v734 = vunpack.c.h.b16 %v348
      %v735 = vunpack.c.l.b16 %v349
      %v736 = vunpack.c.l.b16 %v350
      %v737 = vunpack.c.h.b16 %v350
      %v738 = vunpack.c.l.b16 %v351
      %v739 = vunpack.c.h.b16 %v351
      %v740 = vunpack.c.l.b16 %v352
      %v741 = vunpack.c.h.b16 %v352
      %v742 = vunpack.c.l.b16 %v353
      %v743 = vunpack.c.l.b16 %v354
      %v744 = vunpack.c.h.b16 %v354
      %v745 = vunpack.c.l.b16 %v355
      %v746 = vunpack.c.h.b16 %v355
      %v747 = vunpack.c.l.b16 %v356
      %v748 = vunpack.c.h.b16 %v356
      %v749 = vunpack.c.l.b16 %v357
      %v750 = vunpack.c.l.b16 %v358
      %v751 = vunpack.c.h.b16 %v358
      %v752 = vunpack.c.l.b16 %v359
      %v753 = vunpack.c.h.b16 %v359
      %v754 = vunpack.c.l.b16 %v360
      %v755 = vunpack.c.h.b16 %v360
      %v756 = vunpack.c.l.b16 %v361
      %v757 = vunpack.c.l.b16 %v362
      %v758 = vunpack.c.h.b16 %v362
      %v759 = vunpack.c.l.b16 %v363
      %v760 = vunpack.c.h.b16 %v363
      %v761 = vunpack.c.l.b16 %v364
      %v762 = vunpack.c.h.b16 %v364
      %v763 = vunpack.c.l.b16 %v365
      %v764 = vunpack.c.l.b16 %v366
      %v765 = vunpack.c.h.b16 %v366
      %v766 = vunpack.c.l.b16 %v367
      %v767 = vunpack.c.h.b16 %v367
      %v768 = vunpack.c.l.b16 %v368
      %v769 = vunpack.c.h.b16 %v368
      %v770 = vunpack.c.l.b16 %v369
      %v771 = vunpack.c.l.b16 %v370
      %v772 = vunpack.c.h.b16 %v370
      %v773 = vunpack.c.l.b16 %v371
      %v774 = vunpack.c.h.b16 %v371
      %v775 = vunpack.c.l.b16 %v372
      %v776 = vunpack.c.h.b16 %v372
      %v777 = vunpack.c.l.b16 %v373
      %v778 = vunpack.c.l.b16 %v374
      %v779 = vunpack.c.h.b16 %v374
      %v780 = vunpack.c.l.b16 %v375
      %v781 = vunpack.c.h.b16 %v375
      %v782 = vunpack.c.l.b16 %v376
      %v783 = vunpack.c.h.b16 %v376
      %v784 = vunpack.c.l.b16 %v377
      %v785 = vunpack.c.l.b16 %v378
      %v786 = vunpack.c.h.b16 %v378
      %v787 = vunpack.c.l.b16 %v379
      %v788 = vunpack.c.h.b16 %v379
      %v789 = vunpack.c.l.b16 %v380
      %v790 = vunpack.c.h.b16 %v380
      %v791 = vunpack.c.l.b16 %v381
      %v792 = vunpack.c.l.b16 %v382
      %v793 = vunpack.c.h.b16 %v382
      %v794 = vunpack.c.l.b16 %v383
      %v795 = vunpack.c.h.b16 %v383
      %v796 = vunpack.c.l.b16 %v384
      %v797 = vunpack.c.h.b16 %v384
      %v798 = vunpack.c.l.b16 %v385
      %v799 = vunpack.c.l.b16 %v386
      %v800 = vunpack.c.h.b16 %v386
      %v801 = vunpack.c.l.b16 %v387
      %v802 = vunpack.c.h.b16 %v387
      %v803 = vunpack.c.l.b16 %v388
      %v804 = vunpack.c.h.b16 %v388
      %v805 = vunpack.c.l.b16 %v389
      %v806 = vunpack.c.l.b16 %v390
      %v807 = vunpack.c.h.b16 %v390
      %v808 = vunpack.c.l.b16 %v391
      %v809 = vunpack.c.h.b16 %v391
      %v810 = vunpack.c.l.b16 %v392
      %v811 = vunpack.c.h.b16 %v392
      %v812 = vunpack.c.l.b16 %v393
      %v813 = vunpack.c.l.b16 %v394
      %v814 = vunpack.c.h.b16 %v394
      %v815 = vunpack.c.l.b16 %v395
      %v816 = vunpack.c.h.b16 %v395
      %v817 = vunpack.c.l.b16 %v396
      %v818 = vunpack.c.h.b16 %v396
      %v819 = vunpack.c.l.b16 %v397
      %v820 = vunpack.c.l.b16 %v398
      %v821 = vunpack.c.h.b16 %v398
      %v822 = vunpack.c.l.b16 %v399
      %v823 = vunpack.c.h.b16 %v399
      %v824 = vunpack.c.l.b16 %v400
      %v825 = vunpack.c.h.b16 %v400
      %v826 = vunpack.c.l.b16 %v401
      %v827 = vunpack.c.l.b16 %v402
      %v828 = vunpack.c.h.b16 %v402
      %v829 = vunpack.c.l.b16 %v403
      %v830 = vunpack.c.h.b16 %v403
      %v831 = vunpack.c.l.b16 %v404
      %v832 = vunpack.c.h.b16 %v404
      %v833 = vunpack.c.l.b16 %v405
      %v834 = vunpack.c.l.b16 %v406
      %v835 = vunpack.c.h.b16 %v406
      %v836 = vunpack.c.l.b16 %v407
      %v837 = vunpack.c.h.b16 %v407
      %v838 = vunpack.c.l.b16 %v408
      %v839 = vunpack.c.h.b16 %v408
      %v840 = vunpack.c.l.b16 %v409
      %v841 = vunpack.c.l.b16 %v410
      %v842 = vunpack.c.h.b16 %v410
      %v843 = vunpack.c.l.b16 %v411
      %v844 = vunpack.c.h.b16 %v411
      %v845 = vunpack.c.l.b16 %v412
      %v846 = vunpack.c.h.b16 %v412
      %v847 = vunpack.c.l.b16 %v413
      %v848 = vunpack.c.l.b16 %v414
      %v849 = vunpack.c.h.b16 %v414
      %v850 = vunpack.c.l.b16 %v415
      %v851 = vunpack.c.h.b16 %v415
      %v852 = vunpack.c.l.b16 %v416
      %v853 = vunpack.c.h.b16 %v416
      %v854 = vunpack.c.l.b16 %v417
      %v855 = vunpack.c.l.b16 %v418
      %v856 = vunpack.c.h.b16 %v418
      %v857 = vunpack.c.l.b16 %v419
      %v858 = vunpack.c.h.b16 %v419
      %v859 = vunpack.c.l.b16 %v420
      %v860 = vunpack.c.h.b16 %v420
      %v861 = vunpack.c.l.b16 %v421
      %v862 = vunpack.c.l.b16 %v422
      %v863 = vunpack.c.h.b16 %v422
      %v864 = vunpack.c.l.b16 %v423
      %v865 = vunpack.c.h.b16 %v423
      %v866 = vunpack.c.l.b16 %v424
      %v867 = vunpack.c.h.b16 %v424
      %v868 = vunpack.c.l.b16 %v425
      %v869 = vunpack.c.l.b16 %v426
      %v870 = vunpack.c.h.b16 %v426
      %v871 = vunpack.c.l.b16 %v427
      %v872 = vunpack.c.h.b16 %v427
      %v873 = vunpack.c.l.b16 %v428
      %v874 = vunpack.c.h.b16 %v428
      %v875 = vunpack.c.l.b16 %v429
      %v876 = vunpack.c.l.b16 %v430
      %v877 = vunpack.c.h.b16 %v430
      %v878 = vunpack.c.l.b16 %v431
      %v879 = vunpack.c.h.b16 %v431
      %v880 = vunpack.c.l.b16 %v432
      %v881 = vunpack.c.h.b16 %v432
      %v882 = vunpack.c.l.b16 %v433
      %v883 = vunpack.c.l.b16 %v434
      %v884 = vunpack.c.h.b16 %v434
      %v885 = vunpack.c.l.b16 %v435
      %v886 = vunpack.c.h.b16 %v435
      %v887 = vunpack.c.l.b16 %v436
      %v888 = vunpack.c.h.b16 %v436
      %v889 = vunpack.c.l.b16 %v437
      %v890 = vunpack.c.l.b16 %v438
      %v891 = vunpack.c.h.b16 %v438
      %v892 = vunpack.c.l.b16 %v439
      %v893 = vunpack.c.h.b16 %v439
      %v894 = vunpack.c.l.b16 %v440
      %v895 = vunpack.c.h.b16 %v440
      %v896 = vunpack.c.l.b16 %v441
      %v897 = vunpack.c.l.b16 %v442
      %v898 = vunpack.c.h.b16 %v442
      %v899 = vunpack.c.l.b16 %v443
      %v900 = vunpack.c.h.b16 %v443
      %v901 = vunpack.c.l.b16 %v444
      %v902 = vunpack.c.h.b16 %v444
      %v903 = vunpack.c.l.b16 %v445
      %v904 = vunpack.c.l.b16 %v446
      %v905 = vunpack.c.h.b16 %v446
      %v906 = vunpack.c.l.b16 %v447
      %v907 = vunpack.c.h.b16 %v447
      %v908 = vunpack.c.l.b16 %v448
      %v909 = vunpack.c.h.b16 %v448
      %v910 = vunpack.c.l.b16 %v449
      %v911 = vunpack.c.l.b16 %v450
      %v912 = vunpack.c.h.b16 %v450
      %v913 = vunpack.c.l.b16 %v451
      %v914 = vunpack.c.h.b16 %v451
      %v915 = vunpack.c.l.b16 %v452
      %v916 = vunpack.c.h.b16 %v452
      %v917 = vunpack.c.l.b16 %v453
      %v918 = vunpack.c.l.b16 %v454
      %v919 = vunpack.c.h.b16 %v454
      %v920 = vunpack.c.l.b16 %v455
      %v921 = vunpack.c.h.b16 %v455
      %v922 = vunpack.c.l.b16 %v456
      %v923 = vunpack.c.h.b16 %v456
      %v924 = vunpack.c.l.b16 %v457
      %v925 = vunpack.c.l.b16 %v458
      %v926 = vunpack.c.h.b16 %v458
      %v927 = vunpack.c.l.b16 %v459
      %v928 = vunpack.c.h.b16 %v459
      %v929 = vunpack.c.l.b16 %v460
      %v930 = vunpack.c.h.b16 %v460
      %v931 = vunpack.c.l.b16 %v461
      %v932 = vunpack.c.l.b16 %v462
      %v933 = vunpack.c.h.b16 %v462
      %v934 = vunpack.c.l.b16 %v463
      %v935 = vunpack.c.h.b16 %v463
      %v936 = vunpack.c.l.b16 %v464
      %v937 = vunpack.c.h.b16 %v464
      %v938 = vunpack.c.l.b16 %v465
      %v939 = vunpack.c.l.b16 %v466
      %v940 = vunpack.c.h.b16 %v466
      %v941 = vunpack.c.l.b16 %v467
      %v942 = vunpack.c.h.b16 %v467
      %v943 = vunpack.c.l.b16 %v468
      %v944 = vunpack.c.h.b16 %v468
      %v945 = vunpack.c.l.b16 %v469
      %v946 = vpack.c.b16 %v729, %v722
      %v947 = vpack.c.b16 %v730, %v723
      %v948 = vpack.c.b16 %v731, %v724
      %v949 = vpack.c.b16 %v732, %v725
      %v950 = vpack.c.b16 %v733, %v726
      %v951 = vpack.c.b16 %v734, %v727
      %v952 = vpack.c.b16 %v735, %v728
      %v953 = vpack.c.b16 %v743, %v736
      %v954 = vpack.c.b16 %v744, %v737
      %v955 = vpack.c.b16 %v745, %v738
      %v956 = vpack.c.b16 %v746, %v739
      %v957 = vpack.c.b16 %v747, %v740
      %v958 = vpack.c.b16 %v748, %v741
      %v959 = vpack.c.b16 %v749, %v742
      %v960 = vpack.c.b16 %v757, %v750
      %v961 = vpack.c.b16 %v758, %v751
      %v962 = vpack.c.b16 %v759, %v752
      %v963 = vpack.c.b16 %v760, %v753
      %v964 = vpack.c.b16 %v761, %v754
      %v965 = vpack.c.b16 %v762, %v755
      %v966 = vpack.c.b16 %v763, %v756
      %v967 = vpack.c.b16 %v771, %v764
      %v968 = vpack.c.b16 %v772, %v765
      %v969 = vpack.c.b16 %v773, %v766
      %v970 = vpack.c.b16 %v774, %v767
      %v971 = vpack.c.b16 %v775, %v768
      %v972 = vpack.c.b16 %v776, %v769
      %v973 = vpack.c.b16 %v777, %v770
      %v974 = vpack.c.b16 %v785, %v778
      %v975 = vpack.c.b16 %v786, %v779
      %v976 = vpack.c.b16 %v787, %v780
      %v977 = vpack.c.b16 %v788, %v781
      %v978 = vpack.c.b16 %v789, %v782
      %v979 = vpack.c.b16 %v790, %v783
      %v980 = vpack.c.b16 %v791, %v784
      %v981 = vpack.c.b16 %v799, %v792
      %v982 = vpack.c.b16 %v800, %v793
      %v983 = vpack.c.b16 %v801, %v794
      %v984 = vpack.c.b16 %v802, %v795
      %v985 = vpack.c.b16 %v803, %v796
      %v986 = vpack.c.b16 %v804, %v797
      %v987 = vpack.c.b16 %v805, %v798
      %v988 = vpack.c.b16 %v813, %v806
      %v989 = vpack.c.b16 %v814, %v807
      %v990 = vpack.c.b16 %v815, %v808
      %v991 = vpack.c.b16 %v816, %v809
      %v992 = vpack.c.b16 %v817, %v810
      %v993 = vpack.c.b16 %v818, %v811
      %v994 = vpack.c.b16 %v819, %v812
      %v995 = vpack.c.b16 %v827, %v820
      %v996 = vpack.c.b16 %v828, %v821
      %v997 = vpack.c.b16 %v829, %v822
      %v998 = vpack.c.b16 %v830, %v823
      %v999 = vpack.c.b16 %v831, %v824
      %v1000 = vpack.c.b16 %v832, %v825
      %v1001 = vpack.c.b16 %v833, %v826
      %v1002 = vpack.c.b16 %v841, %v834
      %v1003 = vpack.c.b16 %v842, %v835
      %v1004 = vpack.c.b16 %v843, %v836
      %v1005 = vpack.c.b16 %v844, %v837
      %v1006 = vpack.c.b16 %v845, %v838
      %v1007 = vpack.c.b16 %v846, %v839
      %v1008 = vpack.c.b16 %v847, %v840
      %v1009 = vpack.c.b16 %v855, %v848
      %v1010 = vpack.c.b16 %v856, %v849
      %v1011 = vpack.c.b16 %v857, %v850
      %v1012 = vpack.c.b16 %v858, %v851
      %v1013 = vpack.c.b16 %v859, %v852
      %v1014 = vpack.c.b16 %v860, %v853
      %v1015 = vpack.c.b16 %v861, %v854
      %v1016 = vpack.c.b16 %v869, %v862
      %v1017 = vpack.c.b16 %v870, %v863
      %v1018 = vpack.c.b16 %v871, %v864
      %v1019 = vpack.c.b16 %v872, %v865
      %v1020 = vpack.c.b16 %v873, %v866
      %v1021 = vpack.c.b16 %v874, %v867
      %v1022 = vpack.c.b16 %v875, %v868
      %v1023 = vpack.c.b16 %v883, %v876
      %v1024 = vpack.c.b16 %v884, %v877
      %v1025 = vpack.c.b16 %v885, %v878
      %v1026 = vpack.c.b16 %v886, %v879
      %v1027 = vpack.c.b16 %v887, %v880
      %v1028 = vpack.c.b16 %v888, %v881
      %v1029 = vpack.c.b16 %v889, %v882
      %v1030 = vpack.c.b16 %v897, %v890
      %v1031 = vpack.c.b16 %v898, %v891
      %v1032 = vpack.c.b16 %v899, %v892
      %v1033 = vpack.c.b16 %v900, %v893
      %v1034 = vpack.c.b16 %v901, %v894
      %v1035 = vpack.c.b16 %v902, %v895
      %v1036 = vpack.c.b16 %v903, %v896
      %v1037 = vpack.c.b16 %v911, %v904
      %v1038 = vpack.c.b16 %v912, %v905
      %v1039 = vpack.c.b16 %v913, %v906
      %v1040 = vpack.c.b16 %v914, %v907
      %v1041 = vpack.c.b16 %v915, %v908
      %v1042 = vpack.c.b16 %v916, %v909
      %v1043 = vpack.c.b16 %v917, %v910
      %v1044 = vpack.c.b16 %v925, %v918
      %v1045 = vpack.c.b16 %v926, %v919
      %v1046 = vpack.c.b16 %v927, %v920
      %v1047 = vpack.c.b16 %v928, %v921
      %v1048 = vpack.c.b16 %v929, %v922
      %v1049 = vpack.c.b16 %v930, %v923
      %v1050 = vpack.c.b16 %v931, %v924
      %v1051 = vpack.c.b16 %v939, %v932
      %v1052 = vpack.c.b16 %v940, %v933
      %v1053 = vpack.c.b16 %v941, %v934
      %v1054 = vpack.c.b16 %v942, %v935
      %v1055 = vpack.c.b16 %v943, %v936
      %v1056 = vpack.c.b16 %v944, %v937
      %v1057 = vpack.c.b16 %v945, %v938
      %v1282 = vunpack.c.l.b16 %v470
      %v1283 = vunpack.c.h.b16 %v470
      %v1284 = vunpack.c.l.b16 %v471
      %v1285 = vunpack.c.h.b16 %v471
      %v1286 = vunpack.c.l.b16 %v472
      %v1287 = vunpack.c.h.b16 %v472
      %v1288 = vunpack.c.l.b16 %v473
      %v1289 = vunpack.c.h.b16 %v473
      %v1290 = vunpack.c.l.b16 %v474
      %v1291 = vunpack.c.h.b16 %v474
      %v1292 = vunpack.c.l.b16 %v475
      %v1293 = vunpack.c.h.b16 %v475
      %v1294 = vunpack.c.l.b16 %v476
      %v1295 = vunpack.c.h.b16 %v476
      %v1296 = vunpack.c.l.b16 %v477
      %v1297 = vunpack.c.h.b16 %v477
      %v1298 = vunpack.c.l.b16 %v478
      %v1299 = vunpack.c.h.b16 %v478
      %v1300 = vunpack.c.l.b16 %v479
      %v1301 = vunpack.c.h.b16 %v479
      %v1302 = vunpack.c.l.b16 %v480
      %v1303 = vunpack.c.h.b16 %v480
      %v1304 = vunpack.c.l.b16 %v481
      %v1305 = vunpack.c.h.b16 %v481
      %v1306 = vunpack.c.l.b16 %v482
      %v1307 = vunpack.c.h.b16 %v482
      %v1308 = vunpack.c.l.b16 %v483
      %v1309 = vunpack.c.h.b16 %v483
      %v1310 = vunpack.c.l.b16 %v484
      %v1311 = vunpack.c.h.b16 %v484
      %v1312 = vunpack.c.l.b16 %v485
      %v1313 = vunpack.c.h.b16 %v485
      %v1314 = vunpack.c.l.b16 %v486
      %v1315 = vunpack.c.h.b16 %v486
      %v1316 = vunpack.c.l.b16 %v487
      %v1317 = vunpack.c.h.b16 %v487
      %v1318 = vunpack.c.l.b16 %v488
      %v1319 = vunpack.c.h.b16 %v488
      %v1320 = vunpack.c.l.b16 %v489
      %v1321 = vunpack.c.h.b16 %v489
      %v1322 = vunpack.c.l.b16 %v490
      %v1323 = vunpack.c.h.b16 %v490
      %v1324 = vunpack.c.l.b16 %v491
      %v1325 = vunpack.c.h.b16 %v491
      %v1326 = vunpack.c.l.b16 %v492
      %v1327 = vunpack.c.h.b16 %v492
      %v1328 = vunpack.c.l.b16 %v493
      %v1329 = vunpack.c.h.b16 %v493
      %v1330 = vunpack.c.l.b16 %v494
      %v1331 = vunpack.c.h.b16 %v494
      %v1332 = vunpack.c.l.b16 %v495
      %v1333 = vunpack.c.h.b16 %v495
      %v1334 = vunpack.c.l.b16 %v496
      %v1335 = vunpack.c.h.b16 %v496
      %v1336 = vunpack.c.l.b16 %v497
      %v1337 = vunpack.c.h.b16 %v497
      %v1338 = vunpack.c.l.b16 %v498
      %v1339 = vunpack.c.h.b16 %v498
      %v1340 = vunpack.c.l.b16 %v499
      %v1341 = vunpack.c.h.b16 %v499
      %v1342 = vunpack.c.l.b16 %v500
      %v1343 = vunpack.c.h.b16 %v500
      %v1344 = vunpack.c.l.b16 %v501
      %v1345 = vunpack.c.h.b16 %v501
      %v1346 = vunpack.c.l.b16 %v502
      %v1347 = vunpack.c.h.b16 %v502
      %v1348 = vunpack.c.l.b16 %v503
      %v1349 = vunpack.c.h.b16 %v503
      %v1350 = vunpack.c.l.b16 %v504
      %v1351 = vunpack.c.h.b16 %v504
      %v1352 = vunpack.c.l.b16 %v505
      %v1353 = vunpack.c.h.b16 %v505
      %v1354 = vunpack.c.l.b16 %v506
      %v1355 = vunpack.c.h.b16 %v506
      %v1356 = vunpack.c.l.b16 %v507
      %v1357 = vunpack.c.h.b16 %v507
      %v1358 = vunpack.c.l.b16 %v508
      %v1359 = vunpack.c.h.b16 %v508
      %v1360 = vunpack.c.l.b16 %v509
      %v1361 = vunpack.c.h.b16 %v509
      %v1362 = vunpack.c.l.b16 %v510
      %v1363 = vunpack.c.h.b16 %v510
      %v1364 = vunpack.c.l.b16 %v511
      %v1365 = vunpack.c.h.b16 %v511
      %v1366 = vunpack.c.l.b16 %v512
      %v1367 = vunpack.c.h.b16 %v512
      %v1368 = vunpack.c.l.b16 %v513
      %v1369 = vunpack.c.h.b16 %v513
      %v1370 = vunpack.c.l.b16 %v514
      %v1371 = vunpack.c.h.b16 %v514
      %v1372 = vunpack.c.l.b16 %v515
      %v1373 = vunpack.c.h.b16 %v515
      %v1374 = vunpack.c.l.b16 %v516
      %v1375 = vunpack.c.h.b16 %v516
      %v1376 = vunpack.c.l.b16 %v517
      %v1377 = vunpack.c.h.b16 %v517
      %v1378 = vunpack.c.l.b16 %v518
      %v1379 = vunpack.c.h.b16 %v518
      %v1380 = vunpack.c.l.b16 %v519
      %v1381 = vunpack.c.h.b16 %v519
      %v1382 = vunpack.c.l.b16 %v520
      %v1383 = vunpack.c.h.b16 %v520
      %v1384 = vunpack.c.l.b16 %v521
      %v1385 = vunpack.c.h.b16 %v521
      %v1386 = vunpack.c.l.b16 %v522
      %v1387 = vunpack.c.h.b16 %v522
      %v1388 = vunpack.c.l.b16 %v523
      %v1389 = vunpack.c.h.b16 %v523
      %v1390 = vunpack.c.l.b16 %v524
      %v1391 = vunpack.c.h.b16 %v524
      %v1392 = vunpack.c.l.b16 %v525
      %v1393 = vunpack.c.h.b16 %v525
      %v1394 = vunpack.c.l.b16 %v526
      %v1395 = vunpack.c.h.b16 %v526
      %v1396 = vunpack.c.l.b16 %v527
      %v1397 = vunpack.c.h.b16 %v527
      %v1398 = vunpack.c.l.b16 %v528
      %v1399 = vunpack.c.h.b16 %v528
      %v1400 = vunpack.c.l.b16 %v529
      %v1401 = vunpack.c.h.b16 %v529
      %v1402 = vunpack.c.l.b16 %v530
      %v1403 = vunpack.c.h.b16 %v530
      %v1404 = vunpack.c.l.b16 %v531
      %v1405 = vunpack.c.h.b16 %v531
      %v1406 = vunpack.c.l.b16 %v532
      %v1407 = vunpack.c.h.b16 %v532
      %v1408 = vunpack.c.l.b16 %v533
      %v1409 = vunpack.c.h.b16 %v533
      %v1410 = vunpack.c.l.b16 %v534
      %v1411 = vunpack.c.h.b16 %v534
      %v1412 = vunpack.c.l.b16 %v535
      %v1413 = vunpack.c.h.b16 %v535
      %v1414 = vunpack.c.l.b16 %v536
      %v1415 = vunpack.c.h.b16 %v536
      %v1416 = vunpack.c.l.b16 %v537
      %v1417 = vunpack.c.h.b16 %v537
      %v1418 = vunpack.c.l.b16 %v538
      %v1419 = vunpack.c.h.b16 %v538
      %v1420 = vunpack.c.l.b16 %v539
      %v1421 = vunpack.c.h.b16 %v539
      %v1422 = vunpack.c.l.b16 %v540
      %v1423 = vunpack.c.h.b16 %v540
      %v1424 = vunpack.c.l.b16 %v541
      %v1425 = vunpack.c.h.b16 %v541
      %v1426 = vunpack.c.l.b16 %v542
      %v1427 = vunpack.c.h.b16 %v542
      %v1428 = vunpack.c.l.b16 %v543
      %v1429 = vunpack.c.h.b16 %v543
      %v1430 = vunpack.c.l.b16 %v544
      %v1431 = vunpack.c.h.b16 %v544
      %v1432 = vunpack.c.l.b16 %v545
      %v1433 = vunpack.c.h.b16 %v545
      %v1434 = vunpack.c.l.b16 %v546
      %v1435 = vunpack.c.h.b16 %v546
      %v1436 = vunpack.c.l.b16 %v547
      %v1437 = vunpack.c.h.b16 %v547
      %v1438 = vunpack.c.l.b16 %v548
      %v1439 = vunpack.c.h.b16 %v548
      %v1440 = vunpack.c.l.b16 %v549
      %v1441 = vunpack.c.h.b16 %v549
      %v1442 = vunpack.c.l.b16 %v550
      %v1443 = vunpack.c.h.b16 %v550
      %v1444 = vunpack.c.l.b16 %v551
      %v1445 = vunpack.c.h.b16 %v551
      %v1446 = vunpack.c.l.b16 %v552
      %v1447 = vunpack.c.h.b16 %v552
      %v1448 = vunpack.c.l.b16 %v553
      %v1449 = vunpack.c.h.b16 %v553
      %v1450 = vunpack.c.l.b16 %v554
      %v1451 = vunpack.c.h.b16 %v554
      %v1452 = vunpack.c.l.b16 %v555
      %v1453 = vunpack.c.h.b16 %v555
      %v1454 = vunpack.c.l.b16 %v556
      %v1455 = vunpack.c.h.b16 %v556
      %v1456 = vunpack.c.l.b16 %v557
      %v1457 = vunpack.c.h.b16 %v557
      %v1458 = vunpack.c.l.b16 %v558
      %v1459 = vunpack.c.h.b16 %v558
      %v1460 = vunpack.c.l.b16 %v559
      %v1461 = vunpack.c.h.b16 %v559
      %v1462 = vunpack.c.l.b16 %v560
      %v1463 = vunpack.c.h.b16 %v560
      %v1464 = vunpack.c.l.b16 %v561
      %v1465 = vunpack.c.h.b16 %v561
      %v1466 = vunpack.c.l.b16 %v562
      %v1467 = vunpack.c.h.b16 %v562
      %v1468 = vunpack.c.l.b16 %v563
      %v1469 = vunpack.c.h.b16 %v563
      %v1470 = vunpack.c.l.b16 %v564
      %v1471 = vunpack.c.h.b16 %v564
      %v1472 = vunpack.c.l.b16 %v565
      %v1473 = vunpack.c.h.b16 %v565
      %v1474 = vunpack.c.l.b16 %v566
      %v1475 = vunpack.c.h.b16 %v566
      %v1476 = vunpack.c.l.b16 %v567
      %v1477 = vunpack.c.h.b16 %v567
      %v1478 = vunpack.c.l.b16 %v568
      %v1479 = vunpack.c.h.b16 %v568
      %v1480 = vunpack.c.l.b16 %v569
      %v1481 = vunpack.c.h.b16 %v569
      %v1482 = vunpack.c.l.b16 %v570
      %v1483 = vunpack.c.h.b16 %v570
      %v1484 = vunpack.c.l.b16 %v571
      %v1485 = vunpack.c.h.b16 %v571
      %v1486 = vunpack.c.l.b16 %v572
      %v1487 = vunpack.c.h.b16 %v572
      %v1488 = vunpack.c.l.b16 %v573
      %v1489 = vunpack.c.h.b16 %v573
      %v1490 = vunpack.c.l.b16 %v574
      %v1491 = vunpack.c.h.b16 %v574
      %v1492 = vunpack.c.l.b16 %v575
      %v1493 = vunpack.c.h.b16 %v575
      %v1494 = vunpack.c.l.b16 %v576
      %v1495 = vunpack.c.h.b16 %v576
      %v1496 = vunpack.c.l.b16 %v577
      %v1497 = vunpack.c.h.b16 %v577
      %v1498 = vunpack.c.l.b16 %v578
      %v1499 = vunpack.c.h.b16 %v578
      %v1500 = vunpack.c.l.b16 %v579
      %v1501 = vunpack.c.h.b16 %v579
      %v1502 = vunpack.c.l.b16 %v580
      %v1503 = vunpack.c.h.b16 %v580
      %v1504 = vunpack.c.l.b16 %v581
      %v1505 = vunpack.c.h.b16 %v581
      %v1506 = vpack.c.b16 %v1284, %v1282
      %v1507 = vpack.c.b16 %v1285, %v1283
      %v1508 = vpack.c.b16 %v1288, %v1286
      %v1509 = vpack.c.b16 %v1289, %v1287
      %v1510 = vpack.c.b16 %v1292, %v1290
      %v1511 = vpack.c.b16 %v1293, %v1291
      %v1512 = vpack.c.b16 %v1296, %v1294
      %v1513 = vpack.c.b16 %v1297, %v1295
      %v1514 = vpack.c.b16 %v1300, %v1298
      %v1515 = vpack.c.b16 %v1301, %v1299
      %v1516 = vpack.c.b16 %v1304, %v1302
      %v1517 = vpack.c.b16 %v1305, %v1303
      %v1518 = vpack.c.b16 %v1308, %v1306
      %v1519 = vpack.c.b16 %v1309, %v1307
      %v1520 = vpack.c.b16 %v1312, %v1310
      %v1521 = vpack.c.b16 %v1313, %v1311
      %v1522 = vpack.c.b16 %v1316, %v1314
      %v1523 = vpack.c.b16 %v1317, %v1315
      %v1524 = vpack.c.b16 %v1320, %v1318
      %v1525 = vpack.c.b16 %v1321, %v1319
      %v1526 = vpack.c.b16 %v1324, %v1322
      %v1527 = vpack.c.b16 %v1325, %v1323
      %v1528 = vpack.c.b16 %v1328, %v1326
      %v1529 = vpack.c.b16 %v1329, %v1327
      %v1530 = vpack.c.b16 %v1332, %v1330
      %v1531 = vpack.c.b16 %v1333, %v1331
      %v1532 = vpack.c.b16 %v1336, %v1334
      %v1533 = vpack.c.b16 %v1337, %v1335
      %v1534 = vpack.c.b16 %v1340, %v1338
      %v1535 = vpack.c.b16 %v1341, %v1339
      %v1536 = vpack.c.b16 %v1344, %v1342
      %v1537 = vpack.c.b16 %v1345, %v1343
      %v1538 = vpack.c.b16 %v1348, %v1346
      %v1539 = vpack.c.b16 %v1349, %v1347
      %v1540 = vpack.c.b16 %v1352, %v1350
      %v1541 = vpack.c.b16 %v1353, %v1351
      %v1542 = vpack.c.b16 %v1356, %v1354
      %v1543 = vpack.c.b16 %v1357, %v1355
      %v1544 = vpack.c.b16 %v1360, %v1358
      %v1545 = vpack.c.b16 %v1361, %v1359
      %v1546 = vpack.c.b16 %v1364, %v1362
      %v1547 = vpack.c.b16 %v1365, %v1363
      %v1548 = vpack.c.b16 %v1368, %v1366
      %v1549 = vpack.c.b16 %v1369, %v1367
      %v1550 = vpack.c.b16 %v1372, %v1370
      %v1551 = vpack.c.b16 %v1373, %v1371
      %v1552 = vpack.c.b16 %v1376, %v1374
      %v1553 = vpack.c.b16 %v1377, %v1375
      %v1554 = vpack.c.b16 %v1380, %v1378
      %v1555 = vpack.c.b16 %v1381, %v1379
      %v1556 = vpack.c.b16 %v1384, %v1382
      %v1557 = vpack.c.b16 %v1385, %v1383
      %v1558 = vpack.c.b16 %v1388, %v1386
      %v1559 = vpack.c.b16 %v1389, %v1387
      %v1560 = vpack.c.b16 %v1392, %v1390
      %v1561 = vpack.c.b16 %v1393, %v1391
      %v1562 = vpack.c.b16 %v1396, %v1394
      %v1563 = vpack.c.b16 %v1397, %v1395
      %v1564 = vpack.c.b16 %v1400, %v1398
      %v1565 = vpack.c.b16 %v1401, %v1399
      %v1566 = vpack.c.b16 %v1404, %v1402
      %v1567 = vpack.c.b16 %v1405, %v1403
      %v1568 = vpack.c.b16 %v1408, %v1406
      %v1569 = vpack.c.b16 %v1409, %v1407
      %v1570 = vpack.c.b16 %v1412, %v1410
      %v1571 = vpack.c.b16 %v1413, %v1411
      %v1572 = vpack.c.b16 %v1416, %v1414
      %v1573 = vpack.c.b16 %v1417, %v1415
      %v1574 = vpack.c.b16 %v1420, %v1418
      %v1575 = vpack.c.b16 %v1421, %v1419
      %v1576 = vpack.c.b16 %v1424, %v1422
      %v1577 = vpack.c.b16 %v1425, %v1423
      %v1578 = vpack.c.b16 %v1428, %v1426
      %v1579 = vpack.c.b16 %v1429, %v1427
      %v1580 = vpack.c.b16 %v1432, %v1430
      %v1581 = vpack.c.b16 %v1433, %v1431
      %v1582 = vpack.c.b16 %v1436, %v1434
      %v1583 = vpack.c.b16 %v1437, %v1435
      %v1584 = vpack.c.b16 %v1440, %v1438
      %v1585 = vpack.c.b16 %v1441, %v1439
      %v1586 = vpack.c.b16 %v1444, %v1442
      %v1587 = vpack.c.b16 %v1445, %v1443
      %v1588 = vpack.c.b16 %v1448, %v1446
      %v1589 = vpack.c.b16 %v1449, %v1447
      %v1590 = vpack.c.b16 %v1452, %v1450
      %v1591 = vpack.c.b16 %v1453, %v1451
      %v1592 = vpack.c.b16 %v1456, %v1454
      %v1593 = vpack.c.b16 %v1457, %v1455
      %v1594 = vpack.c.b16 %v1460, %v1458
      %v1595 = vpack.c.b16 %v1461, %v1459
      %v1596 = vpack.c.b16 %v1464, %v1462
      %v1597 = vpack.c.b16 %v1465, %v1463
      %v1598 = vpack.c.b16 %v1468, %v1466
      %v1599 = vpack.c.b16 %v1469, %v1467
      %v1600 = vpack.c.b16 %v1472, %v1470
      %v1601 = vpack.c.b16 %v1473, %v1471
      %v1602 = vpack.c.b16 %v1476, %v1474
      %v1603 = vpack.c.b16 %v1477, %v1475
      %v1604 = vpack.c.b16 %v1480, %v1478
      %v1605 = vpack.c.b16 %v1481, %v1479
      %v1606 = vpack.c.b16 %v1484, %v1482
      %v1607 = vpack.c.b16 %v1485, %v1483
      %v1608 = vpack.c.b16 %v1488, %v1486
      %v1609 = vpack.c.b16 %v1489, %v1487
      %v1610 = vpack.c.b16 %v1492, %v1490
      %v1611 = vpack.c.b16 %v1493, %v1491
      %v1612 = vpack.c.b16 %v1496, %v1494
      %v1613 = vpack.c.b16 %v1497, %v1495
      %v1614 = vpack.c.b16 %v1500, %v1498
      %v1615 = vpack.c.b16 %v1501, %v1499
      %v1616 = vpack.c.b16 %v1504, %v1502
      %v1617 = vpack.c.b16 %v1505, %v1503
      %1730 = vmatprep.subr.bf16.mxu0 %v1507
      %1731 = vmatpush1.bf16.msra.mxu0 %v1506
      %1732 = vmatprep.subr.bf16.mxu0 %v1509
      %1733 = vmatpush1.bf16.msra.mxu0 %v1508
      %1734 = vmatprep.subr.bf16.mxu0 %v1511
      %1735 = vmatpush1.bf16.msra.mxu0 %v1510
      %1736 = vmatprep.subr.bf16.mxu0 %v1513
      %1737 = vmatpush1.bf16.msra.mxu0 %v1512
      %1738 = vmatprep.subr.bf16.mxu0 %v1515
      %1739 = vmatpush1.bf16.msra.mxu0 %v1514
      %1740 = vmatprep.subr.bf16.mxu0 %v1517
      %1741 = vmatpush1.bf16.msra.mxu0 %v1516
      %1742 = vmatprep.subr.bf16.mxu0 %v1519
      %1743 = vmatpush1.bf16.msra.mxu0 %v1518
      %1744 = vmatprep.subr.bf16.mxu0 %v1521
      %1745 = vmatpush1.bf16.msra.mxu0 %v1520
      %1746 = vmatprep.subr.bf16.mxu0 %v1523
      %1747 = vmatpush1.bf16.msra.mxu0 %v1522
      %1748 = vmatprep.subr.bf16.mxu0 %v1525
      %1749 = vmatpush1.bf16.msra.mxu0 %v1524
      %1750 = vmatprep.subr.bf16.mxu0 %v1527
      %1751 = vmatpush1.bf16.msra.mxu0 %v1526
      %1752 = vmatprep.subr.bf16.mxu0 %v1529
      %1753 = vmatpush1.bf16.msra.mxu0 %v1528
      %1754 = vmatprep.subr.bf16.mxu0 %v1531
      %1755 = vmatpush1.bf16.msra.mxu0 %v1530
      %1756 = vmatprep.subr.bf16.mxu0 %v1533
      %1757 = vmatpush1.bf16.msra.mxu0 %v1532
      %1758 = vmatprep.subr.bf16.mxu0 %v1535
      %1759 = vmatpush1.bf16.msra.mxu0 %v1534
      %1760 = vmatprep.subr.bf16.mxu0 %v1537
      %1761 = vmatpush1.bf16.msra.mxu0 %v1536
      %1762 = vmatprep.mubr.bf16.mxu0 %v947
      %1763 = vmatmul.mubr.bf16.gmra.mrb[0].mxu0 %v946
      %v1764 = vpop.f32.mrb[0].mxu0
      %v1765 = vadd.f32 %v587, %v1764
      %v1766 = vpop.f32.mrb[0].mxu0
      %v1767 = vadd.f32 %v591, %v1766
      %v1768 = vpop.f32.mrb[0].mxu0
      %v1769 = vadd.f32 %v587, %v1768
      %v1770 = vpop.f32.mrb[0].mxu0
      %v1771 = vadd.f32 %v591, %v1770
      %1772 = vmatprep.mubr.bf16.mxu0 %v954
      %1773 = vmatmul.mubr.bf16.gmra.mrb[0].mxu0 %v953
      %v1774 = vpop.f32.mrb[0].mxu0
      %v1775 = vadd.f32 %v587, %v1774
      %v1776 = vpop.f32.mrb[0].mxu0
      %v1777 = vadd.f32 %v591, %v1776
      %v1778 = vpop.f32.mrb[0].mxu0
      %v1779 = vadd.f32 %v587, %v1778
      %v1780 = vpop.f32.mrb[0].mxu0
      %v1781 = vadd.f32 %v591, %v1780
      %1782 = vmatprep.mubr.bf16.mxu0 %v961
      %1783 = vmatmul.mubr.bf16.gmra.mrb[0].mxu0 %v960
      %v1784 = vpop.f32.mrb[0].mxu0
      %v1785 = vadd.f32 %v587, %v1784
      %v1786 = vpop.f32.mrb[0].mxu0
      %v1787 = vadd.f32 %v591, %v1786
      %v1788 = vpop.f32.mrb[0].mxu0
      %v1789 = vadd.f32 %v587, %v1788
      %v1790 = vpop.f32.mrb[0].mxu0
      %v1791 = vadd.f32 %v591, %v1790
      %1792 = vmatprep.mubr.bf16.mxu0 %v968
      %1793 = vmatmul.mubr.bf16.gmra.mrb[0].mxu0 %v967
      %v1794 = vpop.f32.mrb[0].mxu0
      %v1795 = vadd.f32 %v587, %v1794
      %v1796 = vpop.f32.mrb[0].mxu0
      %v1797 = vadd.f32 %v591, %v1796
      %v1798 = vpop.f32.mrb[0].mxu0
      %v1799 = vadd.f32 %v587, %v1798
      %v1800 = vpop.f32.mrb[0].mxu0
      %v1801 = vadd.f32 %v591, %v1800
      %1802 = vmatprep.mubr.bf16.mxu0 %v975
      %1803 = vmatmul.mubr.bf16.gmra.mrb[0].mxu0 %v974
      %v1804 = vpop.f32.mrb[0].mxu0
      %v1805 = vadd.f32 %v587, %v1804
      %v1806 = vpop.f32.mrb[0].mxu0
      %v1807 = vadd.f32 %v591, %v1806
      %v1808 = vpop.f32.mrb[0].mxu0
      %v1809 = vadd.f32 %v587, %v1808
      %v1810 = vpop.f32.mrb[0].mxu0
      %v1811 = vadd.f32 %v591, %v1810
      %1812 = vmatprep.mubr.bf16.mxu0 %v982
      %1813 = vmatmul.mubr.bf16.gmra.mrb[0].mxu0 %v981
      %v1814 = vpop.f32.mrb[0].mxu0
      %v1815 = vadd.f32 %v587, %v1814
      %v1816 = vpop.f32.mrb[0].mxu0
      %v1817 = vadd.f32 %v591, %v1816
      %v1818 = vpop.f32.mrb[0].mxu0
      %v1819 = vadd.f32 %v587, %v1818
      %v1820 = vpop.f32.mrb[0].mxu0
      %v1821 = vadd.f32 %v591, %v1820
      %1822 = vmatprep.mubr.bf16.mxu0 %v989
      %1823 = vmatmul.mubr.bf16.gmra.mrb[0].mxu0 %v988
      %v1824 = vpop.f32.mrb[0].mxu0
      %v1825 = vadd.f32 %v587, %v1824
      %v1826 = vpop.f32.mrb[0].mxu0
      %v1827 = vadd.f32 %v591, %v1826
      %v1828 = vpop.f32.mrb[0].mxu0
      %v1829 = vadd.f32 %v587, %v1828
      %v1830 = vpop.f32.mrb[0].mxu0
      %v1831 = vadd.f32 %v591, %v1830
      %1832 = vmatprep.mubr.bf16.mxu0 %v996
      %1833 = vmatmul.mubr.bf16.gmra.mrb[0].mxu0 %v995
      %v1834 = vpop.f32.mrb[0].mxu0
      %v1835 = vadd.f32 %v587, %v1834
      %v1836 = vpop.f32.mrb[0].mxu0
      %v1837 = vadd.f32 %v591, %v1836
      %v1838 = vpop.f32.mrb[0].mxu0
      %v1839 = vadd.f32 %v587, %v1838
      %v1840 = vpop.f32.mrb[0].mxu0
      %v1841 = vadd.f32 %v591, %v1840
      %1842 = vmatprep.mubr.bf16.mxu0 %v1003
      %1843 = vmatmul.mubr.bf16.gmra.mrb[0].mxu0 %v1002
      %v1844 = vpop.f32.mrb[0].mxu0
      %v1845 = vadd.f32 %v587, %v1844
      %v1846 = vpop.f32.mrb[0].mxu0
      %v1847 = vadd.f32 %v591, %v1846
      %v1848 = vpop.f32.mrb[0].mxu0
      %v1849 = vadd.f32 %v587, %v1848
      %v1850 = vpop.f32.mrb[0].mxu0
      %v1851 = vadd.f32 %v591, %v1850
      %1852 = vmatprep.mubr.bf16.mxu0 %v1010
      %1853 = vmatmul.mubr.bf16.gmra.mrb[0].mxu0 %v1009
      %v1854 = vpop.f32.mrb[0].mxu0
      %v1855 = vadd.f32 %v587, %v1854
      %v1856 = vpop.f32.mrb[0].mxu0
      %v1857 = vadd.f32 %v591, %v1856
      %v1858 = vpop.f32.mrb[0].mxu0
      %v1859 = vadd.f32 %v587, %v1858
      %v1860 = vpop.f32.mrb[0].mxu0
      %v1861 = vadd.f32 %v591, %v1860
      %1862 = vmatprep.mubr.bf16.mxu0 %v1017
      %1863 = vmatmul.mubr.bf16.gmra.mrb[0].mxu0 %v1016
      %v1864 = vpop.f32.mrb[0].mxu0
      %v1865 = vadd.f32 %v587, %v1864
      %v1866 = vpop.f32.mrb[0].mxu0
      %v1867 = vadd.f32 %v591, %v1866
      %v1868 = vpop.f32.mrb[0].mxu0
      %v1869 = vadd.f32 %v587, %v1868
      %v1870 = vpop.f32.mrb[0].mxu0
      %v1871 = vadd.f32 %v591, %v1870
      %1872 = vmatprep.mubr.bf16.mxu0 %v1024
      %1873 = vmatmul.mubr.bf16.gmra.mrb[0].mxu0 %v1023
      %v1874 = vpop.f32.mrb[0].mxu0
      %v1875 = vadd.f32 %v587, %v1874
      %v1876 = vpop.f32.mrb[0].mxu0
      %v1877 = vadd.f32 %v591, %v1876
      %v1878 = vpop.f32.mrb[0].mxu0
      %v1879 = vadd.f32 %v587, %v1878
      %v1880 = vpop.f32.mrb[0].mxu0
      %v1881 = vadd.f32 %v591, %v1880
      %1882 = vmatprep.mubr.bf16.mxu0 %v1031
      %1883 = vmatmul.mubr.bf16.gmra.mrb[0].mxu0 %v1030
      %v1884 = vpop.f32.mrb[0].mxu0
      %v1885 = vadd.f32 %v587, %v1884
      %v1886 = vpop.f32.mrb[0].mxu0
      %v1887 = vadd.f32 %v591, %v1886
      %v1888 = vpop.f32.mrb[0].mxu0
      %v1889 = vadd.f32 %v587, %v1888
      %v1890 = vpop.f32.mrb[0].mxu0
      %v1891 = vadd.f32 %v591, %v1890
      %1892 = vmatprep.mubr.bf16.mxu0 %v1038
      %1893 = vmatmul.mubr.bf16.gmra.mrb[0].mxu0 %v1037
      %v1894 = vpop.f32.mrb[0].mxu0
      %v1895 = vadd.f32 %v587, %v1894
      %v1896 = vpop.f32.mrb[0].mxu0
      %v1897 = vadd.f32 %v591, %v1896
      %v1898 = vpop.f32.mrb[0].mxu0
      %v1899 = vadd.f32 %v587, %v1898
      %v1900 = vpop.f32.mrb[0].mxu0
      %v1901 = vadd.f32 %v591, %v1900
      %1902 = vmatprep.mubr.bf16.mxu0 %v1045
      %1903 = vmatmul.mubr.bf16.gmra.mrb[0].mxu0 %v1044
      %v1904 = vpop.f32.mrb[0].mxu0
      %v1905 = vadd.f32 %v587, %v1904
      %v1906 = vpop.f32.mrb[0].mxu0
      %v1907 = vadd.f32 %v591, %v1906
      %v1908 = vpop.f32.mrb[0].mxu0
      %v1909 = vadd.f32 %v587, %v1908
      %v1910 = vpop.f32.mrb[0].mxu0
      %v1911 = vadd.f32 %v591, %v1910
      %1912 = vmatprep.mubr.bf16.mxu0 %v1052
      %1913 = vmatmul.mubr.bf16.gmra.mrb[0].mxu0 %v1051
      %v1914 = vpop.f32.mrb[0].mxu0
      %v1915 = vadd.f32 %v587, %v1914
      %v1916 = vpop.f32.mrb[0].mxu0
      %v1917 = vadd.f32 %v591, %v1916
      %v1918 = vpop.f32.mrb[0].mxu0
      %v1919 = vadd.f32 %v587, %v1918
      %v1920 = vpop.f32.mrb[0].mxu0
      %v1921 = vadd.f32 %v591, %v1920
      %1922 = vdwg.mxu0
      %1923 = vmatprep.subr.bf16.mxu0 %v1539
      %1924 = vmatpush1.bf16.msra.mxu0 %v1538
      %1925 = vmatprep.subr.bf16.mxu0 %v1541
      %1926 = vmatpush1.bf16.msra.mxu0 %v1540
      %1927 = vmatprep.subr.bf16.mxu0 %v1543
      %1928 = vmatpush1.bf16.msra.mxu0 %v1542
      %1929 = vmatprep.subr.bf16.mxu0 %v1545
      %1930 = vmatpush1.bf16.msra.mxu0 %v1544
      %1931 = vmatprep.subr.bf16.mxu0 %v1547
      %1932 = vmatpush1.bf16.msra.mxu0 %v1546
      %1933 = vmatprep.subr.bf16.mxu0 %v1549
      %1934 = vmatpush1.bf16.msra.mxu0 %v1548
      %1935 = vmatprep.subr.bf16.mxu0 %v1551
      %1936 = vmatpush1.bf16.msra.mxu0 %v1550
      %1937 = vmatprep.subr.bf16.mxu0 %v1553
      %1938 = vmatpush1.bf16.msra.mxu0 %v1552
      %1939 = vmatprep.subr.bf16.mxu0 %v1555
      %1940 = vmatpush1.bf16.msra.mxu0 %v1554
      %1941 = vmatprep.subr.bf16.mxu0 %v1557
      %1942 = vmatpush1.bf16.msra.mxu0 %v1556
      %1943 = vmatprep.subr.bf16.mxu0 %v1559
      %1944 = vmatpush1.bf16.msra.mxu0 %v1558
      %1945 = vmatprep.subr.bf16.mxu0 %v1561
      %1946 = vmatpush1.bf16.msra.mxu0 %v1560
      %1947 = vmatprep.subr.bf16.mxu0 %v1563
      %1948 = vmatpush1.bf16.msra.mxu0 %v1562
      %1949 = vmatprep.subr.bf16.mxu0 %v1565
      %1950 = vmatpush1.bf16.msra.mxu0 %v1564
      %1951 = vmatprep.subr.bf16.mxu0 %v1567
      %1952 = vmatpush1.bf16.msra.mxu0 %v1566
      %1953 = vmatprep.subr.bf16.mxu0 %v1569
      %1954 = vmatpush1.bf16.msra.mxu0 %v1568
      %1955 = vmatprep.mubr.bf16.mxu0 %v949
      %1956 = vmatmul.mubr.bf16.gmra.mrb[0].mxu0 %v948
      %v1957 = vpop.f32.mrb[0].mxu0
      %v1958 = vadd.f32 %v1765, %v1957
      %v1959 = vpop.f32.mrb[0].mxu0
      %v1960 = vadd.f32 %v1767, %v1959
      %v1961 = vpop.f32.mrb[0].mxu0
      %v1962 = vadd.f32 %v1769, %v1961
      %v1963 = vpop.f32.mrb[0].mxu0
      %v1964 = vadd.f32 %v1771, %v1963
      %1965 = vmatprep.mubr.bf16.mxu0 %v956
      %1966 = vmatmul.mubr.bf16.gmra.mrb[0].mxu0 %v955
      %v1967 = vpop.f32.mrb[0].mxu0
      %v1968 = vadd.f32 %v1775, %v1967
      %v1969 = vpop.f32.mrb[0].mxu0
      %v1970 = vadd.f32 %v1777, %v1969
      %v1971 = vpop.f32.mrb[0].mxu0
      %v1972 = vadd.f32 %v1779, %v1971
      %v1973 = vpop.f32.mrb[0].mxu0
      %v1974 = vadd.f32 %v1781, %v1973
      %1975 = vmatprep.mubr.bf16.mxu0 %v963
      %1976 = vmatmul.mubr.bf16.gmra.mrb[0].mxu0 %v962
      %v1977 = vpop.f32.mrb[0].mxu0
      %v1978 = vadd.f32 %v1785, %v1977
      %v1979 = vpop.f32.mrb[0].mxu0
      %v1980 = vadd.f32 %v1787, %v1979
      %v1981 = vpop.f32.mrb[0].mxu0
      %v1982 = vadd.f32 %v1789, %v1981
      %v1983 = vpop.f32.mrb[0].mxu0
      %v1984 = vadd.f32 %v1791, %v1983
      %1985 = vmatprep.mubr.bf16.mxu0 %v970
      %1986 = vmatmul.mubr.bf16.gmra.mrb[0].mxu0 %v969
      %v1987 = vpop.f32.mrb[0].mxu0
      %v1988 = vadd.f32 %v1795, %v1987
      %v1989 = vpop.f32.mrb[0].mxu0
      %v1990 = vadd.f32 %v1797, %v1989
      %v1991 = vpop.f32.mrb[0].mxu0
      %v1992 = vadd.f32 %v1799, %v1991
      %v1993 = vpop.f32.mrb[0].mxu0
      %v1994 = vadd.f32 %v1801, %v1993
      %1995 = vmatprep.mubr.bf16.mxu0 %v977
      %1996 = vmatmul.mubr.bf16.gmra.mrb[0].mxu0 %v976
      %v1997 = vpop.f32.mrb[0].mxu0
      %v1998 = vadd.f32 %v1805, %v1997
      %v1999 = vpop.f32.mrb[0].mxu0
      %v2000 = vadd.f32 %v1807, %v1999
      %v2001 = vpop.f32.mrb[0].mxu0
      %v2002 = vadd.f32 %v1809, %v2001
      %v2003 = vpop.f32.mrb[0].mxu0
      %v2004 = vadd.f32 %v1811, %v2003
      %2005 = vmatprep.mubr.bf16.mxu0 %v984
      %2006 = vmatmul.mubr.bf16.gmra.mrb[0].mxu0 %v983
      %v2007 = vpop.f32.mrb[0].mxu0
      %v2008 = vadd.f32 %v1815, %v2007
      %v2009 = vpop.f32.mrb[0].mxu0
      %v2010 = vadd.f32 %v1817, %v2009
      %v2011 = vpop.f32.mrb[0].mxu0
      %v2012 = vadd.f32 %v1819, %v2011
      %v2013 = vpop.f32.mrb[0].mxu0
      %v2014 = vadd.f32 %v1821, %v2013
      %2015 = vmatprep.mubr.bf16.mxu0 %v991
      %2016 = vmatmul.mubr.bf16.gmra.mrb[0].mxu0 %v990
      %v2017 = vpop.f32.mrb[0].mxu0
      %v2018 = vadd.f32 %v1825, %v2017
      %v2019 = vpop.f32.mrb[0].mxu0
      %v2020 = vadd.f32 %v1827, %v2019
      %v2021 = vpop.f32.mrb[0].mxu0
      %v2022 = vadd.f32 %v1829, %v2021
      %v2023 = vpop.f32.mrb[0].mxu0
      %v2024 = vadd.f32 %v1831, %v2023
      %2025 = vmatprep.mubr.bf16.mxu0 %v998
      %2026 = vmatmul.mubr.bf16.gmra.mrb[0].mxu0 %v997
      %v2027 = vpop.f32.mrb[0].mxu0
      %v2028 = vadd.f32 %v1835, %v2027
      %v2029 = vpop.f32.mrb[0].mxu0
      %v2030 = vadd.f32 %v1837, %v2029
      %v2031 = vpop.f32.mrb[0].mxu0
      %v2032 = vadd.f32 %v1839, %v2031
      %v2033 = vpop.f32.mrb[0].mxu0
      %v2034 = vadd.f32 %v1841, %v2033
      %2035 = vmatprep.mubr.bf16.mxu0 %v1005
      %2036 = vmatmul.mubr.bf16.gmra.mrb[0].mxu0 %v1004
      %v2037 = vpop.f32.mrb[0].mxu0
      %v2038 = vadd.f32 %v1845, %v2037
      %v2039 = vpop.f32.mrb[0].mxu0
      %v2040 = vadd.f32 %v1847, %v2039
      %v2041 = vpop.f32.mrb[0].mxu0
      %v2042 = vadd.f32 %v1849, %v2041
      %v2043 = vpop.f32.mrb[0].mxu0
      %v2044 = vadd.f32 %v1851, %v2043
      %2045 = vmatprep.mubr.bf16.mxu0 %v1012
      %2046 = vmatmul.mubr.bf16.gmra.mrb[0].mxu0 %v1011
      %v2047 = vpop.f32.mrb[0].mxu0
      %v2048 = vadd.f32 %v1855, %v2047
      %v2049 = vpop.f32.mrb[0].mxu0
      %v2050 = vadd.f32 %v1857, %v2049
      %v2051 = vpop.f32.mrb[0].mxu0
      %v2052 = vadd.f32 %v1859, %v2051
      %v2053 = vpop.f32.mrb[0].mxu0
      %v2054 = vadd.f32 %v1861, %v2053
      %2055 = vmatprep.mubr.bf16.mxu0 %v1019
      %2056 = vmatmul.mubr.bf16.gmra.mrb[0].mxu0 %v1018
      %v2057 = vpop.f32.mrb[0].mxu0
      %v2058 = vadd.f32 %v1865, %v2057
      %v2059 = vpop.f32.mrb[0].mxu0
      %v2060 = vadd.f32 %v1867, %v2059
      %v2061 = vpop.f32.mrb[0].mxu0
      %v2062 = vadd.f32 %v1869, %v2061
      %v2063 = vpop.f32.mrb[0].mxu0
      %v2064 = vadd.f32 %v1871, %v2063
      %2065 = vmatprep.mubr.bf16.mxu0 %v1026
      %2066 = vmatmul.mubr.bf16.gmra.mrb[0].mxu0 %v1025
      %v2067 = vpop.f32.mrb[0].mxu0
      %v2068 = vadd.f32 %v1875, %v2067
      %v2069 = vpop.f32.mrb[0].mxu0
      %v2070 = vadd.f32 %v1877, %v2069
      %v2071 = vpop.f32.mrb[0].mxu0
      %v2072 = vadd.f32 %v1879, %v2071
      %v2073 = vpop.f32.mrb[0].mxu0
      %v2074 = vadd.f32 %v1881, %v2073
      %2075 = vmatprep.mubr.bf16.mxu0 %v1033
      %2076 = vmatmul.mubr.bf16.gmra.mrb[0].mxu0 %v1032
      %v2077 = vpop.f32.mrb[0].mxu0
      %v2078 = vadd.f32 %v1885, %v2077
      %v2079 = vpop.f32.mrb[0].mxu0
      %v2080 = vadd.f32 %v1887, %v2079
      %v2081 = vpop.f32.mrb[0].mxu0
      %v2082 = vadd.f32 %v1889, %v2081
      %v2083 = vpop.f32.mrb[0].mxu0
      %v2084 = vadd.f32 %v1891, %v2083
      %2085 = vmatprep.mubr.bf16.mxu0 %v1040
      %2086 = vmatmul.mubr.bf16.gmra.mrb[0].mxu0 %v1039
      %v2087 = vpop.f32.mrb[0].mxu0
      %v2088 = vadd.f32 %v1895, %v2087
      %v2089 = vpop.f32.mrb[0].mxu0
      %v2090 = vadd.f32 %v1897, %v2089
      %v2091 = vpop.f32.mrb[0].mxu0
      %v2092 = vadd.f32 %v1899, %v2091
      %v2093 = vpop.f32.mrb[0].mxu0
      %v2094 = vadd.f32 %v1901, %v2093
      %2095 = vmatprep.mubr.bf16.mxu0 %v1047
      %2096 = vmatmul.mubr.bf16.gmra.mrb[0].mxu0 %v1046
      %v2097 = vpop.f32.mrb[0].mxu0
      %v2098 = vadd.f32 %v1905, %v2097
      %v2099 = vpop.f32.mrb[0].mxu0
      %v2100 = vadd.f32 %v1907, %v2099
      %v2101 = vpop.f32.mrb[0].mxu0
      %v2102 = vadd.f32 %v1909, %v2101
      %v2103 = vpop.f32.mrb[0].mxu0
      %v2104 = vadd.f32 %v1911, %v2103
      %2105 = vmatprep.mubr.bf16.mxu0 %v1054
      %2106 = vmatmul.mubr.bf16.gmra.mrb[0].mxu0 %v1053
      %v2107 = vpop.f32.mrb[0].mxu0
      %v2108 = vadd.f32 %v1915, %v2107
      %v2109 = vpop.f32.mrb[0].mxu0
      %v2110 = vadd.f32 %v1917, %v2109
      %v2111 = vpop.f32.mrb[0].mxu0
      %v2112 = vadd.f32 %v1919, %v2111
      %v2113 = vpop.f32.mrb[0].mxu0
      %v2114 = vadd.f32 %v1921, %v2113
      %2115 = vdwg.mxu0
      %2116 = vmatprep.subr.bf16.mxu0 %v1571
      %2117 = vmatpush1.bf16.msra.mxu0 %v1570
      %2118 = vmatprep.subr.bf16.mxu0 %v1573
      %2119 = vmatpush1.bf16.msra.mxu0 %v1572
      %2120 = vmatprep.subr.bf16.mxu0 %v1575
      %2121 = vmatpush1.bf16.msra.mxu0 %v1574
      %2122 = vmatprep.subr.bf16.mxu0 %v1577
      %2123 = vmatpush1.bf16.msra.mxu0 %v1576
      %2124 = vmatprep.subr.bf16.mxu0 %v1579
      %2125 = vmatpush1.bf16.msra.mxu0 %v1578
      %2126 = vmatprep.subr.bf16.mxu0 %v1581
      %2127 = vmatpush1.bf16.msra.mxu0 %v1580
      %2128 = vmatprep.subr.bf16.mxu0 %v1583
      %2129 = vmatpush1.bf16.msra.mxu0 %v1582
      %2130 = vmatprep.subr.bf16.mxu0 %v1585
      %2131 = vmatpush1.bf16.msra.mxu0 %v1584
      %2132 = vmatprep.subr.bf16.mxu0 %v1587
      %2133 = vmatpush1.bf16.msra.mxu0 %v1586
      %2134 = vmatprep.subr.bf16.mxu0 %v1589
      %2135 = vmatpush1.bf16.msra.mxu0 %v1588
      %2136 = vmatprep.subr.bf16.mxu0 %v1591
      %2137 = vmatpush1.bf16.msra.mxu0 %v1590
      %2138 = vmatprep.subr.bf16.mxu0 %v1593
      %2139 = vmatpush1.bf16.msra.mxu0 %v1592
      %2140 = vmatprep.subr.bf16.mxu0 %v1595
      %2141 = vmatpush1.bf16.msra.mxu0 %v1594
      %2142 = vmatprep.subr.bf16.mxu0 %v1597
      %2143 = vmatpush1.bf16.msra.mxu0 %v1596
      %2144 = vmatprep.subr.bf16.mxu0 %v1599
      %2145 = vmatpush1.bf16.msra.mxu0 %v1598
      %2146 = vmatprep.subr.bf16.mxu0 %v1601
      %2147 = vmatpush1.bf16.msra.mxu0 %v1600
      %2148 = vmatprep.mubr.bf16.mxu0 %v951
      %2149 = vmatmul.mubr.bf16.gmra.mrb[0].mxu0 %v950
      %v2150 = vpop.f32.mrb[0].mxu0
      %v2151 = vadd.f32 %v1958, %v2150
      %v2152 = vpop.f32.mrb[0].mxu0
      %v2153 = vadd.f32 %v1960, %v2152
      %v2154 = vpop.f32.mrb[0].mxu0
      %v2155 = vadd.f32 %v1962, %v2154
      %v2156 = vpop.f32.mrb[0].mxu0
      %v2157 = vadd.f32 %v1964, %v2156
      %2158 = vmatprep.mubr.bf16.mxu0 %v958
      %2159 = vmatmul.mubr.bf16.gmra.mrb[0].mxu0 %v957
      %v2160 = vpop.f32.mrb[0].mxu0
      %v2161 = vadd.f32 %v1968, %v2160
      %v2162 = vpop.f32.mrb[0].mxu0
      %v2163 = vadd.f32 %v1970, %v2162
      %v2164 = vpop.f32.mrb[0].mxu0
      %v2165 = vadd.f32 %v1972, %v2164
      %v2166 = vpop.f32.mrb[0].mxu0
      %v2167 = vadd.f32 %v1974, %v2166
      %2168 = vmatprep.mubr.bf16.mxu0 %v965
      %2169 = vmatmul.mubr.bf16.gmra.mrb[0].mxu0 %v964
      %v2170 = vpop.f32.mrb[0].mxu0
      %v2171 = vadd.f32 %v1978, %v2170
      %v2172 = vpop.f32.mrb[0].mxu0
      %v2173 = vadd.f32 %v1980, %v2172
      %v2174 = vpop.f32.mrb[0].mxu0
      %v2175 = vadd.f32 %v1982, %v2174
      %v2176 = vpop.f32.mrb[0].mxu0
      %v2177 = vadd.f32 %v1984, %v2176
      %2178 = vmatprep.mubr.bf16.mxu0 %v972
      %2179 = vmatmul.mubr.bf16.gmra.mrb[0].mxu0 %v971
      %v2180 = vpop.f32.mrb[0].mxu0
      %v2181 = vadd.f32 %v1988, %v2180
      %v2182 = vpop.f32.mrb[0].mxu0
      %v2183 = vadd.f32 %v1990, %v2182
      %v2184 = vpop.f32.mrb[0].mxu0
      %v2185 = vadd.f32 %v1992, %v2184
      %v2186 = vpop.f32.mrb[0].mxu0
      %v2187 = vadd.f32 %v1994, %v2186
      %2188 = vmatprep.mubr.bf16.mxu0 %v979
      %2189 = vmatmul.mubr.bf16.gmra.mrb[0].mxu0 %v978
      %v2190 = vpop.f32.mrb[0].mxu0
      %v2191 = vadd.f32 %v1998, %v2190
      %v2192 = vpop.f32.mrb[0].mxu0
      %v2193 = vadd.f32 %v2000, %v2192
      %v2194 = vpop.f32.mrb[0].mxu0
      %v2195 = vadd.f32 %v2002, %v2194
      %v2196 = vpop.f32.mrb[0].mxu0
      %v2197 = vadd.f32 %v2004, %v2196
      %2198 = vmatprep.mubr.bf16.mxu0 %v986
      %2199 = vmatmul.mubr.bf16.gmra.mrb[0].mxu0 %v985
      %v2200 = vpop.f32.mrb[0].mxu0
      %v2201 = vadd.f32 %v2008, %v2200
      %v2202 = vpop.f32.mrb[0].mxu0
      %v2203 = vadd.f32 %v2010, %v2202
      %v2204 = vpop.f32.mrb[0].mxu0
      %v2205 = vadd.f32 %v2012, %v2204
      %v2206 = vpop.f32.mrb[0].mxu0
      %v2207 = vadd.f32 %v2014, %v2206
      %2208 = vmatprep.mubr.bf16.mxu0 %v993
      %2209 = vmatmul.mubr.bf16.gmra.mrb[0].mxu0 %v992
      %v2210 = vpop.f32.mrb[0].mxu0
      %v2211 = vadd.f32 %v2018, %v2210
      %v2212 = vpop.f32.mrb[0].mxu0
      %v2213 = vadd.f32 %v2020, %v2212
      %v2214 = vpop.f32.mrb[0].mxu0
      %v2215 = vadd.f32 %v2022, %v2214
      %v2216 = vpop.f32.mrb[0].mxu0
      %v2217 = vadd.f32 %v2024, %v2216
      %2218 = vmatprep.mubr.bf16.mxu0 %v1000
      %2219 = vmatmul.mubr.bf16.gmra.mrb[0].mxu0 %v999
      %v2220 = vpop.f32.mrb[0].mxu0
      %v2221 = vadd.f32 %v2028, %v2220
      %v2222 = vpop.f32.mrb[0].mxu0
      %v2223 = vadd.f32 %v2030, %v2222
      %v2224 = vpop.f32.mrb[0].mxu0
      %v2225 = vadd.f32 %v2032, %v2224
      %v2226 = vpop.f32.mrb[0].mxu0
      %v2227 = vadd.f32 %v2034, %v2226
      %2228 = vmatprep.mubr.bf16.mxu0 %v1007
      %2229 = vmatmul.mubr.bf16.gmra.mrb[0].mxu0 %v1006
      %v2230 = vpop.f32.mrb[0].mxu0
      %v2231 = vadd.f32 %v2038, %v2230
      %v2232 = vpop.f32.mrb[0].mxu0
      %v2233 = vadd.f32 %v2040, %v2232
      %v2234 = vpop.f32.mrb[0].mxu0
      %v2235 = vadd.f32 %v2042, %v2234
      %v2236 = vpop.f32.mrb[0].mxu0
      %v2237 = vadd.f32 %v2044, %v2236
      %2238 = vmatprep.mubr.bf16.mxu0 %v1014
      %2239 = vmatmul.mubr.bf16.gmra.mrb[0].mxu0 %v1013
      %v2240 = vpop.f32.mrb[0].mxu0
      %v2241 = vadd.f32 %v2048, %v2240
      %v2242 = vpop.f32.mrb[0].mxu0
      %v2243 = vadd.f32 %v2050, %v2242
      %v2244 = vpop.f32.mrb[0].mxu0
      %v2245 = vadd.f32 %v2052, %v2244
      %v2246 = vpop.f32.mrb[0].mxu0
      %v2247 = vadd.f32 %v2054, %v2246
      %2248 = vmatprep.mubr.bf16.mxu0 %v1021
      %2249 = vmatmul.mubr.bf16.gmra.mrb[0].mxu0 %v1020
      %v2250 = vpop.f32.mrb[0].mxu0
      %v2251 = vadd.f32 %v2058, %v2250
      %v2252 = vpop.f32.mrb[0].mxu0
      %v2253 = vadd.f32 %v2060, %v2252
      %v2254 = vpop.f32.mrb[0].mxu0
      %v2255 = vadd.f32 %v2062, %v2254
      %v2256 = vpop.f32.mrb[0].mxu0
      %v2257 = vadd.f32 %v2064, %v2256
      %2258 = vmatprep.mubr.bf16.mxu0 %v1028
      %2259 = vmatmul.mubr.bf16.gmra.mrb[0].mxu0 %v1027
      %v2260 = vpop.f32.mrb[0].mxu0
      %v2261 = vadd.f32 %v2068, %v2260
      %v2262 = vpop.f32.mrb[0].mxu0
      %v2263 = vadd.f32 %v2070, %v2262
      %v2264 = vpop.f32.mrb[0].mxu0
      %v2265 = vadd.f32 %v2072, %v2264
      %v2266 = vpop.f32.mrb[0].mxu0
      %v2267 = vadd.f32 %v2074, %v2266
      %2268 = vmatprep.mubr.bf16.mxu0 %v1035
      %2269 = vmatmul.mubr.bf16.gmra.mrb[0].mxu0 %v1034
      %v2270 = vpop.f32.mrb[0].mxu0
      %v2271 = vadd.f32 %v2078, %v2270
      %v2272 = vpop.f32.mrb[0].mxu0
      %v2273 = vadd.f32 %v2080, %v2272
      %v2274 = vpop.f32.mrb[0].mxu0
      %v2275 = vadd.f32 %v2082, %v2274
      %v2276 = vpop.f32.mrb[0].mxu0
      %v2277 = vadd.f32 %v2084, %v2276
      %2278 = vmatprep.mubr.bf16.mxu0 %v1042
      %2279 = vmatmul.mubr.bf16.gmra.mrb[0].mxu0 %v1041
      %v2280 = vpop.f32.mrb[0].mxu0
      %v2281 = vadd.f32 %v2088, %v2280
      %v2282 = vpop.f32.mrb[0].mxu0
      %v2283 = vadd.f32 %v2090, %v2282
      %v2284 = vpop.f32.mrb[0].mxu0
      %v2285 = vadd.f32 %v2092, %v2284
      %v2286 = vpop.f32.mrb[0].mxu0
      %v2287 = vadd.f32 %v2094, %v2286
      %2288 = vmatprep.mubr.bf16.mxu0 %v1049
      %2289 = vmatmul.mubr.bf16.gmra.mrb[0].mxu0 %v1048
      %v2290 = vpop.f32.mrb[0].mxu0
      %v2291 = vadd.f32 %v2098, %v2290
      %v2292 = vpop.f32.mrb[0].mxu0
      %v2293 = vadd.f32 %v2100, %v2292
      %v2294 = vpop.f32.mrb[0].mxu0
      %v2295 = vadd.f32 %v2102, %v2294
      %v2296 = vpop.f32.mrb[0].mxu0
      %v2297 = vadd.f32 %v2104, %v2296
      %2298 = vmatprep.mubr.bf16.mxu0 %v1056
      %2299 = vmatmul.mubr.bf16.gmra.mrb[0].mxu0 %v1055
      %v2300 = vpop.f32.mrb[0].mxu0
      %v2301 = vadd.f32 %v2108, %v2300
      %v2302 = vpop.f32.mrb[0].mxu0
      %v2303 = vadd.f32 %v2110, %v2302
      %v2304 = vpop.f32.mrb[0].mxu0
      %v2305 = vadd.f32 %v2112, %v2304
      %v2306 = vpop.f32.mrb[0].mxu0
      %v2307 = vadd.f32 %v2114, %v2306
      %2308 = vdwg.mxu0
      %2309 = vmatprep.subr.bf16.mxu0 %v1603
      %2310 = vmatpush1.bf16.msra.mxu0 %v1602
      %2311 = vmatprep.subr.bf16.mxu0 %v1605
      %2312 = vmatpush1.bf16.msra.mxu0 %v1604
      %2313 = vmatprep.subr.bf16.mxu0 %v1607
      %2314 = vmatpush1.bf16.msra.mxu0 %v1606
      %2315 = vmatprep.subr.bf16.mxu0 %v1609
      %2316 = vmatpush1.bf16.msra.mxu0 %v1608
      %2317 = vmatprep.subr.bf16.mxu0 %v1611
      %2318 = vmatpush1.bf16.msra.mxu0 %v1610
      %2319 = vmatprep.subr.bf16.mxu0 %v1613
      %2320 = vmatpush1.bf16.msra.mxu0 %v1612
      %2321 = vmatprep.subr.bf16.mxu0 %v1615
      %2322 = vmatpush1.bf16.msra.mxu0 %v1614
      %2323 = vmatprep.subr.bf16.mxu0 %v1617
      %2324 = vmatpush1.bf16.msra.mxu0 %v1616
      %2325 = vmatprep.subr.bf16.mxu0 0
      %2326 = vmatpush1.bf16.msra.mxu0 0
      %2327 = vmatprep.subr.bf16.mxu0 0
      %2328 = vmatpush1.bf16.msra.mxu0 0
      %2329 = vmatprep.subr.bf16.mxu0 0
      %2330 = vmatpush1.bf16.msra.mxu0 0
      %2331 = vmatprep.subr.bf16.mxu0 0
      %2332 = vmatpush1.bf16.msra.mxu0 0
      %2333 = vmatprep.subr.bf16.mxu0 0
      %2334 = vmatpush1.bf16.msra.mxu0 0
      %2335 = vmatprep.subr.bf16.mxu0 0
      %2336 = vmatpush1.bf16.msra.mxu0 0
      %2337 = vmatprep.subr.bf16.mxu0 0
      %2338 = vmatpush1.bf16.msra.mxu0 0
      %2339 = vmatprep.subr.bf16.mxu0 0
      %2340 = vmatpush1.bf16.msra.mxu0 0
      %2341 = vmatprep.mubr.bf16.mxu0 0
      %2342 = vmatmul.mubr.bf16.gmra.mrb[0].mxu0 %v952
      %v2343 = vpop.f32.mrb[0].mxu0
      %v2344 = vadd.f32 %v2151, %v2343
      %v2345 = vpop.f32.mrb[0].mxu0
      %v2346 = vadd.f32 %v2153, %v2345
      %v2347 = vpop.f32.mrb[0].mxu0
      %v2348 = vadd.f32 %v2155, %v2347
      %v2349 = vpop.f32.mrb[0].mxu0
      %v2350 = vadd.f32 %v2157, %v2349
      %2351 = vmatprep.mubr.bf16.mxu0 0
      %2352 = vmatmul.mubr.bf16.gmra.mrb[0].mxu0 %v959
      %v2353 = vpop.f32.mrb[0].mxu0
      %v2354 = vadd.f32 %v2161, %v2353
      %v2355 = vpop.f32.mrb[0].mxu0
      %v2356 = vadd.f32 %v2163, %v2355
      %v2357 = vpop.f32.mrb[0].mxu0
      %v2358 = vadd.f32 %v2165, %v2357
      %v2359 = vpop.f32.mrb[0].mxu0
      %v2360 = vadd.f32 %v2167, %v2359
      %2361 = vmatprep.mubr.bf16.mxu0 0
      %2362 = vmatmul.mubr.bf16.gmra.mrb[0].mxu0 %v966
      %v2363 = vpop.f32.mrb[0].mxu0
      %v2364 = vadd.f32 %v2171, %v2363
      %v2365 = vpop.f32.mrb[0].mxu0
      %v2366 = vadd.f32 %v2173, %v2365
      %v2367 = vpop.f32.mrb[0].mxu0
      %v2368 = vadd.f32 %v2175, %v2367
      %v2369 = vpop.f32.mrb[0].mxu0
      %v2370 = vadd.f32 %v2177, %v2369
      %2371 = vmatprep.mubr.bf16.mxu0 0
      %2372 = vmatmul.mubr.bf16.gmra.mrb[0].mxu0 %v973
      %v2373 = vpop.f32.mrb[0].mxu0
      %v2374 = vadd.f32 %v2181, %v2373
      %v2375 = vpop.f32.mrb[0].mxu0
      %v2376 = vadd.f32 %v2183, %v2375
      %v2377 = vpop.f32.mrb[0].mxu0
      %v2378 = vadd.f32 %v2185, %v2377
      %v2379 = vpop.f32.mrb[0].mxu0
      %v2380 = vadd.f32 %v2187, %v2379
      %2381 = vmatprep.mubr.bf16.mxu0 0
      %2382 = vmatmul.mubr.bf16.gmra.mrb[0].mxu0 %v980
      %v2383 = vpop.f32.mrb[0].mxu0
      %v2384 = vadd.f32 %v2191, %v2383
      %v2385 = vpop.f32.mrb[0].mxu0
      %v2386 = vadd.f32 %v2193, %v2385
      %v2387 = vpop.f32.mrb[0].mxu0
      %v2388 = vadd.f32 %v2195, %v2387
      %v2389 = vpop.f32.mrb[0].mxu0
      %v2390 = vadd.f32 %v2197, %v2389
      %2391 = vmatprep.mubr.bf16.mxu0 0
      %2392 = vmatmul.mubr.bf16.gmra.mrb[0].mxu0 %v987
      %v2393 = vpop.f32.mrb[0].mxu0
      %v2394 = vadd.f32 %v2201, %v2393
      %v2395 = vpop.f32.mrb[0].mxu0
      %v2396 = vadd.f32 %v2203, %v2395
      %v2397 = vpop.f32.mrb[0].mxu0
      %v2398 = vadd.f32 %v2205, %v2397
      %v2399 = vpop.f32.mrb[0].mxu0
      %v2400 = vadd.f32 %v2207, %v2399
      %2401 = vmatprep.mubr.bf16.mxu0 0
      %2402 = vmatmul.mubr.bf16.gmra.mrb[0].mxu0 %v994
      %v2403 = vpop.f32.mrb[0].mxu0
      %v2404 = vadd.f32 %v2211, %v2403
      %v2405 = vpop.f32.mrb[0].mxu0
      %v2406 = vadd.f32 %v2213, %v2405
      %v2407 = vpop.f32.mrb[0].mxu0
      %v2408 = vadd.f32 %v2215, %v2407
      %v2409 = vpop.f32.mrb[0].mxu0
      %v2410 = vadd.f32 %v2217, %v2409
      %2411 = vmatprep.mubr.bf16.mxu0 0
      %2412 = vmatmul.mubr.bf16.gmra.mrb[0].mxu0 %v1001
      %v2413 = vpop.f32.mrb[0].mxu0
      %v2414 = vadd.f32 %v2221, %v2413
      %v2415 = vpop.f32.mrb[0].mxu0
      %v2416 = vadd.f32 %v2223, %v2415
      %v2417 = vpop.f32.mrb[0].mxu0
      %v2418 = vadd.f32 %v2225, %v2417
      %v2419 = vpop.f32.mrb[0].mxu0
      %v2420 = vadd.f32 %v2227, %v2419
      %2421 = vmatprep.mubr.bf16.mxu0 0
      %2422 = vmatmul.mubr.bf16.gmra.mrb[0].mxu0 %v1008
      %v2423 = vpop.f32.mrb[0].mxu0
      %v2424 = vadd.f32 %v2231, %v2423
      %v2425 = vpop.f32.mrb[0].mxu0
      %v2426 = vadd.f32 %v2233, %v2425
      %v2427 = vpop.f32.mrb[0].mxu0
      %v2428 = vadd.f32 %v2235, %v2427
      %v2429 = vpop.f32.mrb[0].mxu0
      %v2430 = vadd.f32 %v2237, %v2429
      %2431 = vmatprep.mubr.bf16.mxu0 0
      %2432 = vmatmul.mubr.bf16.gmra.mrb[0].mxu0 %v1015
      %v2433 = vpop.f32.mrb[0].mxu0
      %v2434 = vadd.f32 %v2241, %v2433
      %v2435 = vpop.f32.mrb[0].mxu0
      %v2436 = vadd.f32 %v2243, %v2435
      %v2437 = vpop.f32.mrb[0].mxu0
      %v2438 = vadd.f32 %v2245, %v2437
      %v2439 = vpop.f32.mrb[0].mxu0
      %v2440 = vadd.f32 %v2247, %v2439
      %2441 = vmatprep.mubr.bf16.mxu0 0
      %2442 = vmatmul.mubr.bf16.gmra.mrb[0].mxu0 %v1022
      %v2443 = vpop.f32.mrb[0].mxu0
      %v2444 = vadd.f32 %v2251, %v2443
      %v2445 = vpop.f32.mrb[0].mxu0
      %v2446 = vadd.f32 %v2253, %v2445
      %v2447 = vpop.f32.mrb[0].mxu0
      %v2448 = vadd.f32 %v2255, %v2447
      %v2449 = vpop.f32.mrb[0].mxu0
      %v2450 = vadd.f32 %v2257, %v2449
      %2451 = vmatprep.mubr.bf16.mxu0 0
      %2452 = vmatmul.mubr.bf16.gmra.mrb[0].mxu0 %v1029
      %v2453 = vpop.f32.mrb[0].mxu0
      %v2454 = vadd.f32 %v2261, %v2453
      %v2455 = vpop.f32.mrb[0].mxu0
      %v2456 = vadd.f32 %v2263, %v2455
      %v2457 = vpop.f32.mrb[0].mxu0
      %v2458 = vadd.f32 %v2265, %v2457
      %v2459 = vpop.f32.mrb[0].mxu0
      %v2460 = vadd.f32 %v2267, %v2459
      %2461 = vmatprep.mubr.bf16.mxu0 0
      %2462 = vmatmul.mubr.bf16.gmra.mrb[0].mxu0 %v1036
      %v2463 = vpop.f32.mrb[0].mxu0
      %v2464 = vadd.f32 %v2271, %v2463
      %v2465 = vpop.f32.mrb[0].mxu0
      %v2466 = vadd.f32 %v2273, %v2465
      %v2467 = vpop.f32.mrb[0].mxu0
      %v2468 = vadd.f32 %v2275, %v2467
      %v2469 = vpop.f32.mrb[0].mxu0
      %v2470 = vadd.f32 %v2277, %v2469
      %2471 = vmatprep.mubr.bf16.mxu0 0
      %2472 = vmatmul.mubr.bf16.gmra.mrb[0].mxu0 %v1043
      %v2473 = vpop.f32.mrb[0].mxu0
      %v2474 = vadd.f32 %v2281, %v2473
      %v2475 = vpop.f32.mrb[0].mxu0
      %v2476 = vadd.f32 %v2283, %v2475
      %v2477 = vpop.f32.mrb[0].mxu0
      %v2478 = vadd.f32 %v2285, %v2477
      %v2479 = vpop.f32.mrb[0].mxu0
      %v2480 = vadd.f32 %v2287, %v2479
      %2481 = vmatprep.mubr.bf16.mxu0 0
      %2482 = vmatmul.mubr.bf16.gmra.mrb[0].mxu0 %v1050
      %v2483 = vpop.f32.mrb[0].mxu0
      %v2484 = vadd.f32 %v2291, %v2483
      %v2485 = vpop.f32.mrb[0].mxu0
      %v2486 = vadd.f32 %v2293, %v2485
      %v2487 = vpop.f32.mrb[0].mxu0
      %v2488 = vadd.f32 %v2295, %v2487
      %v2489 = vpop.f32.mrb[0].mxu0
      %v2490 = vadd.f32 %v2297, %v2489
      %2491 = vmatprep.mubr.bf16.mxu0 0
      %2492 = vmatmul.mubr.bf16.gmra.mrb[0].mxu0 %v1057
      %v2493 = vpop.f32.mrb[0].mxu0
      %v2494 = vadd.f32 %v2301, %v2493
      %v2495 = vpop.f32.mrb[0].mxu0
      %v2496 = vadd.f32 %v2303, %v2495
      %v2497 = vpop.f32.mrb[0].mxu0
      %v2498 = vadd.f32 %v2305, %v2497
      %v2499 = vpop.f32.mrb[0].mxu0
      %v2500 = vadd.f32 %v2307, %v2499
      %2501 = vdwg.mxu0
      %v2502 = vmax.f32 %v2344, 0.0
      %v2503 = vmax.f32 %v2346, 0.0
      %v2504 = vmax.f32 %v2348, 0.0
      %v2505 = vmax.f32 %v2350, 0.0
      %v2506 = vmax.f32 %v2354, 0.0
      %v2507 = vmax.f32 %v2356, 0.0
      %v2508 = vmax.f32 %v2358, 0.0
      %v2509 = vmax.f32 %v2360, 0.0
      %v2510 = vmax.f32 %v2364, 0.0
      %v2511 = vmax.f32 %v2366, 0.0
      %v2512 = vmax.f32 %v2368, 0.0
      %v2513 = vmax.f32 %v2370, 0.0
      %v2514 = vmax.f32 %v2374, 0.0
      %v2515 = vmax.f32 %v2376, 0.0
      %v2516 = vmax.f32 %v2378, 0.0
      %v2517 = vmax.f32 %v2380, 0.0
      %v2518 = vmax.f32 %v2384, 0.0
      %v2519 = vmax.f32 %v2386, 0.0
      %v2520 = vmax.f32 %v2388, 0.0
      %v2521 = vmax.f32 %v2390, 0.0
      %v2522 = vmax.f32 %v2394, 0.0
      %v2523 = vmax.f32 %v2396, 0.0
      %v2524 = vmax.f32 %v2398, 0.0
      %v2525 = vmax.f32 %v2400, 0.0
      %v2526 = vmax.f32 %v2404, 0.0
      %v2527 = vmax.f32 %v2406, 0.0
      %v2528 = vmax.f32 %v2408, 0.0
      %v2529 = vmax.f32 %v2410, 0.0
      %v2530 = vmax.f32 %v2414, 0.0
      %v2531 = vmax.f32 %v2416, 0.0
      %v2532 = vmax.f32 %v2418, 0.0
      %v2533 = vmax.f32 %v2420, 0.0
      %v2534 = vmax.f32 %v2424, 0.0
      %v2535 = vmax.f32 %v2426, 0.0
      %v2536 = vmax.f32 %v2428, 0.0
      %v2537 = vmax.f32 %v2430, 0.0
      %v2538 = vmax.f32 %v2434, 0.0
      %v2539 = vmax.f32 %v2436, 0.0
      %v2540 = vmax.f32 %v2438, 0.0
      %v2541 = vmax.f32 %v2440, 0.0
      %v2542 = vmax.f32 %v2444, 0.0
      %v2543 = vmax.f32 %v2446, 0.0
      %v2544 = vmax.f32 %v2448, 0.0
      %v2545 = vmax.f32 %v2450, 0.0
      %v2546 = vmax.f32 %v2454, 0.0
      %v2547 = vmax.f32 %v2456, 0.0
      %v2548 = vmax.f32 %v2458, 0.0
      %v2549 = vmax.f32 %v2460, 0.0
      %v2550 = vmax.f32 %v2464, 0.0
      %v2551 = vmax.f32 %v2466, 0.0
      %v2552 = vmax.f32 %v2468, 0.0
      %v2553 = vmax.f32 %v2470, 0.0
      %v2554 = vmax.f32 %v2474, 0.0
      %v2555 = vmax.f32 %v2476, 0.0
      %v2556 = vmax.f32 %v2478, 0.0
      %v2557 = vmax.f32 %v2480, 0.0
      %v2558 = vmax.f32 %v2484, 0.0
      %v2559 = vmax.f32 %v2486, 0.0
      %v2560 = vmax.f32 %v2488, 0.0
      %v2561 = vmax.f32 %v2490, 0.0
      %v2562 = vmax.f32 %v2494, 0.0
      %v2563 = vmax.f32 %v2496, 0.0
      %v2564 = vmax.f32 %v2498, 0.0
      %v2565 = vmax.f32 %v2500, 0.0
      %v2566 = vpack.c.bf16 %v2504, %v2502
      %v2567 = vpack.c.bf16 %v2505, %v2503
      %v2568 = vpack.c.bf16 %v2508, %v2506
      %v2569 = vpack.c.bf16 %v2509, %v2507
      %v2570 = vpack.c.bf16 %v2512, %v2510
      %v2571 = vpack.c.bf16 %v2513, %v2511
      %v2572 = vpack.c.bf16 %v2516, %v2514
      %v2573 = vpack.c.bf16 %v2517, %v2515
      %v2574 = vpack.c.bf16 %v2520, %v2518
      %v2575 = vpack.c.bf16 %v2521, %v2519
      %v2576 = vpack.c.bf16 %v2524, %v2522
      %v2577 = vpack.c.bf16 %v2525, %v2523
      %v2578 = vpack.c.bf16 %v2528, %v2526
      %v2579 = vpack.c.bf16 %v2529, %v2527
      %v2580 = vpack.c.bf16 %v2532, %v2530
      %v2581 = vpack.c.bf16 %v2533, %v2531
      %v2582 = vpack.c.bf16 %v2536, %v2534
      %v2583 = vpack.c.bf16 %v2537, %v2535
      %v2584 = vpack.c.bf16 %v2540, %v2538
      %v2585 = vpack.c.bf16 %v2541, %v2539
      %v2586 = vpack.c.bf16 %v2544, %v2542
      %v2587 = vpack.c.bf16 %v2545, %v2543
      %v2588 = vpack.c.bf16 %v2548, %v2546
      %v2589 = vpack.c.bf16 %v2549, %v2547
      %v2590 = vpack.c.bf16 %v2552, %v2550
      %v2591 = vpack.c.bf16 %v2553, %v2551
      %v2592 = vpack.c.bf16 %v2556, %v2554
      %v2593 = vpack.c.bf16 %v2557, %v2555
      %v2594 = vpack.c.bf16 %v2560, %v2558
      %v2595 = vpack.c.bf16 %v2561, %v2559
      %v2596 = vpack.c.bf16 %v2564, %v2562
      %v2597 = vpack.c.bf16 %v2565, %v2563
      %v2598 = vld [vmem:[%s3] sm:$0xf]
      %v2599 = vld [vmem:[%s3 + $0x4] sm:$0xf]
      %v2600 = vld [vmem:[%s3 + $0x8] sm:$0xf]
      %v2601 = vld [vmem:[%s3 + $0xc] sm:$0xf]
      %v2602 = vld [vmem:[%s3 + $0x10] sm:$0xf]
      %v2603 = vld [vmem:[%s3 + $0x14] sm:$0xf]
      %v2604 = vld [vmem:[%s3 + $0x18] sm:$0xf]
      %v2605 = vld [vmem:[%s3 + $0x1c] sm:$0xf]
      %v2606 = vld [vmem:[%s3 + $0x20] sm:$0xf]
      %v2607 = vld [vmem:[%s3 + $0x24] sm:$0xf]
      %v2608 = vld [vmem:[%s3 + $0x28] sm:$0xf]
      %v2609 = vld [vmem:[%s3 + $0x2c] sm:$0xf]
      %v2610 = vld [vmem:[%s3 + $0x30] sm:$0xf]
      %v2611 = vld [vmem:[%s3 + $0x34] sm:$0xf]
      %v2612 = vld [vmem:[%s3 + $0x38] sm:$0xf]
      %v2613 = vld [vmem:[%s3 + $0x3c] sm:$0xf]
      %v2614 = vld [vmem:[%s3 + $0x40] sm:$0xf]
      %v2615 = vld [vmem:[%s3 + $0x44] sm:$0xf]
      %v2616 = vld [vmem:[%s3 + $0x48] sm:$0xf]
      %v2617 = vld [vmem:[%s3 + $0x4c] sm:$0xf]
      %v2618 = vld [vmem:[%s3 + $0x50] sm:$0xf]
      %v2619 = vld [vmem:[%s3 + $0x54] sm:$0xf]
      %v2620 = vld [vmem:[%s3 + $0x58] sm:$0xf]
      %v2621 = vld [vmem:[%s3 + $0x5c] sm:$0xf]
      %v2622 = vld [vmem:[%s3 + $0x60] sm:$0xf]
      %v2623 = vld [vmem:[%s3 + $0x64] sm:$0xf]
      %v2624 = vld [vmem:[%s3 + $0x68] sm:$0xf]
      %v2625 = vld [vmem:[%s3 + $0x6c] sm:$0xf]
      %v2626 = vld [vmem:[%s3 + $0x70] sm:$0xf]
      %v2627 = vld [vmem:[%s3 + $0x74] sm:$0xf]
      %v2628 = vld [vmem:[%s3 + $0x78] sm:$0xf]
      %v2629 = vld [vmem:[%s3 + $0x7c] sm:$0xf]
      %v2630 = vld [vmem:[%s4] sm:$0x1]
      %v2632 = vlaneseq
      %v2633 = vshrl.u32 %v2632, 7
      %v2634 = vsub.s32 0, %v2633
      %v2635 = vrot.slane %v2630, %v2634
      %v2669 = vunpack.c.l.b16 %v2598
      %v2670 = vunpack.c.l.b16 %v2599
      %v2671 = vunpack.c.l.b16 %v2600
      %v2672 = vunpack.c.l.b16 %v2601
      %v2673 = vunpack.c.l.b16 %v2602
      %v2674 = vunpack.c.l.b16 %v2603
      %v2675 = vunpack.c.l.b16 %v2604
      %v2676 = vunpack.c.l.b16 %v2605
      %v2677 = vunpack.c.l.b16 %v2606
      %v2678 = vunpack.c.l.b16 %v2607
      %v2679 = vunpack.c.l.b16 %v2608
      %v2680 = vunpack.c.l.b16 %v2609
      %v2681 = vunpack.c.l.b16 %v2610
      %v2682 = vunpack.c.l.b16 %v2611
      %v2683 = vunpack.c.l.b16 %v2612
      %v2684 = vunpack.c.l.b16 %v2613
      %v2685 = vunpack.c.l.b16 %v2614
      %v2686 = vunpack.c.l.b16 %v2615
      %v2687 = vunpack.c.l.b16 %v2616
      %v2688 = vunpack.c.l.b16 %v2617
      %v2689 = vunpack.c.l.b16 %v2618
      %v2690 = vunpack.c.l.b16 %v2619
      %v2691 = vunpack.c.l.b16 %v2620
      %v2692 = vunpack.c.l.b16 %v2621
      %v2693 = vunpack.c.l.b16 %v2622
      %v2694 = vunpack.c.l.b16 %v2623
      %v2695 = vunpack.c.l.b16 %v2624
      %v2696 = vunpack.c.l.b16 %v2625
      %v2697 = vunpack.c.l.b16 %v2626
      %v2698 = vunpack.c.l.b16 %v2627
      %v2699 = vunpack.c.l.b16 %v2628
      %v2700 = vunpack.c.l.b16 %v2629
      %v2701 = vpack.c.b16 %v2670, %v2669
      %v2702 = vpack.c.b16 %v2672, %v2671
      %v2703 = vpack.c.b16 %v2674, %v2673
      %v2704 = vpack.c.b16 %v2676, %v2675
      %v2705 = vpack.c.b16 %v2678, %v2677
      %v2706 = vpack.c.b16 %v2680, %v2679
      %v2707 = vpack.c.b16 %v2682, %v2681
      %v2708 = vpack.c.b16 %v2684, %v2683
      %v2709 = vpack.c.b16 %v2686, %v2685
      %v2710 = vpack.c.b16 %v2688, %v2687
      %v2711 = vpack.c.b16 %v2690, %v2689
      %v2712 = vpack.c.b16 %v2692, %v2691
      %v2713 = vpack.c.b16 %v2694, %v2693
      %v2714 = vpack.c.b16 %v2696, %v2695
      %v2715 = vpack.c.b16 %v2698, %v2697
      %v2716 = vpack.c.b16 %v2700, %v2699
      %2733 = vmatprep.subr.bf16.mxu0 0
      %2734 = vmatpush1.bf16.msra.mxu0 %v2701
      %2735 = vmatprep.subr.bf16.mxu0 0
      %2736 = vmatpush1.bf16.msra.mxu0 %v2702
      %2737 = vmatprep.subr.bf16.mxu0 0
      %2738 = vmatpush1.bf16.msra.mxu0 %v2703
      %2739 = vmatprep.subr.bf16.mxu0 0
      %2740 = vmatpush1.bf16.msra.mxu0 %v2704
      %2741 = vmatprep.subr.bf16.mxu0 0
      %2742 = vmatpush1.bf16.msra.mxu0 %v2705
      %2743 = vmatprep.subr.bf16.mxu0 0
      %2744 = vmatpush1.bf16.msra.mxu0 %v2706
      %2745 = vmatprep.subr.bf16.mxu0 0
      %2746 = vmatpush1.bf16.msra.mxu0 %v2707
      %2747 = vmatprep.subr.bf16.mxu0 0
      %2748 = vmatpush1.bf16.msra.mxu0 %v2708
      %2749 = vmatprep.subr.bf16.mxu0 0
      %2750 = vmatpush1.bf16.msra.mxu0 %v2709
      %2751 = vmatprep.subr.bf16.mxu0 0
      %2752 = vmatpush1.bf16.msra.mxu0 %v2710
      %2753 = vmatprep.subr.bf16.mxu0 0
      %2754 = vmatpush1.bf16.msra.mxu0 %v2711
      %2755 = vmatprep.subr.bf16.mxu0 0
      %2756 = vmatpush1.bf16.msra.mxu0 %v2712
      %2757 = vmatprep.subr.bf16.mxu0 0
      %2758 = vmatpush1.bf16.msra.mxu0 %v2713
      %2759 = vmatprep.subr.bf16.mxu0 0
      %2760 = vmatpush1.bf16.msra.mxu0 %v2714
      %2761 = vmatprep.subr.bf16.mxu0 0
      %2762 = vmatpush1.bf16.msra.mxu0 %v2715
      %2763 = vmatprep.subr.bf16.mxu0 0
      %2764 = vmatpush1.bf16.msra.mxu0 %v2716
      %2765 = vmatprep.mubr.bf16.mxu0 %v2567
      %2766 = vmatmul.mubr.bf16.gmra.mrb[0].mxu0 %v2566
      %v2767 = vpop.f32.mrb[0].mxu0
      %v2768 = vadd.f32 %v2635, %v2767
      %v2769 = vpop.f32.mrb[0].mxu0
      %v2770 = vpop.f32.mrb[0].mxu0
      %v2771 = vadd.f32 %v2635, %v2770
      %v2772 = vpop.f32.mrb[0].mxu0
      %2773 = vmatprep.mubr.bf16.mxu0 %v2569
      %2774 = vmatmul.mubr.bf16.gmra.mrb[0].mxu0 %v2568
      %v2775 = vpop.f32.mrb[0].mxu0
      %v2776 = vadd.f32 %v2635, %v2775
      %v2777 = vpop.f32.mrb[0].mxu0
      %v2778 = vpop.f32.mrb[0].mxu0
      %v2779 = vadd.f32 %v2635, %v2778
      %v2780 = vpop.f32.mrb[0].mxu0
      %2781 = vmatprep.mubr.bf16.mxu0 %v2571
      %2782 = vmatmul.mubr.bf16.gmra.mrb[0].mxu0 %v2570
      %v2783 = vpop.f32.mrb[0].mxu0
      %v2784 = vadd.f32 %v2635, %v2783
      %v2785 = vpop.f32.mrb[0].mxu0
      %v2786 = vpop.f32.mrb[0].mxu0
      %v2787 = vadd.f32 %v2635, %v2786
      %v2788 = vpop.f32.mrb[0].mxu0
      %2789 = vmatprep.mubr.bf16.mxu0 %v2573
      %2790 = vmatmul.mubr.bf16.gmra.mrb[0].mxu0 %v2572
      %v2791 = vpop.f32.mrb[0].mxu0
      %v2792 = vadd.f32 %v2635, %v2791
      %v2793 = vpop.f32.mrb[0].mxu0
      %v2794 = vpop.f32.mrb[0].mxu0
      %v2795 = vadd.f32 %v2635, %v2794
      %v2796 = vpop.f32.mrb[0].mxu0
      %2797 = vmatprep.mubr.bf16.mxu0 %v2575
      %2798 = vmatmul.mubr.bf16.gmra.mrb[0].mxu0 %v2574
      %v2799 = vpop.f32.mrb[0].mxu0
      %v2800 = vadd.f32 %v2635, %v2799
      %v2801 = vpop.f32.mrb[0].mxu0
      %v2802 = vpop.f32.mrb[0].mxu0
      %v2803 = vadd.f32 %v2635, %v2802
      %v2804 = vpop.f32.mrb[0].mxu0
      %2805 = vmatprep.mubr.bf16.mxu0 %v2577
      %2806 = vmatmul.mubr.bf16.gmra.mrb[0].mxu0 %v2576
      %v2807 = vpop.f32.mrb[0].mxu0
      %v2808 = vadd.f32 %v2635, %v2807
      %v2809 = vpop.f32.mrb[0].mxu0
      %v2810 = vpop.f32.mrb[0].mxu0
      %v2811 = vadd.f32 %v2635, %v2810
      %v2812 = vpop.f32.mrb[0].mxu0
      %2813 = vmatprep.mubr.bf16.mxu0 %v2579
      %2814 = vmatmul.mubr.bf16.gmra.mrb[0].mxu0 %v2578
      %v2815 = vpop.f32.mrb[0].mxu0
      %v2816 = vadd.f32 %v2635, %v2815
      %v2817 = vpop.f32.mrb[0].mxu0
      %v2818 = vpop.f32.mrb[0].mxu0
      %v2819 = vadd.f32 %v2635, %v2818
      %v2820 = vpop.f32.mrb[0].mxu0
      %2821 = vmatprep.mubr.bf16.mxu0 %v2581
      %2822 = vmatmul.mubr.bf16.gmra.mrb[0].mxu0 %v2580
      %v2823 = vpop.f32.mrb[0].mxu0
      %v2824 = vadd.f32 %v2635, %v2823
      %v2825 = vpop.f32.mrb[0].mxu0
      %v2826 = vpop.f32.mrb[0].mxu0
      %v2827 = vadd.f32 %v2635, %v2826
      %v2828 = vpop.f32.mrb[0].mxu0
      %2829 = vmatprep.mubr.bf16.mxu0 %v2583
      %2830 = vmatmul.mubr.bf16.gmra.mrb[0].mxu0 %v2582
      %v2831 = vpop.f32.mrb[0].mxu0
      %v2832 = vadd.f32 %v2635, %v2831
      %v2833 = vpop.f32.mrb[0].mxu0
      %v2834 = vpop.f32.mrb[0].mxu0
      %v2835 = vadd.f32 %v2635, %v2834
      %v2836 = vpop.f32.mrb[0].mxu0
      %2837 = vmatprep.mubr.bf16.mxu0 %v2585
      %2838 = vmatmul.mubr.bf16.gmra.mrb[0].mxu0 %v2584
      %v2839 = vpop.f32.mrb[0].mxu0
      %v2840 = vadd.f32 %v2635, %v2839
      %v2841 = vpop.f32.mrb[0].mxu0
      %v2842 = vpop.f32.mrb[0].mxu0
      %v2843 = vadd.f32 %v2635, %v2842
      %v2844 = vpop.f32.mrb[0].mxu0
      %2845 = vmatprep.mubr.bf16.mxu0 %v2587
      %2846 = vmatmul.mubr.bf16.gmra.mrb[0].mxu0 %v2586
      %v2847 = vpop.f32.mrb[0].mxu0
      %v2848 = vadd.f32 %v2635, %v2847
      %v2849 = vpop.f32.mrb[0].mxu0
      %v2850 = vpop.f32.mrb[0].mxu0
      %v2851 = vadd.f32 %v2635, %v2850
      %v2852 = vpop.f32.mrb[0].mxu0
      %2853 = vmatprep.mubr.bf16.mxu0 %v2589
      %2854 = vmatmul.mubr.bf16.gmra.mrb[0].mxu0 %v2588
      %v2855 = vpop.f32.mrb[0].mxu0
      %v2856 = vadd.f32 %v2635, %v2855
      %v2857 = vpop.f32.mrb[0].mxu0
      %v2858 = vpop.f32.mrb[0].mxu0
      %v2859 = vadd.f32 %v2635, %v2858
      %v2860 = vpop.f32.mrb[0].mxu0
      %2861 = vmatprep.mubr.bf16.mxu0 %v2591
      %2862 = vmatmul.mubr.bf16.gmra.mrb[0].mxu0 %v2590
      %v2863 = vpop.f32.mrb[0].mxu0
      %v2864 = vadd.f32 %v2635, %v2863
      %v2865 = vpop.f32.mrb[0].mxu0
      %v2866 = vpop.f32.mrb[0].mxu0
      %v2867 = vadd.f32 %v2635, %v2866
      %v2868 = vpop.f32.mrb[0].mxu0
      %2869 = vmatprep.mubr.bf16.mxu0 %v2593
      %2870 = vmatmul.mubr.bf16.gmra.mrb[0].mxu0 %v2592
      %v2871 = vpop.f32.mrb[0].mxu0
      %v2872 = vadd.f32 %v2635, %v2871
      %v2873 = vpop.f32.mrb[0].mxu0
      %v2874 = vpop.f32.mrb[0].mxu0
      %v2875 = vadd.f32 %v2635, %v2874
      %v2876 = vpop.f32.mrb[0].mxu0
      %2877 = vmatprep.mubr.bf16.mxu0 %v2595
      %2878 = vmatmul.mubr.bf16.gmra.mrb[0].mxu0 %v2594
      %v2879 = vpop.f32.mrb[0].mxu0
      %v2880 = vadd.f32 %v2635, %v2879
      %v2881 = vpop.f32.mrb[0].mxu0
      %v2882 = vpop.f32.mrb[0].mxu0
      %v2883 = vadd.f32 %v2635, %v2882
      %v2884 = vpop.f32.mrb[0].mxu0
      %2885 = vmatprep.mubr.bf16.mxu0 %v2597
      %2886 = vmatmul.mubr.bf16.gmra.mrb[0].mxu0 %v2596
      %v2887 = vpop.f32.mrb[0].mxu0
      %v2888 = vadd.f32 %v2635, %v2887
      %v2889 = vpop.f32.mrb[0].mxu0
      %v2890 = vpop.f32.mrb[0].mxu0
      %v2891 = vadd.f32 %v2635, %v2890
      %v2892 = vpop.f32.mrb[0].mxu0
      %2893 = vdwg.mxu0
      %v2894 = vmax.f32 %v2768, 0.0
      %v2895 = vmax.f32 %v2771, 0.0
      %v2896 = vmax.f32 %v2776, 0.0
      %v2897 = vmax.f32 %v2779, 0.0
      %v2898 = vmax.f32 %v2784, 0.0
      %v2899 = vmax.f32 %v2787, 0.0
      %v2900 = vmax.f32 %v2792, 0.0
      %v2901 = vmax.f32 %v2795, 0.0
      %v2902 = vmax.f32 %v2800, 0.0
      %v2903 = vmax.f32 %v2803, 0.0
      %v2904 = vmax.f32 %v2808, 0.0
      %v2905 = vmax.f32 %v2811, 0.0
      %v2906 = vmax.f32 %v2816, 0.0
      %v2907 = vmax.f32 %v2819, 0.0
      %v2908 = vmax.f32 %v2824, 0.0
      %v2909 = vmax.f32 %v2827, 0.0
      %v2910 = vmax.f32 %v2832, 0.0
      %v2911 = vmax.f32 %v2835, 0.0
      %v2912 = vmax.f32 %v2840, 0.0
      %v2913 = vmax.f32 %v2843, 0.0
      %v2914 = vmax.f32 %v2848, 0.0
      %v2915 = vmax.f32 %v2851, 0.0
      %v2916 = vmax.f32 %v2856, 0.0
      %v2917 = vmax.f32 %v2859, 0.0
      %v2918 = vmax.f32 %v2864, 0.0
      %v2919 = vmax.f32 %v2867, 0.0
      %v2920 = vmax.f32 %v2872, 0.0
      %v2921 = vmax.f32 %v2875, 0.0
      %v2922 = vmax.f32 %v2880, 0.0
      %v2923 = vmax.f32 %v2883, 0.0
      %v2924 = vmax.f32 %v2888, 0.0
      %v2925 = vmax.f32 %v2891, 0.0
      %v2926 = vpack.c.bf16 %v2895, %v2894
      %v2927 = vpack.c.bf16 %v2897, %v2896
      %v2928 = vpack.c.bf16 %v2899, %v2898
      %v2929 = vpack.c.bf16 %v2901, %v2900
      %v2930 = vpack.c.bf16 %v2903, %v2902
      %v2931 = vpack.c.bf16 %v2905, %v2904
      %v2932 = vpack.c.bf16 %v2907, %v2906
      %v2933 = vpack.c.bf16 %v2909, %v2908
      %v2934 = vpack.c.bf16 %v2911, %v2910
      %v2935 = vpack.c.bf16 %v2913, %v2912
      %v2936 = vpack.c.bf16 %v2915, %v2914
      %v2937 = vpack.c.bf16 %v2917, %v2916
      %v2938 = vpack.c.bf16 %v2919, %v2918
      %v2939 = vpack.c.bf16 %v2921, %v2920
      %v2940 = vpack.c.bf16 %v2923, %v2922
      %v2941 = vpack.c.bf16 %v2925, %v2924
      %v2942 = vld [vmem:[%s5] sm:$0xff]
      %v2943 = vld [vmem:[%s5 + $0x8] sm:$0xff]
      %v2944 = vld [vmem:[%s5 + $0x10] sm:$0xff]
      %v2945 = vld [vmem:[%s5 + $0x18] sm:$0xff]
      %v2946 = vld [vmem:[%s5 + $0x20] sm:$0xff]
      %v2947 = vld [vmem:[%s5 + $0x28] sm:$0xff]
      %v2948 = vld [vmem:[%s5 + $0x30] sm:$0xff]
      %v2949 = vld [vmem:[%s5 + $0x38] sm:$0xff]
      %v2950 = vld [vmem:[%s5 + $0x40] sm:$0xff]
      %v2951 = vld [vmem:[%s5 + $0x48] sm:$0xff]
      %v2952 = vld [vmem:[%s5 + $0x50] sm:$0xff]
      %v2953 = vld [vmem:[%s5 + $0x58] sm:$0xff]
      %v2954 = vld [vmem:[%s5 + $0x60] sm:$0xff]
      %v2955 = vld [vmem:[%s5 + $0x68] sm:$0xff]
      %v2956 = vld [vmem:[%s5 + $0x70] sm:$0xff]
      %v2957 = vld [vmem:[%s5 + $0x78] sm:$0xff]
      %v2958 = vld [vmem:[%s6] sm:$0x3]
      %v2960 = vlaneseq
      %v2961 = vshrl.u32 %v2960, 7
      %v2962 = vsub.s32 0, %v2961
      %v2963 = vrot.slane %v2958, %v2962
      %v2964 = vlaneseq
      %v2965 = vshrl.u32 %v2964, 7
      %v2966 = vsub.s32 1, %v2965
      %v2967 = vrot.slane %v2958, %v2966
      %v2986 = vunpack.c.l.b16 %v2942
      %v2987 = vunpack.c.h.b16 %v2942
      %v2988 = vunpack.c.l.b16 %v2943
      %v2989 = vunpack.c.h.b16 %v2943
      %v2990 = vunpack.c.l.b16 %v2944
      %v2991 = vunpack.c.h.b16 %v2944
      %v2992 = vunpack.c.l.b16 %v2945
      %v2993 = vunpack.c.h.b16 %v2945
      %v2994 = vunpack.c.l.b16 %v2946
      %v2995 = vunpack.c.h.b16 %v2946
      %v2996 = vunpack.c.l.b16 %v2947
      %v2997 = vunpack.c.h.b16 %v2947
      %v2998 = vunpack.c.l.b16 %v2948
      %v2999 = vunpack.c.h.b16 %v2948
      %v3000 = vunpack.c.l.b16 %v2949
      %v3001 = vunpack.c.h.b16 %v2949
      %v3002 = vunpack.c.l.b16 %v2950
      %v3003 = vunpack.c.h.b16 %v2950
      %v3004 = vunpack.c.l.b16 %v2951
      %v3005 = vunpack.c.h.b16 %v2951
      %v3006 = vunpack.c.l.b16 %v2952
      %v3007 = vunpack.c.h.b16 %v2952
      %v3008 = vunpack.c.l.b16 %v2953
      %v3009 = vunpack.c.h.b16 %v2953
      %v3010 = vunpack.c.l.b16 %v2954
      %v3011 = vunpack.c.h.b16 %v2954
      %v3012 = vunpack.c.l.b16 %v2955
      %v3013 = vunpack.c.h.b16 %v2955
      %v3014 = vunpack.c.l.b16 %v2956
      %v3015 = vunpack.c.h.b16 %v2956
      %v3016 = vunpack.c.l.b16 %v2957
      %v3017 = vunpack.c.h.b16 %v2957
      %v3018 = vpack.c.b16 %v2988, %v2986
      %v3019 = vpack.c.b16 %v2989, %v2987
      %v3020 = vpack.c.b16 %v2992, %v2990
      %v3021 = vpack.c.b16 %v2993, %v2991
      %v3022 = vpack.c.b16 %v2996, %v2994
      %v3023 = vpack.c.b16 %v2997, %v2995
      %v3024 = vpack.c.b16 %v3000, %v2998
      %v3025 = vpack.c.b16 %v3001, %v2999
      %v3026 = vpack.c.b16 %v3004, %v3002
      %v3027 = vpack.c.b16 %v3005, %v3003
      %v3028 = vpack.c.b16 %v3008, %v3006
      %v3029 = vpack.c.b16 %v3009, %v3007
      %v3030 = vpack.c.b16 %v3012, %v3010
      %v3031 = vpack.c.b16 %v3013, %v3011
      %v3032 = vpack.c.b16 %v3016, %v3014
      %v3033 = vpack.c.b16 %v3017, %v3015
      %3050 = vmatprep.subr.bf16.mxu0 %v3019
      %3051 = vmatpush1.bf16.msra.mxu0 %v3018
      %3052 = vmatprep.subr.bf16.mxu0 %v3021
      %3053 = vmatpush1.bf16.msra.mxu0 %v3020
      %3054 = vmatprep.subr.bf16.mxu0 %v3023
      %3055 = vmatpush1.bf16.msra.mxu0 %v3022
      %3056 = vmatprep.subr.bf16.mxu0 %v3025
      %3057 = vmatpush1.bf16.msra.mxu0 %v3024
      %3058 = vmatprep.subr.bf16.mxu0 %v3027
      %3059 = vmatpush1.bf16.msra.mxu0 %v3026
      %3060 = vmatprep.subr.bf16.mxu0 %v3029
      %3061 = vmatpush1.bf16.msra.mxu0 %v3028
      %3062 = vmatprep.subr.bf16.mxu0 %v3031
      %3063 = vmatpush1.bf16.msra.mxu0 %v3030
      %3064 = vmatprep.subr.bf16.mxu0 %v3033
      %3065 = vmatpush1.bf16.msra.mxu0 %v3032
      %3066 = vmatprep.subr.bf16.mxu0 0
      %3067 = vmatpush1.bf16.msra.mxu0 0
      %3068 = vmatprep.subr.bf16.mxu0 0
      %3069 = vmatpush1.bf16.msra.mxu0 0
      %3070 = vmatprep.subr.bf16.mxu0 0
      %3071 = vmatpush1.bf16.msra.mxu0 0
      %3072 = vmatprep.subr.bf16.mxu0 0
      %3073 = vmatpush1.bf16.msra.mxu0 0
      %3074 = vmatprep.subr.bf16.mxu0 0
      %3075 = vmatpush1.bf16.msra.mxu0 0
      %3076 = vmatprep.subr.bf16.mxu0 0
      %3077 = vmatpush1.bf16.msra.mxu0 0
      %3078 = vmatprep.subr.bf16.mxu0 0
      %3079 = vmatpush1.bf16.msra.mxu0 0
      %3080 = vmatprep.subr.bf16.mxu0 0
      %3081 = vmatpush1.bf16.msra.mxu0 0
      %3082 = vmatprep.mubr.bf16.mxu0 0
      %3083 = vmatmul.mubr.bf16.gmra.mrb[0].mxu0 %v2926
      %v3084 = vpop.f32.mrb[0].mxu0
      %v3085 = vadd.f32 %v2963, %v3084
      %v3086 = vpop.f32.mrb[0].mxu0
      %v3087 = vadd.f32 %v2967, %v3086
      %v3088 = vpop.f32.mrb[0].mxu0
      %v3089 = vadd.f32 %v2963, %v3088
      %v3090 = vpop.f32.mrb[0].mxu0
      %v3091 = vadd.f32 %v2967, %v3090
      %3092 = vmatprep.mubr.bf16.mxu0 0
      %3093 = vmatmul.mubr.bf16.gmra.mrb[0].mxu0 %v2927
      %v3094 = vpop.f32.mrb[0].mxu0
      %v3095 = vadd.f32 %v2963, %v3094
      %v3096 = vpop.f32.mrb[0].mxu0
      %v3097 = vadd.f32 %v2967, %v3096
      %v3098 = vpop.f32.mrb[0].mxu0
      %v3099 = vadd.f32 %v2963, %v3098
      %v3100 = vpop.f32.mrb[0].mxu0
      %v3101 = vadd.f32 %v2967, %v3100
      %3102 = vmatprep.mubr.bf16.mxu0 0
      %3103 = vmatmul.mubr.bf16.gmra.mrb[0].mxu0 %v2928
      %v3104 = vpop.f32.mrb[0].mxu0
      %v3105 = vadd.f32 %v2963, %v3104
      %v3106 = vpop.f32.mrb[0].mxu0
      %v3107 = vadd.f32 %v2967, %v3106
      %v3108 = vpop.f32.mrb[0].mxu0
      %v3109 = vadd.f32 %v2963, %v3108
      %v3110 = vpop.f32.mrb[0].mxu0
      %v3111 = vadd.f32 %v2967, %v3110
      %3112 = vmatprep.mubr.bf16.mxu0 0
      %3113 = vmatmul.mubr.bf16.gmra.mrb[0].mxu0 %v2929
      %v3114 = vpop.f32.mrb[0].mxu0
      %v3115 = vadd.f32 %v2963, %v3114
      %v3116 = vpop.f32.mrb[0].mxu0
      %v3117 = vadd.f32 %v2967, %v3116
      %v3118 = vpop.f32.mrb[0].mxu0
      %v3119 = vadd.f32 %v2963, %v3118
      %v3120 = vpop.f32.mrb[0].mxu0
      %v3121 = vadd.f32 %v2967, %v3120
      %3122 = vmatprep.mubr.bf16.mxu0 0
      %3123 = vmatmul.mubr.bf16.gmra.mrb[0].mxu0 %v2930
      %v3124 = vpop.f32.mrb[0].mxu0
      %v3125 = vadd.f32 %v2963, %v3124
      %v3126 = vpop.f32.mrb[0].mxu0
      %v3127 = vadd.f32 %v2967, %v3126
      %v3128 = vpop.f32.mrb[0].mxu0
      %v3129 = vadd.f32 %v2963, %v3128
      %v3130 = vpop.f32.mrb[0].mxu0
      %v3131 = vadd.f32 %v2967, %v3130
      %3132 = vmatprep.mubr.bf16.mxu0 0
      %3133 = vmatmul.mubr.bf16.gmra.mrb[0].mxu0 %v2931
      %v3134 = vpop.f32.mrb[0].mxu0
      %v3135 = vadd.f32 %v2963, %v3134
      %v3136 = vpop.f32.mrb[0].mxu0
      %v3137 = vadd.f32 %v2967, %v3136
      %v3138 = vpop.f32.mrb[0].mxu0
      %v3139 = vadd.f32 %v2963, %v3138
      %v3140 = vpop.f32.mrb[0].mxu0
      %v3141 = vadd.f32 %v2967, %v3140
      %3142 = vmatprep.mubr.bf16.mxu0 0
      %3143 = vmatmul.mubr.bf16.gmra.mrb[0].mxu0 %v2932
      %v3144 = vpop.f32.mrb[0].mxu0
      %v3145 = vadd.f32 %v2963, %v3144
      %v3146 = vpop.f32.mrb[0].mxu0
      %v3147 = vadd.f32 %v2967, %v3146
      %v3148 = vpop.f32.mrb[0].mxu0
      %v3149 = vadd.f32 %v2963, %v3148
      %v3150 = vpop.f32.mrb[0].mxu0
      %v3151 = vadd.f32 %v2967, %v3150
      %3152 = vmatprep.mubr.bf16.mxu0 0
      %3153 = vmatmul.mubr.bf16.gmra.mrb[0].mxu0 %v2933
      %v3154 = vpop.f32.mrb[0].mxu0
      %v3155 = vadd.f32 %v2963, %v3154
      %v3156 = vpop.f32.mrb[0].mxu0
      %v3157 = vadd.f32 %v2967, %v3156
      %v3158 = vpop.f32.mrb[0].mxu0
      %v3159 = vadd.f32 %v2963, %v3158
      %v3160 = vpop.f32.mrb[0].mxu0
      %v3161 = vadd.f32 %v2967, %v3160
      %3162 = vmatprep.mubr.bf16.mxu0 0
      %3163 = vmatmul.mubr.bf16.gmra.mrb[0].mxu0 %v2934
      %v3164 = vpop.f32.mrb[0].mxu0
      %v3165 = vadd.f32 %v2963, %v3164
      %v3166 = vpop.f32.mrb[0].mxu0
      %v3167 = vadd.f32 %v2967, %v3166
      %v3168 = vpop.f32.mrb[0].mxu0
      %v3169 = vadd.f32 %v2963, %v3168
      %v3170 = vpop.f32.mrb[0].mxu0
      %v3171 = vadd.f32 %v2967, %v3170
      %3172 = vmatprep.mubr.bf16.mxu0 0
      %3173 = vmatmul.mubr.bf16.gmra.mrb[0].mxu0 %v2935
      %v3174 = vpop.f32.mrb[0].mxu0
      %v3175 = vadd.f32 %v2963, %v3174
      %v3176 = vpop.f32.mrb[0].mxu0
      %v3177 = vadd.f32 %v2967, %v3176
      %v3178 = vpop.f32.mrb[0].mxu0
      %v3179 = vadd.f32 %v2963, %v3178
      %v3180 = vpop.f32.mrb[0].mxu0
      %v3181 = vadd.f32 %v2967, %v3180
      %3182 = vmatprep.mubr.bf16.mxu0 0
      %3183 = vmatmul.mubr.bf16.gmra.mrb[0].mxu0 %v2936
      %v3184 = vpop.f32.mrb[0].mxu0
      %v3185 = vadd.f32 %v2963, %v3184
      %v3186 = vpop.f32.mrb[0].mxu0
      %v3187 = vadd.f32 %v2967, %v3186
      %v3188 = vpop.f32.mrb[0].mxu0
      %v3189 = vadd.f32 %v2963, %v3188
      %v3190 = vpop.f32.mrb[0].mxu0
      %v3191 = vadd.f32 %v2967, %v3190
      %3192 = vmatprep.mubr.bf16.mxu0 0
      %3193 = vmatmul.mubr.bf16.gmra.mrb[0].mxu0 %v2937
      %v3194 = vpop.f32.mrb[0].mxu0
      %v3195 = vadd.f32 %v2963, %v3194
      %v3196 = vpop.f32.mrb[0].mxu0
      %v3197 = vadd.f32 %v2967, %v3196
      %v3198 = vpop.f32.mrb[0].mxu0
      %v3199 = vadd.f32 %v2963, %v3198
      %v3200 = vpop.f32.mrb[0].mxu0
      %v3201 = vadd.f32 %v2967, %v3200
      %3202 = vmatprep.mubr.bf16.mxu0 0
      %3203 = vmatmul.mubr.bf16.gmra.mrb[0].mxu0 %v2938
      %v3204 = vpop.f32.mrb[0].mxu0
      %v3205 = vadd.f32 %v2963, %v3204
      %v3206 = vpop.f32.mrb[0].mxu0
      %v3207 = vadd.f32 %v2967, %v3206
      %v3208 = vpop.f32.mrb[0].mxu0
      %v3209 = vadd.f32 %v2963, %v3208
      %v3210 = vpop.f32.mrb[0].mxu0
      %v3211 = vadd.f32 %v2967, %v3210
      %3212 = vmatprep.mubr.bf16.mxu0 0
      %3213 = vmatmul.mubr.bf16.gmra.mrb[0].mxu0 %v2939
      %v3214 = vpop.f32.mrb[0].mxu0
      %v3215 = vadd.f32 %v2963, %v3214
      %v3216 = vpop.f32.mrb[0].mxu0
      %v3217 = vadd.f32 %v2967, %v3216
      %v3218 = vpop.f32.mrb[0].mxu0
      %v3219 = vadd.f32 %v2963, %v3218
      %v3220 = vpop.f32.mrb[0].mxu0
      %v3221 = vadd.f32 %v2967, %v3220
      %3222 = vmatprep.mubr.bf16.mxu0 0
      %3223 = vmatmul.mubr.bf16.gmra.mrb[0].mxu0 %v2940
      %v3224 = vpop.f32.mrb[0].mxu0
      %v3225 = vadd.f32 %v2963, %v3224
      %v3226 = vpop.f32.mrb[0].mxu0
      %v3227 = vadd.f32 %v2967, %v3226
      %v3228 = vpop.f32.mrb[0].mxu0
      %v3229 = vadd.f32 %v2963, %v3228
      %v3230 = vpop.f32.mrb[0].mxu0
      %v3231 = vadd.f32 %v2967, %v3230
      %3232 = vmatprep.mubr.bf16.mxu0 0
      %3233 = vmatmul.mubr.bf16.gmra.mrb[0].mxu0 %v2941
      %v3234 = vpop.f32.mrb[0].mxu0
      %v3235 = vadd.f32 %v2963, %v3234
      %v3236 = vpop.f32.mrb[0].mxu0
      %v3237 = vadd.f32 %v2967, %v3236
      %v3238 = vpop.f32.mrb[0].mxu0
      %v3239 = vadd.f32 %v2963, %v3238
      %v3240 = vpop.f32.mrb[0].mxu0
      %v3241 = vadd.f32 %v2967, %v3240
      %3242 = vdwg.mxu0
      %v3243 = vmax.f32 %v3085, 0.0
      %v3244 = vmax.f32 %v3087, 0.0
      %v3245 = vmax.f32 %v3089, 0.0
      %v3246 = vmax.f32 %v3091, 0.0
      %v3247 = vmax.f32 %v3095, 0.0
      %v3248 = vmax.f32 %v3097, 0.0
      %v3249 = vmax.f32 %v3099, 0.0
      %v3250 = vmax.f32 %v3101, 0.0
      %v3251 = vmax.f32 %v3105, 0.0
      %v3252 = vmax.f32 %v3107, 0.0
      %v3253 = vmax.f32 %v3109, 0.0
      %v3254 = vmax.f32 %v3111, 0.0
      %v3255 = vmax.f32 %v3115, 0.0
      %v3256 = vmax.f32 %v3117, 0.0
      %v3257 = vmax.f32 %v3119, 0.0
      %v3258 = vmax.f32 %v3121, 0.0
      %v3259 = vmax.f32 %v3125, 0.0
      %v3260 = vmax.f32 %v3127, 0.0
      %v3261 = vmax.f32 %v3129, 0.0
      %v3262 = vmax.f32 %v3131, 0.0
      %v3263 = vmax.f32 %v3135, 0.0
      %v3264 = vmax.f32 %v3137, 0.0
      %v3265 = vmax.f32 %v3139, 0.0
      %v3266 = vmax.f32 %v3141, 0.0
      %v3267 = vmax.f32 %v3145, 0.0
      %v3268 = vmax.f32 %v3147, 0.0
      %v3269 = vmax.f32 %v3149, 0.0
      %v3270 = vmax.f32 %v3151, 0.0
      %v3271 = vmax.f32 %v3155, 0.0
      %v3272 = vmax.f32 %v3157, 0.0
      %v3273 = vmax.f32 %v3159, 0.0
      %v3274 = vmax.f32 %v3161, 0.0
      %v3275 = vmax.f32 %v3165, 0.0
      %v3276 = vmax.f32 %v3167, 0.0
      %v3277 = vmax.f32 %v3169, 0.0
      %v3278 = vmax.f32 %v3171, 0.0
      %v3279 = vmax.f32 %v3175, 0.0
      %v3280 = vmax.f32 %v3177, 0.0
      %v3281 = vmax.f32 %v3179, 0.0
      %v3282 = vmax.f32 %v3181, 0.0
      %v3283 = vmax.f32 %v3185, 0.0
      %v3284 = vmax.f32 %v3187, 0.0
      %v3285 = vmax.f32 %v3189, 0.0
      %v3286 = vmax.f32 %v3191, 0.0
      %v3287 = vmax.f32 %v3195, 0.0
      %v3288 = vmax.f32 %v3197, 0.0
      %v3289 = vmax.f32 %v3199, 0.0
      %v3290 = vmax.f32 %v3201, 0.0
      %v3291 = vmax.f32 %v3205, 0.0
      %v3292 = vmax.f32 %v3207, 0.0
      %v3293 = vmax.f32 %v3209, 0.0
      %v3294 = vmax.f32 %v3211, 0.0
      %v3295 = vmax.f32 %v3215, 0.0
      %v3296 = vmax.f32 %v3217, 0.0
      %v3297 = vmax.f32 %v3219, 0.0
      %v3298 = vmax.f32 %v3221, 0.0
      %v3299 = vmax.f32 %v3225, 0.0
      %v3300 = vmax.f32 %v3227, 0.0
      %v3301 = vmax.f32 %v3229, 0.0
      %v3302 = vmax.f32 %v3231, 0.0
      %v3303 = vmax.f32 %v3235, 0.0
      %v3304 = vmax.f32 %v3237, 0.0
      %v3305 = vmax.f32 %v3239, 0.0
      %v3306 = vmax.f32 %v3241, 0.0
      %v3307 = vpack.c.bf16 %v3245, %v3243
      %v3308 = vpack.c.bf16 %v3246, %v3244
      %v3309 = vpack.c.bf16 %v3249, %v3247
      %v3310 = vpack.c.bf16 %v3250, %v3248
      %v3311 = vpack.c.bf16 %v3253, %v3251
      %v3312 = vpack.c.bf16 %v3254, %v3252
      %v3313 = vpack.c.bf16 %v3257, %v3255
      %v3314 = vpack.c.bf16 %v3258, %v3256
      %v3315 = vpack.c.bf16 %v3261, %v3259
      %v3316 = vpack.c.bf16 %v3262, %v3260
      %v3317 = vpack.c.bf16 %v3265, %v3263
      %v3318 = vpack.c.bf16 %v3266, %v3264
      %v3319 = vpack.c.bf16 %v3269, %v3267
      %v3320 = vpack.c.bf16 %v3270, %v3268
      %v3321 = vpack.c.bf16 %v3273, %v3271
      %v3322 = vpack.c.bf16 %v3274, %v3272
      %v3323 = vpack.c.bf16 %v3277, %v3275
      %v3324 = vpack.c.bf16 %v3278, %v3276
      %v3325 = vpack.c.bf16 %v3281, %v3279
      %v3326 = vpack.c.bf16 %v3282, %v3280
      %v3327 = vpack.c.bf16 %v3285, %v3283
      %v3328 = vpack.c.bf16 %v3286, %v3284
      %v3329 = vpack.c.bf16 %v3289, %v3287
      %v3330 = vpack.c.bf16 %v3290, %v3288
      %v3331 = vpack.c.bf16 %v3293, %v3291
      %v3332 = vpack.c.bf16 %v3294, %v3292
      %v3333 = vpack.c.bf16 %v3297, %v3295
      %v3334 = vpack.c.bf16 %v3298, %v3296
      %v3335 = vpack.c.bf16 %v3301, %v3299
      %v3336 = vpack.c.bf16 %v3302, %v3300
      %v3337 = vpack.c.bf16 %v3305, %v3303
      %v3338 = vpack.c.bf16 %v3306, %v3304
      %v3339 = vld [vmem:[%s7] sm:$0xff]
      %v3340 = vld [vmem:[%s7 + $0x8] sm:$0xff]
      %v3341 = vld [vmem:[%s7 + $0x10] sm:$0xff]
      %v3342 = vld [vmem:[%s7 + $0x18] sm:$0xf]
      %v3343 = vld [vmem:[%s7 + $0x1c] sm:$0xff]
      %v3344 = vld [vmem:[%s7 + $0x24] sm:$0xff]
      %v3345 = vld [vmem:[%s7 + $0x2c] sm:$0xff]
      %v3346 = vld [vmem:[%s7 + $0x34] sm:$0xf]
      %v3347 = vld [vmem:[%s7 + $0x38] sm:$0xff]
      %v3348 = vld [vmem:[%s7 + $0x40] sm:$0xff]
      %v3349 = vld [vmem:[%s7 + $0x48] sm:$0xff]
      %v3350 = vld [vmem:[%s7 + $0x50] sm:$0xf]
      %v3351 = vld [vmem:[%s7 + $0x54] sm:$0xff]
      %v3352 = vld [vmem:[%s7 + $0x5c] sm:$0xff]
      %v3353 = vld [vmem:[%s7 + $0x64] sm:$0xff]
      %v3354 = vld [vmem:[%s7 + $0x6c] sm:$0xf]
      %v3355 = vld [vmem:[%s7 + $0x70] sm:$0xff]
      %v3356 = vld [vmem:[%s7 + $0x78] sm:$0xff]
      %v3357 = vld [vmem:[%s7 + $0x80] sm:$0xff]
      %v3358 = vld [vmem:[%s7 + $0x88] sm:$0xf]
      %v3359 = vld [vmem:[%s7 + $0x8c] sm:$0xff]
      %v3360 = vld [vmem:[%s7 + $0x94] sm:$0xff]
      %v3361 = vld [vmem:[%s7 + $0x9c] sm:$0xff]
      %v3362 = vld [vmem:[%s7 + $0xa4] sm:$0xf]
      %v3363 = vld [vmem:[%s7 + $0xa8] sm:$0xff]
      %v3364 = vld [vmem:[%s7 + $0xb0] sm:$0xff]
      %v3365 = vld [vmem:[%s7 + $0xb8] sm:$0xff]
      %v3366 = vld [vmem:[%s7 + $0xc0] sm:$0xf]
      %v3367 = vld [vmem:[%s7 + $0xc4] sm:$0xff]
      %v3368 = vld [vmem:[%s7 + $0xcc] sm:$0xff]
      %v3369 = vld [vmem:[%s7 + $0xd4] sm:$0xff]
      %v3370 = vld [vmem:[%s7 + $0xdc] sm:$0xf]
      %v3371 = vld [vmem:[%s7 + $0xe0] sm:$0xff]
      %v3372 = vld [vmem:[%s7 + $0xe8] sm:$0xff]
      %v3373 = vld [vmem:[%s7 + $0xf0] sm:$0xff]
      %v3374 = vld [vmem:[%s7 + $0xf8] sm:$0xf]
      %v3375 = vld [vmem:[%s7 + $0xfc] sm:$0xff]
      %v3376 = vld [vmem:[%s7 + $0x104] sm:$0xff]
      %v3377 = vld [vmem:[%s7 + $0x10c] sm:$0xff]
      %v3378 = vld [vmem:[%s7 + $0x114] sm:$0xf]
      %v3379 = vld [vmem:[%s7 + $0x118] sm:$0xff]
      %v3380 = vld [vmem:[%s7 + $0x120] sm:$0xff]
      %v3381 = vld [vmem:[%s7 + $0x128] sm:$0xff]
      %v3382 = vld [vmem:[%s7 + $0x130] sm:$0xf]
      %v3383 = vld [vmem:[%s7 + $0x134] sm:$0xff]
      %v3384 = vld [vmem:[%s7 + $0x13c] sm:$0xff]
      %v3385 = vld [vmem:[%s7 + $0x144] sm:$0xff]
      %v3386 = vld [vmem:[%s7 + $0x14c] sm:$0xf]
      %v3387 = vld [vmem:[%s7 + $0x150] sm:$0xff]
      %v3388 = vld [vmem:[%s7 + $0x158] sm:$0xff]
      %v3389 = vld [vmem:[%s7 + $0x160] sm:$0xff]
      %v3390 = vld [vmem:[%s7 + $0x168] sm:$0xf]
      %v3391 = vld [vmem:[%s7 + $0x16c] sm:$0xff]
      %v3392 = vld [vmem:[%s7 + $0x174] sm:$0xff]
      %v3393 = vld [vmem:[%s7 + $0x17c] sm:$0xff]
      %v3394 = vld [vmem:[%s7 + $0x184] sm:$0xf]
      %v3395 = vld [vmem:[%s7 + $0x188] sm:$0xff]
      %v3396 = vld [vmem:[%s7 + $0x190] sm:$0xff]
      %v3397 = vld [vmem:[%s7 + $0x198] sm:$0xff]
      %v3398 = vld [vmem:[%s7 + $0x1a0] sm:$0xf]
      %v3399 = vld [vmem:[%s7 + $0x1a4] sm:$0xff]
      %v3400 = vld [vmem:[%s7 + $0x1ac] sm:$0xff]
      %v3401 = vld [vmem:[%s7 + $0x1b4] sm:$0xff]
      %v3402 = vld [vmem:[%s7 + $0x1bc] sm:$0xf]
      %v3403 = vld [vmem:[%s7 + $0x1c0] sm:$0xff]
      %v3404 = vld [vmem:[%s7 + $0x1c8] sm:$0xff]
      %v3405 = vld [vmem:[%s7 + $0x1d0] sm:$0xff]
      %v3406 = vld [vmem:[%s7 + $0x1d8] sm:$0xf]
      %v3407 = vld [vmem:[%s7 + $0x1dc] sm:$0xff]
      %v3408 = vld [vmem:[%s7 + $0x1e4] sm:$0xff]
      %v3409 = vld [vmem:[%s7 + $0x1ec] sm:$0xff]
      %v3410 = vld [vmem:[%s7 + $0x1f4] sm:$0xf]
      %v3411 = vld [vmem:[%s7 + $0x1f8] sm:$0xff]
      %v3412 = vld [vmem:[%s7 + $0x200] sm:$0xff]
      %v3413 = vld [vmem:[%s7 + $0x208] sm:$0xff]
      %v3414 = vld [vmem:[%s7 + $0x210] sm:$0xf]
      %v3415 = vld [vmem:[%s7 + $0x214] sm:$0xff]
      %v3416 = vld [vmem:[%s7 + $0x21c] sm:$0xff]
      %v3417 = vld [vmem:[%s7 + $0x224] sm:$0xff]
      %v3418 = vld [vmem:[%s7 + $0x22c] sm:$0xf]
      %v3419 = vld [vmem:[%s7 + $0x230] sm:$0xff]
      %v3420 = vld [vmem:[%s7 + $0x238] sm:$0xff]
      %v3421 = vld [vmem:[%s7 + $0x240] sm:$0xff]
      %v3422 = vld [vmem:[%s7 + $0x248] sm:$0xf]
      %v3423 = vld [vmem:[%s7 + $0x24c] sm:$0xff]
      %v3424 = vld [vmem:[%s7 + $0x254] sm:$0xff]
      %v3425 = vld [vmem:[%s7 + $0x25c] sm:$0xff]
      %v3426 = vld [vmem:[%s7 + $0x264] sm:$0xf]
      %v3427 = vld [vmem:[%s7 + $0x268] sm:$0xff]
      %v3428 = vld [vmem:[%s7 + $0x270] sm:$0xff]
      %v3429 = vld [vmem:[%s7 + $0x278] sm:$0xff]
      %v3430 = vld [vmem:[%s7 + $0x280] sm:$0xf]
      %v3431 = vld [vmem:[%s7 + $0x284] sm:$0xff]
      %v3432 = vld [vmem:[%s7 + $0x28c] sm:$0xff]
      %v3433 = vld [vmem:[%s7 + $0x294] sm:$0xff]
      %v3434 = vld [vmem:[%s7 + $0x29c] sm:$0xf]
      %v3435 = vld [vmem:[%s7 + $0x2a0] sm:$0xff]
      %v3436 = vld [vmem:[%s7 + $0x2a8] sm:$0xff]
      %v3437 = vld [vmem:[%s7 + $0x2b0] sm:$0xff]
      %v3438 = vld [vmem:[%s7 + $0x2b8] sm:$0xf]
      %v3439 = vld [vmem:[%s7 + $0x2bc] sm:$0xff]
      %v3440 = vld [vmem:[%s7 + $0x2c4] sm:$0xff]
      %v3441 = vld [vmem:[%s7 + $0x2cc] sm:$0xff]
      %v3442 = vld [vmem:[%s7 + $0x2d4] sm:$0xf]
      %v3443 = vld [vmem:[%s7 + $0x2d8] sm:$0xff]
      %v3444 = vld [vmem:[%s7 + $0x2e0] sm:$0xff]
      %v3445 = vld [vmem:[%s7 + $0x2e8] sm:$0xff]
      %v3446 = vld [vmem:[%s7 + $0x2f0] sm:$0xf]
      %v3447 = vld [vmem:[%s7 + $0x2f4] sm:$0xff]
      %v3448 = vld [vmem:[%s7 + $0x2fc] sm:$0xff]
      %v3449 = vld [vmem:[%s7 + $0x304] sm:$0xff]
      %v3450 = vld [vmem:[%s7 + $0x30c] sm:$0xf]
      %v3451 = vld [vmem:[%s7 + $0x310] sm:$0xff]
      %v3452 = vld [vmem:[%s7 + $0x318] sm:$0xff]
      %v3453 = vld [vmem:[%s7 + $0x320] sm:$0xff]
      %v3454 = vld [vmem:[%s7 + $0x328] sm:$0xf]
      %v3455 = vld [vmem:[%s7 + $0x32c] sm:$0xff]
      %v3456 = vld [vmem:[%s7 + $0x334] sm:$0xff]
      %v3457 = vld [vmem:[%s7 + $0x33c] sm:$0xff]
      %v3458 = vld [vmem:[%s7 + $0x344] sm:$0xf]
      %v3459 = vld [vmem:[%s7 + $0x348] sm:$0xff]
      %v3460 = vld [vmem:[%s7 + $0x350] sm:$0xff]
      %v3461 = vld [vmem:[%s7 + $0x358] sm:$0xff]
      %v3462 = vld [vmem:[%s7 + $0x360] sm:$0xf]
      %v3463 = vld [vmem:[%s7 + $0x364] sm:$0xff]
      %v3464 = vld [vmem:[%s7 + $0x36c] sm:$0xff]
      %v3465 = vld [vmem:[%s7 + $0x374] sm:$0xff]
      %v3466 = vld [vmem:[%s7 + $0x37c] sm:$0xf]
      %v3467 = vld [vmem:[%s8] sm:$0xff]
      %v3469 = vlaneseq
      %v3470 = vshrl.u32 %v3469, 7
      %v3471 = vsub.s32 0, %v3470
      %v3472 = vrot.slane %v3467, %v3471
      %v3473 = vlaneseq
      %v3474 = vshrl.u32 %v3473, 7
      %v3475 = vsub.s32 1, %v3474
      %v3476 = vrot.slane %v3467, %v3475
      %v3477 = vlaneseq
      %v3478 = vshrl.u32 %v3477, 7
      %v3479 = vsub.s32 2, %v3478
      %v3480 = vrot.slane %v3467, %v3479
      %v3481 = vlaneseq
      %v3482 = vshrl.u32 %v3481, 7
      %v3483 = vsub.s32 3, %v3482
      %v3484 = vrot.slane %v3467, %v3483
      %v3485 = vlaneseq
      %v3486 = vshrl.u32 %v3485, 7
      %v3487 = vsub.s32 4, %v3486
      %v3488 = vrot.slane %v3467, %v3487
      %v3489 = vlaneseq
      %v3490 = vshrl.u32 %v3489, 7
      %v3491 = vsub.s32 5, %v3490
      %v3492 = vrot.slane %v3467, %v3491
      %v3493 = vlaneseq
      %v3494 = vshrl.u32 %v3493, 7
      %v3495 = vsub.s32 6, %v3494
      %v3496 = vrot.slane %v3467, %v3495
      %v3632 = vunpack.c.l.b16 %v3339
      %v3633 = vunpack.c.h.b16 %v3339
      %v3634 = vunpack.c.l.b16 %v3340
      %v3635 = vunpack.c.h.b16 %v3340
      %v3636 = vunpack.c.l.b16 %v3341
      %v3637 = vunpack.c.h.b16 %v3341
      %v3638 = vunpack.c.l.b16 %v3342
      %v3639 = vunpack.c.l.b16 %v3343
      %v3640 = vunpack.c.h.b16 %v3343
      %v3641 = vunpack.c.l.b16 %v3344
      %v3642 = vunpack.c.h.b16 %v3344
      %v3643 = vunpack.c.l.b16 %v3345
      %v3644 = vunpack.c.h.b16 %v3345
      %v3645 = vunpack.c.l.b16 %v3346
      %v3646 = vunpack.c.l.b16 %v3347
      %v3647 = vunpack.c.h.b16 %v3347
      %v3648 = vunpack.c.l.b16 %v3348
      %v3649 = vunpack.c.h.b16 %v3348
      %v3650 = vunpack.c.l.b16 %v3349
      %v3651 = vunpack.c.h.b16 %v3349
      %v3652 = vunpack.c.l.b16 %v3350
      %v3653 = vunpack.c.l.b16 %v3351
      %v3654 = vunpack.c.h.b16 %v3351
      %v3655 = vunpack.c.l.b16 %v3352
      %v3656 = vunpack.c.h.b16 %v3352
      %v3657 = vunpack.c.l.b16 %v3353
      %v3658 = vunpack.c.h.b16 %v3353
      %v3659 = vunpack.c.l.b16 %v3354
      %v3660 = vunpack.c.l.b16 %v3355
      %v3661 = vunpack.c.h.b16 %v3355
      %v3662 = vunpack.c.l.b16 %v3356
      %v3663 = vunpack.c.h.b16 %v3356
      %v3664 = vunpack.c.l.b16 %v3357
      %v3665 = vunpack.c.h.b16 %v3357
      %v3666 = vunpack.c.l.b16 %v3358
      %v3667 = vunpack.c.l.b16 %v3359
      %v3668 = vunpack.c.h.b16 %v3359
      %v3669 = vunpack.c.l.b16 %v3360
      %v3670 = vunpack.c.h.b16 %v3360
      %v3671 = vunpack.c.l.b16 %v3361
      %v3672 = vunpack.c.h.b16 %v3361
      %v3673 = vunpack.c.l.b16 %v3362
      %v3674 = vunpack.c.l.b16 %v3363
      %v3675 = vunpack.c.h.b16 %v3363
      %v3676 = vunpack.c.l.b16 %v3364
      %v3677 = vunpack.c.h.b16 %v3364
      %v3678 = vunpack.c.l.b16 %v3365
      %v3679 = vunpack.c.h.b16 %v3365
      %v3680 = vunpack.c.l.b16 %v3366
      %v3681 = vunpack.c.l.b16 %v3367
      %v3682 = vunpack.c.h.b16 %v3367
      %v3683 = vunpack.c.l.b16 %v3368
      %v3684 = vunpack.c.h.b16 %v3368
      %v3685 = vunpack.c.l.b16 %v3369
      %v3686 = vunpack.c.h.b16 %v3369
      %v3687 = vunpack.c.l.b16 %v3370
      %v3688 = vunpack.c.l.b16 %v3371
      %v3689 = vunpack.c.h.b16 %v3371
      %v3690 = vunpack.c.l.b16 %v3372
      %v3691 = vunpack.c.h.b16 %v3372
      %v3692 = vunpack.c.l.b16 %v3373
      %v3693 = vunpack.c.h.b16 %v3373
      %v3694 = vunpack.c.l.b16 %v3374
      %v3695 = vunpack.c.l.b16 %v3375
      %v3696 = vunpack.c.h.b16 %v3375
      %v3697 = vunpack.c.l.b16 %v3376
      %v3698 = vunpack.c.h.b16 %v3376
      %v3699 = vunpack.c.l.b16 %v3377
      %v3700 = vunpack.c.h.b16 %v3377
      %v3701 = vunpack.c.l.b16 %v3378
      %v3702 = vunpack.c.l.b16 %v3379
      %v3703 = vunpack.c.h.b16 %v3379
      %v3704 = vunpack.c.l.b16 %v3380
      %v3705 = vunpack.c.h.b16 %v3380
      %v3706 = vunpack.c.l.b16 %v3381
      %v3707 = vunpack.c.h.b16 %v3381
      %v3708 = vunpack.c.l.b16 %v3382
      %v3709 = vunpack.c.l.b16 %v3383
      %v3710 = vunpack.c.h.b16 %v3383
      %v3711 = vunpack.c.l.b16 %v3384
      %v3712 = vunpack.c.h.b16 %v3384
      %v3713 = vunpack.c.l.b16 %v3385
      %v3714 = vunpack.c.h.b16 %v3385
      %v3715 = vunpack.c.l.b16 %v3386
      %v3716 = vunpack.c.l.b16 %v3387
      %v3717 = vunpack.c.h.b16 %v3387
      %v3718 = vunpack.c.l.b16 %v3388
      %v3719 = vunpack.c.h.b16 %v3388
      %v3720 = vunpack.c.l.b16 %v3389
      %v3721 = vunpack.c.h.b16 %v3389
      %v3722 = vunpack.c.l.b16 %v3390
      %v3723 = vunpack.c.l.b16 %v3391
      %v3724 = vunpack.c.h.b16 %v3391
      %v3725 = vunpack.c.l.b16 %v3392
      %v3726 = vunpack.c.h.b16 %v3392
      %v3727 = vunpack.c.l.b16 %v3393
      %v3728 = vunpack.c.h.b16 %v3393
      %v3729 = vunpack.c.l.b16 %v3394
      %v3730 = vunpack.c.l.b16 %v3395
      %v3731 = vunpack.c.h.b16 %v3395
      %v3732 = vunpack.c.l.b16 %v3396
      %v3733 = vunpack.c.h.b16 %v3396
      %v3734 = vunpack.c.l.b16 %v3397
      %v3735 = vunpack.c.h.b16 %v3397
      %v3736 = vunpack.c.l.b16 %v3398
      %v3737 = vunpack.c.l.b16 %v3399
      %v3738 = vunpack.c.h.b16 %v3399
      %v3739 = vunpack.c.l.b16 %v3400
      %v3740 = vunpack.c.h.b16 %v3400
      %v3741 = vunpack.c.l.b16 %v3401
      %v3742 = vunpack.c.h.b16 %v3401
      %v3743 = vunpack.c.l.b16 %v3402
      %v3744 = vunpack.c.l.b16 %v3403
      %v3745 = vunpack.c.h.b16 %v3403
      %v3746 = vunpack.c.l.b16 %v3404
      %v3747 = vunpack.c.h.b16 %v3404
      %v3748 = vunpack.c.l.b16 %v3405
      %v3749 = vunpack.c.h.b16 %v3405
      %v3750 = vunpack.c.l.b16 %v3406
      %v3751 = vunpack.c.l.b16 %v3407
      %v3752 = vunpack.c.h.b16 %v3407
      %v3753 = vunpack.c.l.b16 %v3408
      %v3754 = vunpack.c.h.b16 %v3408
      %v3755 = vunpack.c.l.b16 %v3409
      %v3756 = vunpack.c.h.b16 %v3409
      %v3757 = vunpack.c.l.b16 %v3410
      %v3758 = vunpack.c.l.b16 %v3411
      %v3759 = vunpack.c.h.b16 %v3411
      %v3760 = vunpack.c.l.b16 %v3412
      %v3761 = vunpack.c.h.b16 %v3412
      %v3762 = vunpack.c.l.b16 %v3413
      %v3763 = vunpack.c.h.b16 %v3413
      %v3764 = vunpack.c.l.b16 %v3414
      %v3765 = vunpack.c.l.b16 %v3415
      %v3766 = vunpack.c.h.b16 %v3415
      %v3767 = vunpack.c.l.b16 %v3416
      %v3768 = vunpack.c.h.b16 %v3416
      %v3769 = vunpack.c.l.b16 %v3417
      %v3770 = vunpack.c.h.b16 %v3417
      %v3771 = vunpack.c.l.b16 %v3418
      %v3772 = vunpack.c.l.b16 %v3419
      %v3773 = vunpack.c.h.b16 %v3419
      %v3774 = vunpack.c.l.b16 %v3420
      %v3775 = vunpack.c.h.b16 %v3420
      %v3776 = vunpack.c.l.b16 %v3421
      %v3777 = vunpack.c.h.b16 %v3421
      %v3778 = vunpack.c.l.b16 %v3422
      %v3779 = vunpack.c.l.b16 %v3423
      %v3780 = vunpack.c.h.b16 %v3423
      %v3781 = vunpack.c.l.b16 %v3424
      %v3782 = vunpack.c.h.b16 %v3424
      %v3783 = vunpack.c.l.b16 %v3425
      %v3784 = vunpack.c.h.b16 %v3425
      %v3785 = vunpack.c.l.b16 %v3426
      %v3786 = vunpack.c.l.b16 %v3427
      %v3787 = vunpack.c.h.b16 %v3427
      %v3788 = vunpack.c.l.b16 %v3428
      %v3789 = vunpack.c.h.b16 %v3428
      %v3790 = vunpack.c.l.b16 %v3429
      %v3791 = vunpack.c.h.b16 %v3429
      %v3792 = vunpack.c.l.b16 %v3430
      %v3793 = vunpack.c.l.b16 %v3431
      %v3794 = vunpack.c.h.b16 %v3431
      %v3795 = vunpack.c.l.b16 %v3432
      %v3796 = vunpack.c.h.b16 %v3432
      %v3797 = vunpack.c.l.b16 %v3433
      %v3798 = vunpack.c.h.b16 %v3433
      %v3799 = vunpack.c.l.b16 %v3434
      %v3800 = vunpack.c.l.b16 %v3435
      %v3801 = vunpack.c.h.b16 %v3435
      %v3802 = vunpack.c.l.b16 %v3436
      %v3803 = vunpack.c.h.b16 %v3436
      %v3804 = vunpack.c.l.b16 %v3437
      %v3805 = vunpack.c.h.b16 %v3437
      %v3806 = vunpack.c.l.b16 %v3438
      %v3807 = vunpack.c.l.b16 %v3439
      %v3808 = vunpack.c.h.b16 %v3439
      %v3809 = vunpack.c.l.b16 %v3440
      %v3810 = vunpack.c.h.b16 %v3440
      %v3811 = vunpack.c.l.b16 %v3441
      %v3812 = vunpack.c.h.b16 %v3441
      %v3813 = vunpack.c.l.b16 %v3442
      %v3814 = vunpack.c.l.b16 %v3443
      %v3815 = vunpack.c.h.b16 %v3443
      %v3816 = vunpack.c.l.b16 %v3444
      %v3817 = vunpack.c.h.b16 %v3444
      %v3818 = vunpack.c.l.b16 %v3445
      %v3819 = vunpack.c.h.b16 %v3445
      %v3820 = vunpack.c.l.b16 %v3446
      %v3821 = vunpack.c.l.b16 %v3447
      %v3822 = vunpack.c.h.b16 %v3447
      %v3823 = vunpack.c.l.b16 %v3448
      %v3824 = vunpack.c.h.b16 %v3448
      %v3825 = vunpack.c.l.b16 %v3449
      %v3826 = vunpack.c.h.b16 %v3449
      %v3827 = vunpack.c.l.b16 %v3450
      %v3828 = vunpack.c.l.b16 %v3451
      %v3829 = vunpack.c.h.b16 %v3451
      %v3830 = vunpack.c.l.b16 %v3452
      %v3831 = vunpack.c.h.b16 %v3452
      %v3832 = vunpack.c.l.b16 %v3453
      %v3833 = vunpack.c.h.b16 %v3453
      %v3834 = vunpack.c.l.b16 %v3454
      %v3835 = vunpack.c.l.b16 %v3455
      %v3836 = vunpack.c.h.b16 %v3455
      %v3837 = vunpack.c.l.b16 %v3456
      %v3838 = vunpack.c.h.b16 %v3456
      %v3839 = vunpack.c.l.b16 %v3457
      %v3840 = vunpack.c.h.b16 %v3457
      %v3841 = vunpack.c.l.b16 %v3458
      %v3842 = vunpack.c.l.b16 %v3459
      %v3843 = vunpack.c.h.b16 %v3459
      %v3844 = vunpack.c.l.b16 %v3460
      %v3845 = vunpack.c.h.b16 %v3460
      %v3846 = vunpack.c.l.b16 %v3461
      %v3847 = vunpack.c.h.b16 %v3461
      %v3848 = vunpack.c.l.b16 %v3462
      %v3849 = vunpack.c.l.b16 %v3463
      %v3850 = vunpack.c.h.b16 %v3463
      %v3851 = vunpack.c.l.b16 %v3464
      %v3852 = vunpack.c.h.b16 %v3464
      %v3853 = vunpack.c.l.b16 %v3465
      %v3854 = vunpack.c.h.b16 %v3465
      %v3855 = vunpack.c.l.b16 %v3466
      %v3856 = vpack.c.b16 %v3639, %v3632
      %v3857 = vpack.c.b16 %v3640, %v3633
      %v3858 = vpack.c.b16 %v3641, %v3634
      %v3859 = vpack.c.b16 %v3642, %v3635
      %v3860 = vpack.c.b16 %v3643, %v3636
      %v3861 = vpack.c.b16 %v3644, %v3637
      %v3862 = vpack.c.b16 %v3645, %v3638
      %v3863 = vpack.c.b16 %v3653, %v3646
      %v3864 = vpack.c.b16 %v3654, %v3647
      %v3865 = vpack.c.b16 %v3655, %v3648
      %v3866 = vpack.c.b16 %v3656, %v3649
      %v3867 = vpack.c.b16 %v3657, %v3650
      %v3868 = vpack.c.b16 %v3658, %v3651
      %v3869 = vpack.c.b16 %v3659, %v3652
      %v3870 = vpack.c.b16 %v3667, %v3660
      %v3871 = vpack.c.b16 %v3668, %v3661
      %v3872 = vpack.c.b16 %v3669, %v3662
      %v3873 = vpack.c.b16 %v3670, %v3663
      %v3874 = vpack.c.b16 %v3671, %v3664
      %v3875 = vpack.c.b16 %v3672, %v3665
      %v3876 = vpack.c.b16 %v3673, %v3666
      %v3877 = vpack.c.b16 %v3681, %v3674
      %v3878 = vpack.c.b16 %v3682, %v3675
      %v3879 = vpack.c.b16 %v3683, %v3676
      %v3880 = vpack.c.b16 %v3684, %v3677
      %v3881 = vpack.c.b16 %v3685, %v3678
      %v3882 = vpack.c.b16 %v3686, %v3679
      %v3883 = vpack.c.b16 %v3687, %v3680
      %v3884 = vpack.c.b16 %v3695, %v3688
      %v3885 = vpack.c.b16 %v3696, %v3689
      %v3886 = vpack.c.b16 %v3697, %v3690
      %v3887 = vpack.c.b16 %v3698, %v3691
      %v3888 = vpack.c.b16 %v3699, %v3692
      %v3889 = vpack.c.b16 %v3700, %v3693
      %v3890 = vpack.c.b16 %v3701, %v3694
      %v3891 = vpack.c.b16 %v3709, %v3702
      %v3892 = vpack.c.b16 %v3710, %v3703
      %v3893 = vpack.c.b16 %v3711, %v3704
      %v3894 = vpack.c.b16 %v3712, %v3705
      %v3895 = vpack.c.b16 %v3713, %v3706
      %v3896 = vpack.c.b16 %v3714, %v3707
      %v3897 = vpack.c.b16 %v3715, %v3708
      %v3898 = vpack.c.b16 %v3723, %v3716
      %v3899 = vpack.c.b16 %v3724, %v3717
      %v3900 = vpack.c.b16 %v3725, %v3718
      %v3901 = vpack.c.b16 %v3726, %v3719
      %v3902 = vpack.c.b16 %v3727, %v3720
      %v3903 = vpack.c.b16 %v3728, %v3721
      %v3904 = vpack.c.b16 %v3729, %v3722
      %v3905 = vpack.c.b16 %v3737, %v3730
      %v3906 = vpack.c.b16 %v3738, %v3731
      %v3907 = vpack.c.b16 %v3739, %v3732
      %v3908 = vpack.c.b16 %v3740, %v3733
      %v3909 = vpack.c.b16 %v3741, %v3734
      %v3910 = vpack.c.b16 %v3742, %v3735
      %v3911 = vpack.c.b16 %v3743, %v3736
      %v3912 = vpack.c.b16 %v3751, %v3744
      %v3913 = vpack.c.b16 %v3752, %v3745
      %v3914 = vpack.c.b16 %v3753, %v3746
      %v3915 = vpack.c.b16 %v3754, %v3747
      %v3916 = vpack.c.b16 %v3755, %v3748
      %v3917 = vpack.c.b16 %v3756, %v3749
      %v3918 = vpack.c.b16 %v3757, %v3750
      %v3919 = vpack.c.b16 %v3765, %v3758
      %v3920 = vpack.c.b16 %v3766, %v3759
      %v3921 = vpack.c.b16 %v3767, %v3760
      %v3922 = vpack.c.b16 %v3768, %v3761
      %v3923 = vpack.c.b16 %v3769, %v3762
      %v3924 = vpack.c.b16 %v3770, %v3763
      %v3925 = vpack.c.b16 %v3771, %v3764
      %v3926 = vpack.c.b16 %v3779, %v3772
      %v3927 = vpack.c.b16 %v3780, %v3773
      %v3928 = vpack.c.b16 %v3781, %v3774
      %v3929 = vpack.c.b16 %v3782, %v3775
      %v3930 = vpack.c.b16 %v3783, %v3776
      %v3931 = vpack.c.b16 %v3784, %v3777
      %v3932 = vpack.c.b16 %v3785, %v3778
      %v3933 = vpack.c.b16 %v3793, %v3786
      %v3934 = vpack.c.b16 %v3794, %v3787
      %v3935 = vpack.c.b16 %v3795, %v3788
      %v3936 = vpack.c.b16 %v3796, %v3789
      %v3937 = vpack.c.b16 %v3797, %v3790
      %v3938 = vpack.c.b16 %v3798, %v3791
      %v3939 = vpack.c.b16 %v3799, %v3792
      %v3940 = vpack.c.b16 %v3807, %v3800
      %v3941 = vpack.c.b16 %v3808, %v3801
      %v3942 = vpack.c.b16 %v3809, %v3802
      %v3943 = vpack.c.b16 %v3810, %v3803
      %v3944 = vpack.c.b16 %v3811, %v3804
      %v3945 = vpack.c.b16 %v3812, %v3805
      %v3946 = vpack.c.b16 %v3813, %v3806
      %v3947 = vpack.c.b16 %v3821, %v3814
      %v3948 = vpack.c.b16 %v3822, %v3815
      %v3949 = vpack.c.b16 %v3823, %v3816
      %v3950 = vpack.c.b16 %v3824, %v3817
      %v3951 = vpack.c.b16 %v3825, %v3818
      %v3952 = vpack.c.b16 %v3826, %v3819
      %v3953 = vpack.c.b16 %v3827, %v3820
      %v3954 = vpack.c.b16 %v3835, %v3828
      %v3955 = vpack.c.b16 %v3836, %v3829
      %v3956 = vpack.c.b16 %v3837, %v3830
      %v3957 = vpack.c.b16 %v3838, %v3831
      %v3958 = vpack.c.b16 %v3839, %v3832
      %v3959 = vpack.c.b16 %v3840, %v3833
      %v3960 = vpack.c.b16 %v3841, %v3834
      %v3961 = vpack.c.b16 %v3849, %v3842
      %v3962 = vpack.c.b16 %v3850, %v3843
      %v3963 = vpack.c.b16 %v3851, %v3844
      %v3964 = vpack.c.b16 %v3852, %v3845
      %v3965 = vpack.c.b16 %v3853, %v3846
      %v3966 = vpack.c.b16 %v3854, %v3847
      %v3967 = vpack.c.b16 %v3855, %v3848
      %4080 = vmatprep.subr.bf16.mxu0 %v3857
      %4081 = vmatpush1.bf16.msra.mxu0 %v3856
      %4082 = vmatprep.subr.bf16.mxu0 %v3864
      %4083 = vmatpush1.bf16.msra.mxu0 %v3863
      %4084 = vmatprep.subr.bf16.mxu0 %v3871
      %4085 = vmatpush1.bf16.msra.mxu0 %v3870
      %4086 = vmatprep.subr.bf16.mxu0 %v3878
      %4087 = vmatpush1.bf16.msra.mxu0 %v3877
      %4088 = vmatprep.subr.bf16.mxu0 %v3885
      %4089 = vmatpush1.bf16.msra.mxu0 %v3884
      %4090 = vmatprep.subr.bf16.mxu0 %v3892
      %4091 = vmatpush1.bf16.msra.mxu0 %v3891
      %4092 = vmatprep.subr.bf16.mxu0 %v3899
      %4093 = vmatpush1.bf16.msra.mxu0 %v3898
      %4094 = vmatprep.subr.bf16.mxu0 %v3906
      %4095 = vmatpush1.bf16.msra.mxu0 %v3905
      %4096 = vmatprep.subr.bf16.mxu0 %v3913
      %4097 = vmatpush1.bf16.msra.mxu0 %v3912
      %4098 = vmatprep.subr.bf16.mxu0 %v3920
      %4099 = vmatpush1.bf16.msra.mxu0 %v3919
      %4100 = vmatprep.subr.bf16.mxu0 %v3927
      %4101 = vmatpush1.bf16.msra.mxu0 %v3926
      %4102 = vmatprep.subr.bf16.mxu0 %v3934
      %4103 = vmatpush1.bf16.msra.mxu0 %v3933
      %4104 = vmatprep.subr.bf16.mxu0 %v3941
      %4105 = vmatpush1.bf16.msra.mxu0 %v3940
      %4106 = vmatprep.subr.bf16.mxu0 %v3948
      %4107 = vmatpush1.bf16.msra.mxu0 %v3947
      %4108 = vmatprep.subr.bf16.mxu0 %v3955
      %4109 = vmatpush1.bf16.msra.mxu0 %v3954
      %4110 = vmatprep.subr.bf16.mxu0 %v3962
      %4111 = vmatpush1.bf16.msra.mxu0 %v3961
      %4112 = vmatprep.mubr.bf16.mxu0 %v3308
      %4113 = vmatmul.mubr.bf16.gmra.mrb[0].mxu0 %v3307
      %v4114 = vpop.f32.mrb[0].mxu0
      %v4115 = vadd.f32 %v3472, %v4114
      %v4116 = vpop.f32.mrb[0].mxu0
      %v4117 = vadd.f32 %v3476, %v4116
      %v4118 = vpop.f32.mrb[0].mxu0
      %v4119 = vadd.f32 %v3472, %v4118
      %v4120 = vpop.f32.mrb[0].mxu0
      %v4121 = vadd.f32 %v3476, %v4120
      %4122 = vmatprep.mubr.bf16.mxu0 %v3310
      %4123 = vmatmul.mubr.bf16.gmra.mrb[0].mxu0 %v3309
      %v4124 = vpop.f32.mrb[0].mxu0
      %v4125 = vadd.f32 %v3472, %v4124
      %v4126 = vpop.f32.mrb[0].mxu0
      %v4127 = vadd.f32 %v3476, %v4126
      %v4128 = vpop.f32.mrb[0].mxu0
      %v4129 = vadd.f32 %v3472, %v4128
      %v4130 = vpop.f32.mrb[0].mxu0
      %v4131 = vadd.f32 %v3476, %v4130
      %4132 = vmatprep.mubr.bf16.mxu0 %v3312
      %4133 = vmatmul.mubr.bf16.gmra.mrb[0].mxu0 %v3311
      %v4134 = vpop.f32.mrb[0].mxu0
      %v4135 = vadd.f32 %v3472, %v4134
      %v4136 = vpop.f32.mrb[0].mxu0
      %v4137 = vadd.f32 %v3476, %v4136
      %v4138 = vpop.f32.mrb[0].mxu0
      %v4139 = vadd.f32 %v3472, %v4138
      %v4140 = vpop.f32.mrb[0].mxu0
      %v4141 = vadd.f32 %v3476, %v4140
      %4142 = vmatprep.mubr.bf16.mxu0 %v3314
      %4143 = vmatmul.mubr.bf16.gmra.mrb[0].mxu0 %v3313
      %v4144 = vpop.f32.mrb[0].mxu0
      %v4145 = vadd.f32 %v3472, %v4144
      %v4146 = vpop.f32.mrb[0].mxu0
      %v4147 = vadd.f32 %v3476, %v4146
      %v4148 = vpop.f32.mrb[0].mxu0
      %v4149 = vadd.f32 %v3472, %v4148
      %v4150 = vpop.f32.mrb[0].mxu0
      %v4151 = vadd.f32 %v3476, %v4150
      %4152 = vmatprep.mubr.bf16.mxu0 %v3316
      %4153 = vmatmul.mubr.bf16.gmra.mrb[0].mxu0 %v3315
      %v4154 = vpop.f32.mrb[0].mxu0
      %v4155 = vadd.f32 %v3472, %v4154
      %v4156 = vpop.f32.mrb[0].mxu0
      %v4157 = vadd.f32 %v3476, %v4156
      %v4158 = vpop.f32.mrb[0].mxu0
      %v4159 = vadd.f32 %v3472, %v4158
      %v4160 = vpop.f32.mrb[0].mxu0
      %v4161 = vadd.f32 %v3476, %v4160
      %4162 = vmatprep.mubr.bf16.mxu0 %v3318
      %4163 = vmatmul.mubr.bf16.gmra.mrb[0].mxu0 %v3317
      %v4164 = vpop.f32.mrb[0].mxu0
      %v4165 = vadd.f32 %v3472, %v4164
      %v4166 = vpop.f32.mrb[0].mxu0
      %v4167 = vadd.f32 %v3476, %v4166
      %v4168 = vpop.f32.mrb[0].mxu0
      %v4169 = vadd.f32 %v3472, %v4168
      %v4170 = vpop.f32.mrb[0].mxu0
      %v4171 = vadd.f32 %v3476, %v4170
      %4172 = vmatprep.mubr.bf16.mxu0 %v3320
      %4173 = vmatmul.mubr.bf16.gmra.mrb[0].mxu0 %v3319
      %v4174 = vpop.f32.mrb[0].mxu0
      %v4175 = vadd.f32 %v3472, %v4174
      %v4176 = vpop.f32.mrb[0].mxu0
      %v4177 = vadd.f32 %v3476, %v4176
      %v4178 = vpop.f32.mrb[0].mxu0
      %v4179 = vadd.f32 %v3472, %v4178
      %v4180 = vpop.f32.mrb[0].mxu0
      %v4181 = vadd.f32 %v3476, %v4180
      %4182 = vmatprep.mubr.bf16.mxu0 %v3322
      %4183 = vmatmul.mubr.bf16.gmra.mrb[0].mxu0 %v3321
      %v4184 = vpop.f32.mrb[0].mxu0
      %v4185 = vadd.f32 %v3472, %v4184
      %v4186 = vpop.f32.mrb[0].mxu0
      %v4187 = vadd.f32 %v3476, %v4186
      %v4188 = vpop.f32.mrb[0].mxu0
      %v4189 = vadd.f32 %v3472, %v4188
      %v4190 = vpop.f32.mrb[0].mxu0
      %v4191 = vadd.f32 %v3476, %v4190
      %4192 = vmatprep.mubr.bf16.mxu0 %v3324
      %4193 = vmatmul.mubr.bf16.gmra.mrb[0].mxu0 %v3323
      %v4194 = vpop.f32.mrb[0].mxu0
      %v4195 = vadd.f32 %v3472, %v4194
      %v4196 = vpop.f32.mrb[0].mxu0
      %v4197 = vadd.f32 %v3476, %v4196
      %v4198 = vpop.f32.mrb[0].mxu0
      %v4199 = vadd.f32 %v3472, %v4198
      %v4200 = vpop.f32.mrb[0].mxu0
      %v4201 = vadd.f32 %v3476, %v4200
      %4202 = vmatprep.mubr.bf16.mxu0 %v3326
      %4203 = vmatmul.mubr.bf16.gmra.mrb[0].mxu0 %v3325
      %v4204 = vpop.f32.mrb[0].mxu0
      %v4205 = vadd.f32 %v3472, %v4204
      %v4206 = vpop.f32.mrb[0].mxu0
      %v4207 = vadd.f32 %v3476, %v4206
      %v4208 = vpop.f32.mrb[0].mxu0
      %v4209 = vadd.f32 %v3472, %v4208
      %v4210 = vpop.f32.mrb[0].mxu0
      %v4211 = vadd.f32 %v3476, %v4210
      %4212 = vmatprep.mubr.bf16.mxu0 %v3328
      %4213 = vmatmul.mubr.bf16.gmra.mrb[0].mxu0 %v3327
      %v4214 = vpop.f32.mrb[0].mxu0
      %v4215 = vadd.f32 %v3472, %v4214
      %v4216 = vpop.f32.mrb[0].mxu0
      %v4217 = vadd.f32 %v3476, %v4216
      %v4218 = vpop.f32.mrb[0].mxu0
      %v4219 = vadd.f32 %v3472, %v4218
      %v4220 = vpop.f32.mrb[0].mxu0
      %v4221 = vadd.f32 %v3476, %v4220
      %4222 = vmatprep.mubr.bf16.mxu0 %v3330
      %4223 = vmatmul.mubr.bf16.gmra.mrb[0].mxu0 %v3329
      %v4224 = vpop.f32.mrb[0].mxu0
      %v4225 = vadd.f32 %v3472, %v4224
      %v4226 = vpop.f32.mrb[0].mxu0
      %v4227 = vadd.f32 %v3476, %v4226
      %v4228 = vpop.f32.mrb[0].mxu0
      %v4229 = vadd.f32 %v3472, %v4228
      %v4230 = vpop.f32.mrb[0].mxu0
      %v4231 = vadd.f32 %v3476, %v4230
      %4232 = vmatprep.mubr.bf16.mxu0 %v3332
      %4233 = vmatmul.mubr.bf16.gmra.mrb[0].mxu0 %v3331
      %v4234 = vpop.f32.mrb[0].mxu0
      %v4235 = vadd.f32 %v3472, %v4234
      %v4236 = vpop.f32.mrb[0].mxu0
      %v4237 = vadd.f32 %v3476, %v4236
      %v4238 = vpop.f32.mrb[0].mxu0
      %v4239 = vadd.f32 %v3472, %v4238
      %v4240 = vpop.f32.mrb[0].mxu0
      %v4241 = vadd.f32 %v3476, %v4240
      %4242 = vmatprep.mubr.bf16.mxu0 %v3334
      %4243 = vmatmul.mubr.bf16.gmra.mrb[0].mxu0 %v3333
      %v4244 = vpop.f32.mrb[0].mxu0
      %v4245 = vadd.f32 %v3472, %v4244
      %v4246 = vpop.f32.mrb[0].mxu0
      %v4247 = vadd.f32 %v3476, %v4246
      %v4248 = vpop.f32.mrb[0].mxu0
      %v4249 = vadd.f32 %v3472, %v4248
      %v4250 = vpop.f32.mrb[0].mxu0
      %v4251 = vadd.f32 %v3476, %v4250
      %4252 = vmatprep.mubr.bf16.mxu0 %v3336
      %4253 = vmatmul.mubr.bf16.gmra.mrb[0].mxu0 %v3335
      %v4254 = vpop.f32.mrb[0].mxu0
      %v4255 = vadd.f32 %v3472, %v4254
      %v4256 = vpop.f32.mrb[0].mxu0
      %v4257 = vadd.f32 %v3476, %v4256
      %v4258 = vpop.f32.mrb[0].mxu0
      %v4259 = vadd.f32 %v3472, %v4258
      %v4260 = vpop.f32.mrb[0].mxu0
      %v4261 = vadd.f32 %v3476, %v4260
      %4262 = vmatprep.mubr.bf16.mxu0 %v3338
      %4263 = vmatmul.mubr.bf16.gmra.mrb[0].mxu0 %v3337
      %v4264 = vpop.f32.mrb[0].mxu0
      %v4265 = vadd.f32 %v3472, %v4264
      %v4266 = vpop.f32.mrb[0].mxu0
      %v4267 = vadd.f32 %v3476, %v4266
      %v4268 = vpop.f32.mrb[0].mxu0
      %v4269 = vadd.f32 %v3472, %v4268
      %v4270 = vpop.f32.mrb[0].mxu0
      %v4271 = vadd.f32 %v3476, %v4270
      %4272 = vdwg.mxu0
      %4273 = vmatprep.subr.bf16.mxu0 %v3859
      %4274 = vmatpush1.bf16.msra.mxu0 %v3858
      %4275 = vmatprep.subr.bf16.mxu0 %v3866
      %4276 = vmatpush1.bf16.msra.mxu0 %v3865
      %4277 = vmatprep.subr.bf16.mxu0 %v3873
      %4278 = vmatpush1.bf16.msra.mxu0 %v3872
      %4279 = vmatprep.subr.bf16.mxu0 %v3880
      %4280 = vmatpush1.bf16.msra.mxu0 %v3879
      %4281 = vmatprep.subr.bf16.mxu0 %v3887
      %4282 = vmatpush1.bf16.msra.mxu0 %v3886
      %4283 = vmatprep.subr.bf16.mxu0 %v3894
      %4284 = vmatpush1.bf16.msra.mxu0 %v3893
      %4285 = vmatprep.subr.bf16.mxu0 %v3901
      %4286 = vmatpush1.bf16.msra.mxu0 %v3900
      %4287 = vmatprep.subr.bf16.mxu0 %v3908
      %4288 = vmatpush1.bf16.msra.mxu0 %v3907
      %4289 = vmatprep.subr.bf16.mxu0 %v3915
      %4290 = vmatpush1.bf16.msra.mxu0 %v3914
      %4291 = vmatprep.subr.bf16.mxu0 %v3922
      %4292 = vmatpush1.bf16.msra.mxu0 %v3921
      %4293 = vmatprep.subr.bf16.mxu0 %v3929
      %4294 = vmatpush1.bf16.msra.mxu0 %v3928
      %4295 = vmatprep.subr.bf16.mxu0 %v3936
      %4296 = vmatpush1.bf16.msra.mxu0 %v3935
      %4297 = vmatprep.subr.bf16.mxu0 %v3943
      %4298 = vmatpush1.bf16.msra.mxu0 %v3942
      %4299 = vmatprep.subr.bf16.mxu0 %v3950
      %4300 = vmatpush1.bf16.msra.mxu0 %v3949
      %4301 = vmatprep.subr.bf16.mxu0 %v3957
      %4302 = vmatpush1.bf16.msra.mxu0 %v3956
      %4303 = vmatprep.subr.bf16.mxu0 %v3964
      %4304 = vmatpush1.bf16.msra.mxu0 %v3963
      %4305 = vmatprep.mubr.bf16.mxu0 %v3308
      %4306 = vmatmul.mubr.bf16.gmra.mrb[0].mxu0 %v3307
      %v4307 = vpop.f32.mrb[0].mxu0
      %v4308 = vadd.f32 %v3480, %v4307
      %v4309 = vpop.f32.mrb[0].mxu0
      %v4310 = vadd.f32 %v3484, %v4309
      %v4311 = vpop.f32.mrb[0].mxu0
      %v4312 = vadd.f32 %v3480, %v4311
      %v4313 = vpop.f32.mrb[0].mxu0
      %v4314 = vadd.f32 %v3484, %v4313
      %4315 = vmatprep.mubr.bf16.mxu0 %v3310
      %4316 = vmatmul.mubr.bf16.gmra.mrb[0].mxu0 %v3309
      %v4317 = vpop.f32.mrb[0].mxu0
      %v4318 = vadd.f32 %v3480, %v4317
      %v4319 = vpop.f32.mrb[0].mxu0
      %v4320 = vadd.f32 %v3484, %v4319
      %v4321 = vpop.f32.mrb[0].mxu0
      %v4322 = vadd.f32 %v3480, %v4321
      %v4323 = vpop.f32.mrb[0].mxu0
      %v4324 = vadd.f32 %v3484, %v4323
      %4325 = vmatprep.mubr.bf16.mxu0 %v3312
      %4326 = vmatmul.mubr.bf16.gmra.mrb[0].mxu0 %v3311
      %v4327 = vpop.f32.mrb[0].mxu0
      %v4328 = vadd.f32 %v3480, %v4327
      %v4329 = vpop.f32.mrb[0].mxu0
      %v4330 = vadd.f32 %v3484, %v4329
      %v4331 = vpop.f32.mrb[0].mxu0
      %v4332 = vadd.f32 %v3480, %v4331
      %v4333 = vpop.f32.mrb[0].mxu0
      %v4334 = vadd.f32 %v3484, %v4333
      %4335 = vmatprep.mubr.bf16.mxu0 %v3314
      %4336 = vmatmul.mubr.bf16.gmra.mrb[0].mxu0 %v3313
      %v4337 = vpop.f32.mrb[0].mxu0
      %v4338 = vadd.f32 %v3480, %v4337
      %v4339 = vpop.f32.mrb[0].mxu0
      %v4340 = vadd.f32 %v3484, %v4339
      %v4341 = vpop.f32.mrb[0].mxu0
      %v4342 = vadd.f32 %v3480, %v4341
      %v4343 = vpop.f32.mrb[0].mxu0
      %v4344 = vadd.f32 %v3484, %v4343
      %4345 = vmatprep.mubr.bf16.mxu0 %v3316
      %4346 = vmatmul.mubr.bf16.gmra.mrb[0].mxu0 %v3315
      %v4347 = vpop.f32.mrb[0].mxu0
      %v4348 = vadd.f32 %v3480, %v4347
      %v4349 = vpop.f32.mrb[0].mxu0
      %v4350 = vadd.f32 %v3484, %v4349
      %v4351 = vpop.f32.mrb[0].mxu0
      %v4352 = vadd.f32 %v3480, %v4351
      %v4353 = vpop.f32.mrb[0].mxu0
      %v4354 = vadd.f32 %v3484, %v4353
      %4355 = vmatprep.mubr.bf16.mxu0 %v3318
      %4356 = vmatmul.mubr.bf16.gmra.mrb[0].mxu0 %v3317
      %v4357 = vpop.f32.mrb[0].mxu0
      %v4358 = vadd.f32 %v3480, %v4357
      %v4359 = vpop.f32.mrb[0].mxu0
      %v4360 = vadd.f32 %v3484, %v4359
      %v4361 = vpop.f32.mrb[0].mxu0
      %v4362 = vadd.f32 %v3480, %v4361
      %v4363 = vpop.f32.mrb[0].mxu0
      %v4364 = vadd.f32 %v3484, %v4363
      %4365 = vmatprep.mubr.bf16.mxu0 %v3320
      %4366 = vmatmul.mubr.bf16.gmra.mrb[0].mxu0 %v3319
      %v4367 = vpop.f32.mrb[0].mxu0
      %v4368 = vadd.f32 %v3480, %v4367
      %v4369 = vpop.f32.mrb[0].mxu0
      %v4370 = vadd.f32 %v3484, %v4369
      %v4371 = vpop.f32.mrb[0].mxu0
      %v4372 = vadd.f32 %v3480, %v4371
      %v4373 = vpop.f32.mrb[0].mxu0
      %v4374 = vadd.f32 %v3484, %v4373
      %4375 = vmatprep.mubr.bf16.mxu0 %v3322
      %4376 = vmatmul.mubr.bf16.gmra.mrb[0].mxu0 %v3321
      %v4377 = vpop.f32.mrb[0].mxu0
      %v4378 = vadd.f32 %v3480, %v4377
      %v4379 = vpop.f32.mrb[0].mxu0
      %v4380 = vadd.f32 %v3484, %v4379
      %v4381 = vpop.f32.mrb[0].mxu0
      %v4382 = vadd.f32 %v3480, %v4381
      %v4383 = vpop.f32.mrb[0].mxu0
      %v4384 = vadd.f32 %v3484, %v4383
      %4385 = vmatprep.mubr.bf16.mxu0 %v3324
      %4386 = vmatmul.mubr.bf16.gmra.mrb[0].mxu0 %v3323
      %v4387 = vpop.f32.mrb[0].mxu0
      %v4388 = vadd.f32 %v3480, %v4387
      %v4389 = vpop.f32.mrb[0].mxu0
      %v4390 = vadd.f32 %v3484, %v4389
      %v4391 = vpop.f32.mrb[0].mxu0
      %v4392 = vadd.f32 %v3480, %v4391
      %v4393 = vpop.f32.mrb[0].mxu0
      %v4394 = vadd.f32 %v3484, %v4393
      %4395 = vmatprep.mubr.bf16.mxu0 %v3326
      %4396 = vmatmul.mubr.bf16.gmra.mrb[0].mxu0 %v3325
      %v4397 = vpop.f32.mrb[0].mxu0
      %v4398 = vadd.f32 %v3480, %v4397
      %v4399 = vpop.f32.mrb[0].mxu0
      %v4400 = vadd.f32 %v3484, %v4399
      %v4401 = vpop.f32.mrb[0].mxu0
      %v4402 = vadd.f32 %v3480, %v4401
      %v4403 = vpop.f32.mrb[0].mxu0
      %v4404 = vadd.f32 %v3484, %v4403
      %4405 = vmatprep.mubr.bf16.mxu0 %v3328
      %4406 = vmatmul.mubr.bf16.gmra.mrb[0].mxu0 %v3327
      %v4407 = vpop.f32.mrb[0].mxu0
      %v4408 = vadd.f32 %v3480, %v4407
      %v4409 = vpop.f32.mrb[0].mxu0
      %v4410 = vadd.f32 %v3484, %v4409
      %v4411 = vpop.f32.mrb[0].mxu0
      %v4412 = vadd.f32 %v3480, %v4411
      %v4413 = vpop.f32.mrb[0].mxu0
      %v4414 = vadd.f32 %v3484, %v4413
      %4415 = vmatprep.mubr.bf16.mxu0 %v3330
      %4416 = vmatmul.mubr.bf16.gmra.mrb[0].mxu0 %v3329
      %v4417 = vpop.f32.mrb[0].mxu0
      %v4418 = vadd.f32 %v3480, %v4417
      %v4419 = vpop.f32.mrb[0].mxu0
      %v4420 = vadd.f32 %v3484, %v4419
      %v4421 = vpop.f32.mrb[0].mxu0
      %v4422 = vadd.f32 %v3480, %v4421
      %v4423 = vpop.f32.mrb[0].mxu0
      %v4424 = vadd.f32 %v3484, %v4423
      %4425 = vmatprep.mubr.bf16.mxu0 %v3332
      %4426 = vmatmul.mubr.bf16.gmra.mrb[0].mxu0 %v3331
      %v4427 = vpop.f32.mrb[0].mxu0
      %v4428 = vadd.f32 %v3480, %v4427
      %v4429 = vpop.f32.mrb[0].mxu0
      %v4430 = vadd.f32 %v3484, %v4429
      %v4431 = vpop.f32.mrb[0].mxu0
      %v4432 = vadd.f32 %v3480, %v4431
      %v4433 = vpop.f32.mrb[0].mxu0
      %v4434 = vadd.f32 %v3484, %v4433
      %4435 = vmatprep.mubr.bf16.mxu0 %v3334
      %4436 = vmatmul.mubr.bf16.gmra.mrb[0].mxu0 %v3333
      %v4437 = vpop.f32.mrb[0].mxu0
      %v4438 = vadd.f32 %v3480, %v4437
      %v4439 = vpop.f32.mrb[0].mxu0
      %v4440 = vadd.f32 %v3484, %v4439
      %v4441 = vpop.f32.mrb[0].mxu0
      %v4442 = vadd.f32 %v3480, %v4441
      %v4443 = vpop.f32.mrb[0].mxu0
      %v4444 = vadd.f32 %v3484, %v4443
      %4445 = vmatprep.mubr.bf16.mxu0 %v3336
      %4446 = vmatmul.mubr.bf16.gmra.mrb[0].mxu0 %v3335
      %v4447 = vpop.f32.mrb[0].mxu0
      %v4448 = vadd.f32 %v3480, %v4447
      %v4449 = vpop.f32.mrb[0].mxu0
      %v4450 = vadd.f32 %v3484, %v4449
      %v4451 = vpop.f32.mrb[0].mxu0
      %v4452 = vadd.f32 %v3480, %v4451
      %v4453 = vpop.f32.mrb[0].mxu0
      %v4454 = vadd.f32 %v3484, %v4453
      %4455 = vmatprep.mubr.bf16.mxu0 %v3338
      %4456 = vmatmul.mubr.bf16.gmra.mrb[0].mxu0 %v3337
      %v4457 = vpop.f32.mrb[0].mxu0
      %v4458 = vadd.f32 %v3480, %v4457
      %v4459 = vpop.f32.mrb[0].mxu0
      %v4460 = vadd.f32 %v3484, %v4459
      %v4461 = vpop.f32.mrb[0].mxu0
      %v4462 = vadd.f32 %v3480, %v4461
      %v4463 = vpop.f32.mrb[0].mxu0
      %v4464 = vadd.f32 %v3484, %v4463
      %4465 = vdwg.mxu0
      %4466 = vmatprep.subr.bf16.mxu0 %v3861
      %4467 = vmatpush1.bf16.msra.mxu0 %v3860
      %4468 = vmatprep.subr.bf16.mxu0 %v3868
      %4469 = vmatpush1.bf16.msra.mxu0 %v3867
      %4470 = vmatprep.subr.bf16.mxu0 %v3875
      %4471 = vmatpush1.bf16.msra.mxu0 %v3874
      %4472 = vmatprep.subr.bf16.mxu0 %v3882
      %4473 = vmatpush1.bf16.msra.mxu0 %v3881
      %4474 = vmatprep.subr.bf16.mxu0 %v3889
      %4475 = vmatpush1.bf16.msra.mxu0 %v3888
      %4476 = vmatprep.subr.bf16.mxu0 %v3896
      %4477 = vmatpush1.bf16.msra.mxu0 %v3895
      %4478 = vmatprep.subr.bf16.mxu0 %v3903
      %4479 = vmatpush1.bf16.msra.mxu0 %v3902
      %4480 = vmatprep.subr.bf16.mxu0 %v3910
      %4481 = vmatpush1.bf16.msra.mxu0 %v3909
      %4482 = vmatprep.subr.bf16.mxu0 %v3917
      %4483 = vmatpush1.bf16.msra.mxu0 %v3916
      %4484 = vmatprep.subr.bf16.mxu0 %v3924
      %4485 = vmatpush1.bf16.msra.mxu0 %v3923
      %4486 = vmatprep.subr.bf16.mxu0 %v3931
      %4487 = vmatpush1.bf16.msra.mxu0 %v3930
      %4488 = vmatprep.subr.bf16.mxu0 %v3938
      %4489 = vmatpush1.bf16.msra.mxu0 %v3937
      %4490 = vmatprep.subr.bf16.mxu0 %v3945
      %4491 = vmatpush1.bf16.msra.mxu0 %v3944
      %4492 = vmatprep.subr.bf16.mxu0 %v3952
      %4493 = vmatpush1.bf16.msra.mxu0 %v3951
      %4494 = vmatprep.subr.bf16.mxu0 %v3959
      %4495 = vmatpush1.bf16.msra.mxu0 %v3958
      %4496 = vmatprep.subr.bf16.mxu0 %v3966
      %4497 = vmatpush1.bf16.msra.mxu0 %v3965
      %4498 = vmatprep.mubr.bf16.mxu0 %v3308
      %4499 = vmatmul.mubr.bf16.gmra.mrb[0].mxu0 %v3307
      %v4500 = vpop.f32.mrb[0].mxu0
      %v4501 = vadd.f32 %v3488, %v4500
      %v4502 = vpop.f32.mrb[0].mxu0
      %v4503 = vadd.f32 %v3492, %v4502
      %v4504 = vpop.f32.mrb[0].mxu0
      %v4505 = vadd.f32 %v3488, %v4504
      %v4506 = vpop.f32.mrb[0].mxu0
      %v4507 = vadd.f32 %v3492, %v4506
      %4508 = vmatprep.mubr.bf16.mxu0 %v3310
      %4509 = vmatmul.mubr.bf16.gmra.mrb[0].mxu0 %v3309
      %v4510 = vpop.f32.mrb[0].mxu0
      %v4511 = vadd.f32 %v3488, %v4510
      %v4512 = vpop.f32.mrb[0].mxu0
      %v4513 = vadd.f32 %v3492, %v4512
      %v4514 = vpop.f32.mrb[0].mxu0
      %v4515 = vadd.f32 %v3488, %v4514
      %v4516 = vpop.f32.mrb[0].mxu0
      %v4517 = vadd.f32 %v3492, %v4516
      %4518 = vmatprep.mubr.bf16.mxu0 %v3312
      %4519 = vmatmul.mubr.bf16.gmra.mrb[0].mxu0 %v3311
      %v4520 = vpop.f32.mrb[0].mxu0
      %v4521 = vadd.f32 %v3488, %v4520
      %v4522 = vpop.f32.mrb[0].mxu0
      %v4523 = vadd.f32 %v3492, %v4522
      %v4524 = vpop.f32.mrb[0].mxu0
      %v4525 = vadd.f32 %v3488, %v4524
      %v4526 = vpop.f32.mrb[0].mxu0
      %v4527 = vadd.f32 %v3492, %v4526
      %4528 = vmatprep.mubr.bf16.mxu0 %v3314
      %4529 = vmatmul.mubr.bf16.gmra.mrb[0].mxu0 %v3313
      %v4530 = vpop.f32.mrb[0].mxu0
      %v4531 = vadd.f32 %v3488, %v4530
      %v4532 = vpop.f32.mrb[0].mxu0
      %v4533 = vadd.f32 %v3492, %v4532
      %v4534 = vpop.f32.mrb[0].mxu0
      %v4535 = vadd.f32 %v3488, %v4534
      %v4536 = vpop.f32.mrb[0].mxu0
      %v4537 = vadd.f32 %v3492, %v4536
      %4538 = vmatprep.mubr.bf16.mxu0 %v3316
      %4539 = vmatmul.mubr.bf16.gmra.mrb[0].mxu0 %v3315
      %v4540 = vpop.f32.mrb[0].mxu0
      %v4541 = vadd.f32 %v3488, %v4540
      %v4542 = vpop.f32.mrb[0].mxu0
      %v4543 = vadd.f32 %v3492, %v4542
      %v4544 = vpop.f32.mrb[0].mxu0
      %v4545 = vadd.f32 %v3488, %v4544
      %v4546 = vpop.f32.mrb[0].mxu0
      %v4547 = vadd.f32 %v3492, %v4546
      %4548 = vmatprep.mubr.bf16.mxu0 %v3318
      %4549 = vmatmul.mubr.bf16.gmra.mrb[0].mxu0 %v3317
      %v4550 = vpop.f32.mrb[0].mxu0
      %v4551 = vadd.f32 %v3488, %v4550
      %v4552 = vpop.f32.mrb[0].mxu0
      %v4553 = vadd.f32 %v3492, %v4552
      %v4554 = vpop.f32.mrb[0].mxu0
      %v4555 = vadd.f32 %v3488, %v4554
      %v4556 = vpop.f32.mrb[0].mxu0
      %v4557 = vadd.f32 %v3492, %v4556
      %4558 = vmatprep.mubr.bf16.mxu0 %v3320
      %4559 = vmatmul.mubr.bf16.gmra.mrb[0].mxu0 %v3319
      %v4560 = vpop.f32.mrb[0].mxu0
      %v4561 = vadd.f32 %v3488, %v4560
      %v4562 = vpop.f32.mrb[0].mxu0
      %v4563 = vadd.f32 %v3492, %v4562
      %v4564 = vpop.f32.mrb[0].mxu0
      %v4565 = vadd.f32 %v3488, %v4564
      %v4566 = vpop.f32.mrb[0].mxu0
      %v4567 = vadd.f32 %v3492, %v4566
      %4568 = vmatprep.mubr.bf16.mxu0 %v3322
      %4569 = vmatmul.mubr.bf16.gmra.mrb[0].mxu0 %v3321
      %v4570 = vpop.f32.mrb[0].mxu0
      %v4571 = vadd.f32 %v3488, %v4570
      %v4572 = vpop.f32.mrb[0].mxu0
      %v4573 = vadd.f32 %v3492, %v4572
      %v4574 = vpop.f32.mrb[0].mxu0
      %v4575 = vadd.f32 %v3488, %v4574
      %v4576 = vpop.f32.mrb[0].mxu0
      %v4577 = vadd.f32 %v3492, %v4576
      %4578 = vmatprep.mubr.bf16.mxu0 %v3324
      %4579 = vmatmul.mubr.bf16.gmra.mrb[0].mxu0 %v3323
      %v4580 = vpop.f32.mrb[0].mxu0
      %v4581 = vadd.f32 %v3488, %v4580
      %v4582 = vpop.f32.mrb[0].mxu0
      %v4583 = vadd.f32 %v3492, %v4582
      %v4584 = vpop.f32.mrb[0].mxu0
      %v4585 = vadd.f32 %v3488, %v4584
      %v4586 = vpop.f32.mrb[0].mxu0
      %v4587 = vadd.f32 %v3492, %v4586
      %4588 = vmatprep.mubr.bf16.mxu0 %v3326
      %4589 = vmatmul.mubr.bf16.gmra.mrb[0].mxu0 %v3325
      %v4590 = vpop.f32.mrb[0].mxu0
      %v4591 = vadd.f32 %v3488, %v4590
      %v4592 = vpop.f32.mrb[0].mxu0
      %v4593 = vadd.f32 %v3492, %v4592
      %v4594 = vpop.f32.mrb[0].mxu0
      %v4595 = vadd.f32 %v3488, %v4594
      %v4596 = vpop.f32.mrb[0].mxu0
      %v4597 = vadd.f32 %v3492, %v4596
      %4598 = vmatprep.mubr.bf16.mxu0 %v3328
      %4599 = vmatmul.mubr.bf16.gmra.mrb[0].mxu0 %v3327
      %v4600 = vpop.f32.mrb[0].mxu0
      %v4601 = vadd.f32 %v3488, %v4600
      %v4602 = vpop.f32.mrb[0].mxu0
      %v4603 = vadd.f32 %v3492, %v4602
      %v4604 = vpop.f32.mrb[0].mxu0
      %v4605 = vadd.f32 %v3488, %v4604
      %v4606 = vpop.f32.mrb[0].mxu0
      %v4607 = vadd.f32 %v3492, %v4606
      %4608 = vmatprep.mubr.bf16.mxu0 %v3330
      %4609 = vmatmul.mubr.bf16.gmra.mrb[0].mxu0 %v3329
      %v4610 = vpop.f32.mrb[0].mxu0
      %v4611 = vadd.f32 %v3488, %v4610
      %v4612 = vpop.f32.mrb[0].mxu0
      %v4613 = vadd.f32 %v3492, %v4612
      %v4614 = vpop.f32.mrb[0].mxu0
      %v4615 = vadd.f32 %v3488, %v4614
      %v4616 = vpop.f32.mrb[0].mxu0
      %v4617 = vadd.f32 %v3492, %v4616
      %4618 = vmatprep.mubr.bf16.mxu0 %v3332
      %4619 = vmatmul.mubr.bf16.gmra.mrb[0].mxu0 %v3331
      %v4620 = vpop.f32.mrb[0].mxu0
      %v4621 = vadd.f32 %v3488, %v4620
      %v4622 = vpop.f32.mrb[0].mxu0
      %v4623 = vadd.f32 %v3492, %v4622
      %v4624 = vpop.f32.mrb[0].mxu0
      %v4625 = vadd.f32 %v3488, %v4624
      %v4626 = vpop.f32.mrb[0].mxu0
      %v4627 = vadd.f32 %v3492, %v4626
      %4628 = vmatprep.mubr.bf16.mxu0 %v3334
      %4629 = vmatmul.mubr.bf16.gmra.mrb[0].mxu0 %v3333
      %v4630 = vpop.f32.mrb[0].mxu0
      %v4631 = vadd.f32 %v3488, %v4630
      %v4632 = vpop.f32.mrb[0].mxu0
      %v4633 = vadd.f32 %v3492, %v4632
      %v4634 = vpop.f32.mrb[0].mxu0
      %v4635 = vadd.f32 %v3488, %v4634
      %v4636 = vpop.f32.mrb[0].mxu0
      %v4637 = vadd.f32 %v3492, %v4636
      %4638 = vmatprep.mubr.bf16.mxu0 %v3336
      %4639 = vmatmul.mubr.bf16.gmra.mrb[0].mxu0 %v3335
      %v4640 = vpop.f32.mrb[0].mxu0
      %v4641 = vadd.f32 %v3488, %v4640
      %v4642 = vpop.f32.mrb[0].mxu0
      %v4643 = vadd.f32 %v3492, %v4642
      %v4644 = vpop.f32.mrb[0].mxu0
      %v4645 = vadd.f32 %v3488, %v4644
      %v4646 = vpop.f32.mrb[0].mxu0
      %v4647 = vadd.f32 %v3492, %v4646
      %4648 = vmatprep.mubr.bf16.mxu0 %v3338
      %4649 = vmatmul.mubr.bf16.gmra.mrb[0].mxu0 %v3337
      %v4650 = vpop.f32.mrb[0].mxu0
      %v4651 = vadd.f32 %v3488, %v4650
      %v4652 = vpop.f32.mrb[0].mxu0
      %v4653 = vadd.f32 %v3492, %v4652
      %v4654 = vpop.f32.mrb[0].mxu0
      %v4655 = vadd.f32 %v3488, %v4654
      %v4656 = vpop.f32.mrb[0].mxu0
      %v4657 = vadd.f32 %v3492, %v4656
      %4658 = vdwg.mxu0
      %4659 = vmatprep.subr.bf16.mxu0 0
      %4660 = vmatpush1.bf16.msra.mxu0 %v3862
      %4661 = vmatprep.subr.bf16.mxu0 0
      %4662 = vmatpush1.bf16.msra.mxu0 %v3869
      %4663 = vmatprep.subr.bf16.mxu0 0
      %4664 = vmatpush1.bf16.msra.mxu0 %v3876
      %4665 = vmatprep.subr.bf16.mxu0 0
      %4666 = vmatpush1.bf16.msra.mxu0 %v3883
      %4667 = vmatprep.subr.bf16.mxu0 0
      %4668 = vmatpush1.bf16.msra.mxu0 %v3890
      %4669 = vmatprep.subr.bf16.mxu0 0
      %4670 = vmatpush1.bf16.msra.mxu0 %v3897
      %4671 = vmatprep.subr.bf16.mxu0 0
      %4672 = vmatpush1.bf16.msra.mxu0 %v3904
      %4673 = vmatprep.subr.bf16.mxu0 0
      %4674 = vmatpush1.bf16.msra.mxu0 %v3911
      %4675 = vmatprep.subr.bf16.mxu0 0
      %4676 = vmatpush1.bf16.msra.mxu0 %v3918
      %4677 = vmatprep.subr.bf16.mxu0 0
      %4678 = vmatpush1.bf16.msra.mxu0 %v3925
      %4679 = vmatprep.subr.bf16.mxu0 0
      %4680 = vmatpush1.bf16.msra.mxu0 %v3932
      %4681 = vmatprep.subr.bf16.mxu0 0
      %4682 = vmatpush1.bf16.msra.mxu0 %v3939
      %4683 = vmatprep.subr.bf16.mxu0 0
      %4684 = vmatpush1.bf16.msra.mxu0 %v3946
      %4685 = vmatprep.subr.bf16.mxu0 0
      %4686 = vmatpush1.bf16.msra.mxu0 %v3953
      %4687 = vmatprep.subr.bf16.mxu0 0
      %4688 = vmatpush1.bf16.msra.mxu0 %v3960
      %4689 = vmatprep.subr.bf16.mxu0 0
      %4690 = vmatpush1.bf16.msra.mxu0 %v3967
      %4691 = vmatprep.mubr.bf16.mxu0 %v3308
      %4692 = vmatmul.mubr.bf16.gmra.mrb[0].mxu0 %v3307
      %v4693 = vpop.f32.mrb[0].mxu0
      %v4694 = vadd.f32 %v3496, %v4693
      %v4695 = vpop.f32.mrb[0].mxu0
      %v4696 = vpop.f32.mrb[0].mxu0
      %v4697 = vadd.f32 %v3496, %v4696
      %v4698 = vpop.f32.mrb[0].mxu0
      %4699 = vmatprep.mubr.bf16.mxu0 %v3310
      %4700 = vmatmul.mubr.bf16.gmra.mrb[0].mxu0 %v3309
      %v4701 = vpop.f32.mrb[0].mxu0
      %v4702 = vadd.f32 %v3496, %v4701
      %v4703 = vpop.f32.mrb[0].mxu0
      %v4704 = vpop.f32.mrb[0].mxu0
      %v4705 = vadd.f32 %v3496, %v4704
      %v4706 = vpop.f32.mrb[0].mxu0
      %4707 = vmatprep.mubr.bf16.mxu0 %v3312
      %4708 = vmatmul.mubr.bf16.gmra.mrb[0].mxu0 %v3311
      %v4709 = vpop.f32.mrb[0].mxu0
      %v4710 = vadd.f32 %v3496, %v4709
      %v4711 = vpop.f32.mrb[0].mxu0
      %v4712 = vpop.f32.mrb[0].mxu0
      %v4713 = vadd.f32 %v3496, %v4712
      %v4714 = vpop.f32.mrb[0].mxu0
      %4715 = vmatprep.mubr.bf16.mxu0 %v3314
      %4716 = vmatmul.mubr.bf16.gmra.mrb[0].mxu0 %v3313
      %v4717 = vpop.f32.mrb[0].mxu0
      %v4718 = vadd.f32 %v3496, %v4717
      %v4719 = vpop.f32.mrb[0].mxu0
      %v4720 = vpop.f32.mrb[0].mxu0
      %v4721 = vadd.f32 %v3496, %v4720
      %v4722 = vpop.f32.mrb[0].mxu0
      %4723 = vmatprep.mubr.bf16.mxu0 %v3316
      %4724 = vmatmul.mubr.bf16.gmra.mrb[0].mxu0 %v3315
      %v4725 = vpop.f32.mrb[0].mxu0
      %v4726 = vadd.f32 %v3496, %v4725
      %v4727 = vpop.f32.mrb[0].mxu0
      %v4728 = vpop.f32.mrb[0].mxu0
      %v4729 = vadd.f32 %v3496, %v4728
      %v4730 = vpop.f32.mrb[0].mxu0
      %4731 = vmatprep.mubr.bf16.mxu0 %v3318
      %4732 = vmatmul.mubr.bf16.gmra.mrb[0].mxu0 %v3317
      %v4733 = vpop.f32.mrb[0].mxu0
      %v4734 = vadd.f32 %v3496, %v4733
      %v4735 = vpop.f32.mrb[0].mxu0
      %v4736 = vpop.f32.mrb[0].mxu0
      %v4737 = vadd.f32 %v3496, %v4736
      %v4738 = vpop.f32.mrb[0].mxu0
      %4739 = vmatprep.mubr.bf16.mxu0 %v3320
      %4740 = vmatmul.mubr.bf16.gmra.mrb[0].mxu0 %v3319
      %v4741 = vpop.f32.mrb[0].mxu0
      %v4742 = vadd.f32 %v3496, %v4741
      %v4743 = vpop.f32.mrb[0].mxu0
      %v4744 = vpop.f32.mrb[0].mxu0
      %v4745 = vadd.f32 %v3496, %v4744
      %v4746 = vpop.f32.mrb[0].mxu0
      %4747 = vmatprep.mubr.bf16.mxu0 %v3322
      %4748 = vmatmul.mubr.bf16.gmra.mrb[0].mxu0 %v3321
      %v4749 = vpop.f32.mrb[0].mxu0
      %v4750 = vadd.f32 %v3496, %v4749
      %v4751 = vpop.f32.mrb[0].mxu0
      %v4752 = vpop.f32.mrb[0].mxu0
      %v4753 = vadd.f32 %v3496, %v4752
      %v4754 = vpop.f32.mrb[0].mxu0
      %4755 = vmatprep.mubr.bf16.mxu0 %v3324
      %4756 = vmatmul.mubr.bf16.gmra.mrb[0].mxu0 %v3323
      %v4757 = vpop.f32.mrb[0].mxu0
      %v4758 = vadd.f32 %v3496, %v4757
      %v4759 = vpop.f32.mrb[0].mxu0
      %v4760 = vpop.f32.mrb[0].mxu0
      %v4761 = vadd.f32 %v3496, %v4760
      %v4762 = vpop.f32.mrb[0].mxu0
      %4763 = vmatprep.mubr.bf16.mxu0 %v3326
      %4764 = vmatmul.mubr.bf16.gmra.mrb[0].mxu0 %v3325
      %v4765 = vpop.f32.mrb[0].mxu0
      %v4766 = vadd.f32 %v3496, %v4765
      %v4767 = vpop.f32.mrb[0].mxu0
      %v4768 = vpop.f32.mrb[0].mxu0
      %v4769 = vadd.f32 %v3496, %v4768
      %v4770 = vpop.f32.mrb[0].mxu0
      %4771 = vmatprep.mubr.bf16.mxu0 %v3328
      %4772 = vmatmul.mubr.bf16.gmra.mrb[0].mxu0 %v3327
      %v4773 = vpop.f32.mrb[0].mxu0
      %v4774 = vadd.f32 %v3496, %v4773
      %v4775 = vpop.f32.mrb[0].mxu0
      %v4776 = vpop.f32.mrb[0].mxu0
      %v4777 = vadd.f32 %v3496, %v4776
      %v4778 = vpop.f32.mrb[0].mxu0
      %4779 = vmatprep.mubr.bf16.mxu0 %v3330
      %4780 = vmatmul.mubr.bf16.gmra.mrb[0].mxu0 %v3329
      %v4781 = vpop.f32.mrb[0].mxu0
      %v4782 = vadd.f32 %v3496, %v4781
      %v4783 = vpop.f32.mrb[0].mxu0
      %v4784 = vpop.f32.mrb[0].mxu0
      %v4785 = vadd.f32 %v3496, %v4784
      %v4786 = vpop.f32.mrb[0].mxu0
      %4787 = vmatprep.mubr.bf16.mxu0 %v3332
      %4788 = vmatmul.mubr.bf16.gmra.mrb[0].mxu0 %v3331
      %v4789 = vpop.f32.mrb[0].mxu0
      %v4790 = vadd.f32 %v3496, %v4789
      %v4791 = vpop.f32.mrb[0].mxu0
      %v4792 = vpop.f32.mrb[0].mxu0
      %v4793 = vadd.f32 %v3496, %v4792
      %v4794 = vpop.f32.mrb[0].mxu0
      %4795 = vmatprep.mubr.bf16.mxu0 %v3334
      %4796 = vmatmul.mubr.bf16.gmra.mrb[0].mxu0 %v3333
      %v4797 = vpop.f32.mrb[0].mxu0
      %v4798 = vadd.f32 %v3496, %v4797
      %v4799 = vpop.f32.mrb[0].mxu0
      %v4800 = vpop.f32.mrb[0].mxu0
      %v4801 = vadd.f32 %v3496, %v4800
      %v4802 = vpop.f32.mrb[0].mxu0
      %4803 = vmatprep.mubr.bf16.mxu0 %v3336
      %4804 = vmatmul.mubr.bf16.gmra.mrb[0].mxu0 %v3335
      %v4805 = vpop.f32.mrb[0].mxu0
      %v4806 = vadd.f32 %v3496, %v4805
      %v4807 = vpop.f32.mrb[0].mxu0
      %v4808 = vpop.f32.mrb[0].mxu0
      %v4809 = vadd.f32 %v3496, %v4808
      %v4810 = vpop.f32.mrb[0].mxu0
      %4811 = vmatprep.mubr.bf16.mxu0 %v3338
      %4812 = vmatmul.mubr.bf16.gmra.mrb[0].mxu0 %v3337
      %v4813 = vpop.f32.mrb[0].mxu0
      %v4814 = vadd.f32 %v3496, %v4813
      %v4815 = vpop.f32.mrb[0].mxu0
      %v4816 = vpop.f32.mrb[0].mxu0
      %v4817 = vadd.f32 %v3496, %v4816
      %v4818 = vpop.f32.mrb[0].mxu0
      %4819 = vdwg.mxu0
      %v4820 = vmax.f32 %v4115, 0.0
      %v4821 = vmax.f32 %v4117, 0.0
      %v4822 = vmax.f32 %v4308, 0.0
      %v4823 = vmax.f32 %v4310, 0.0
      %v4824 = vmax.f32 %v4501, 0.0
      %v4825 = vmax.f32 %v4503, 0.0
      %v4826 = vmax.f32 %v4694, 0.0
      %v4827 = vmax.f32 %v4119, 0.0
      %v4828 = vmax.f32 %v4121, 0.0
      %v4829 = vmax.f32 %v4312, 0.0
      %v4830 = vmax.f32 %v4314, 0.0
      %v4831 = vmax.f32 %v4505, 0.0
      %v4832 = vmax.f32 %v4507, 0.0
      %v4833 = vmax.f32 %v4697, 0.0
      %v4834 = vmax.f32 %v4125, 0.0
      %v4835 = vmax.f32 %v4127, 0.0
      %v4836 = vmax.f32 %v4318, 0.0
      %v4837 = vmax.f32 %v4320, 0.0
      %v4838 = vmax.f32 %v4511, 0.0
      %v4839 = vmax.f32 %v4513, 0.0
      %v4840 = vmax.f32 %v4702, 0.0
      %v4841 = vmax.f32 %v4129, 0.0
      %v4842 = vmax.f32 %v4131, 0.0
      %v4843 = vmax.f32 %v4322, 0.0
      %v4844 = vmax.f32 %v4324, 0.0
      %v4845 = vmax.f32 %v4515, 0.0
      %v4846 = vmax.f32 %v4517, 0.0
      %v4847 = vmax.f32 %v4705, 0.0
      %v4848 = vmax.f32 %v4135, 0.0
      %v4849 = vmax.f32 %v4137, 0.0
      %v4850 = vmax.f32 %v4328, 0.0
      %v4851 = vmax.f32 %v4330, 0.0
      %v4852 = vmax.f32 %v4521, 0.0
      %v4853 = vmax.f32 %v4523, 0.0
      %v4854 = vmax.f32 %v4710, 0.0
      %v4855 = vmax.f32 %v4139, 0.0
      %v4856 = vmax.f32 %v4141, 0.0
      %v4857 = vmax.f32 %v4332, 0.0
      %v4858 = vmax.f32 %v4334, 0.0
      %v4859 = vmax.f32 %v4525, 0.0
      %v4860 = vmax.f32 %v4527, 0.0
      %v4861 = vmax.f32 %v4713, 0.0
      %v4862 = vmax.f32 %v4145, 0.0
      %v4863 = vmax.f32 %v4147, 0.0
      %v4864 = vmax.f32 %v4338, 0.0
      %v4865 = vmax.f32 %v4340, 0.0
      %v4866 = vmax.f32 %v4531, 0.0
      %v4867 = vmax.f32 %v4533, 0.0
      %v4868 = vmax.f32 %v4718, 0.0
      %v4869 = vmax.f32 %v4149, 0.0
      %v4870 = vmax.f32 %v4151, 0.0
      %v4871 = vmax.f32 %v4342, 0.0
      %v4872 = vmax.f32 %v4344, 0.0
      %v4873 = vmax.f32 %v4535, 0.0
      %v4874 = vmax.f32 %v4537, 0.0
      %v4875 = vmax.f32 %v4721, 0.0
      %v4876 = vmax.f32 %v4155, 0.0
      %v4877 = vmax.f32 %v4157, 0.0
      %v4878 = vmax.f32 %v4348, 0.0
      %v4879 = vmax.f32 %v4350, 0.0
      %v4880 = vmax.f32 %v4541, 0.0
      %v4881 = vmax.f32 %v4543, 0.0
      %v4882 = vmax.f32 %v4726, 0.0
      %v4883 = vmax.f32 %v4159, 0.0
      %v4884 = vmax.f32 %v4161, 0.0
      %v4885 = vmax.f32 %v4352, 0.0
      %v4886 = vmax.f32 %v4354, 0.0
      %v4887 = vmax.f32 %v4545, 0.0
      %v4888 = vmax.f32 %v4547, 0.0
      %v4889 = vmax.f32 %v4729, 0.0
      %v4890 = vmax.f32 %v4165, 0.0
      %v4891 = vmax.f32 %v4167, 0.0
      %v4892 = vmax.f32 %v4358, 0.0
      %v4893 = vmax.f32 %v4360, 0.0
      %v4894 = vmax.f32 %v4551, 0.0
      %v4895 = vmax.f32 %v4553, 0.0
      %v4896 = vmax.f32 %v4734, 0.0
      %v4897 = vmax.f32 %v4169, 0.0
      %v4898 = vmax.f32 %v4171, 0.0
      %v4899 = vmax.f32 %v4362, 0.0
      %v4900 = vmax.f32 %v4364, 0.0
      %v4901 = vmax.f32 %v4555, 0.0
      %v4902 = vmax.f32 %v4557, 0.0
      %v4903 = vmax.f32 %v4737, 0.0
      %v4904 = vmax.f32 %v4175, 0.0
      %v4905 = vmax.f32 %v4177, 0.0
      %v4906 = vmax.f32 %v4368, 0.0
      %v4907 = vmax.f32 %v4370, 0.0
      %v4908 = vmax.f32 %v4561, 0.0
      %v4909 = vmax.f32 %v4563, 0.0
      %v4910 = vmax.f32 %v4742, 0.0
      %v4911 = vmax.f32 %v4179, 0.0
      %v4912 = vmax.f32 %v4181, 0.0
      %v4913 = vmax.f32 %v4372, 0.0
      %v4914 = vmax.f32 %v4374, 0.0
      %v4915 = vmax.f32 %v4565, 0.0
      %v4916 = vmax.f32 %v4567, 0.0
      %v4917 = vmax.f32 %v4745, 0.0
      %v4918 = vmax.f32 %v4185, 0.0
      %v4919 = vmax.f32 %v4187, 0.0
      %v4920 = vmax.f32 %v4378, 0.0
      %v4921 = vmax.f32 %v4380, 0.0
      %v4922 = vmax.f32 %v4571, 0.0
      %v4923 = vmax.f32 %v4573, 0.0
      %v4924 = vmax.f32 %v4750, 0.0
      %v4925 = vmax.f32 %v4189, 0.0
      %v4926 = vmax.f32 %v4191, 0.0
      %v4927 = vmax.f32 %v4382, 0.0
      %v4928 = vmax.f32 %v4384, 0.0
      %v4929 = vmax.f32 %v4575, 0.0
      %v4930 = vmax.f32 %v4577, 0.0
      %v4931 = vmax.f32 %v4753, 0.0
      %v4932 = vmax.f32 %v4195, 0.0
      %v4933 = vmax.f32 %v4197, 0.0
      %v4934 = vmax.f32 %v4388, 0.0
      %v4935 = vmax.f32 %v4390, 0.0
      %v4936 = vmax.f32 %v4581, 0.0
      %v4937 = vmax.f32 %v4583, 0.0
      %v4938 = vmax.f32 %v4758, 0.0
      %v4939 = vmax.f32 %v4199, 0.0
      %v4940 = vmax.f32 %v4201, 0.0
      %v4941 = vmax.f32 %v4392, 0.0
      %v4942 = vmax.f32 %v4394, 0.0
      %v4943 = vmax.f32 %v4585, 0.0
      %v4944 = vmax.f32 %v4587, 0.0
      %v4945 = vmax.f32 %v4761, 0.0
      %v4946 = vmax.f32 %v4205, 0.0
      %v4947 = vmax.f32 %v4207, 0.0
      %v4948 = vmax.f32 %v4398, 0.0
      %v4949 = vmax.f32 %v4400, 0.0
      %v4950 = vmax.f32 %v4591, 0.0
      %v4951 = vmax.f32 %v4593, 0.0
      %v4952 = vmax.f32 %v4766, 0.0
      %v4953 = vmax.f32 %v4209, 0.0
      %v4954 = vmax.f32 %v4211, 0.0
      %v4955 = vmax.f32 %v4402, 0.0
      %v4956 = vmax.f32 %v4404, 0.0
      %v4957 = vmax.f32 %v4595, 0.0
      %v4958 = vmax.f32 %v4597, 0.0
      %v4959 = vmax.f32 %v4769, 0.0
      %v4960 = vmax.f32 %v4215, 0.0
      %v4961 = vmax.f32 %v4217, 0.0
      %v4962 = vmax.f32 %v4408, 0.0
      %v4963 = vmax.f32 %v4410, 0.0
      %v4964 = vmax.f32 %v4601, 0.0
      %v4965 = vmax.f32 %v4603, 0.0
      %v4966 = vmax.f32 %v4774, 0.0
      %v4967 = vmax.f32 %v4219, 0.0
      %v4968 = vmax.f32 %v4221, 0.0
      %v4969 = vmax.f32 %v4412, 0.0
      %v4970 = vmax.f32 %v4414, 0.0
      %v4971 = vmax.f32 %v4605, 0.0
      %v4972 = vmax.f32 %v4607, 0.0
      %v4973 = vmax.f32 %v4777, 0.0
      %v4974 = vmax.f32 %v4225, 0.0
      %v4975 = vmax.f32 %v4227, 0.0
      %v4976 = vmax.f32 %v4418, 0.0
      %v4977 = vmax.f32 %v4420, 0.0
      %v4978 = vmax.f32 %v4611, 0.0
      %v4979 = vmax.f32 %v4613, 0.0
      %v4980 = vmax.f32 %v4782, 0.0
      %v4981 = vmax.f32 %v4229, 0.0
      %v4982 = vmax.f32 %v4231, 0.0
      %v4983 = vmax.f32 %v4422, 0.0
      %v4984 = vmax.f32 %v4424, 0.0
      %v4985 = vmax.f32 %v4615, 0.0
      %v4986 = vmax.f32 %v4617, 0.0
      %v4987 = vmax.f32 %v4785, 0.0
      %v4988 = vmax.f32 %v4235, 0.0
      %v4989 = vmax.f32 %v4237, 0.0
      %v4990 = vmax.f32 %v4428, 0.0
      %v4991 = vmax.f32 %v4430, 0.0
      %v4992 = vmax.f32 %v4621, 0.0
      %v4993 = vmax.f32 %v4623, 0.0
      %v4994 = vmax.f32 %v4790, 0.0
      %v4995 = vmax.f32 %v4239, 0.0
      %v4996 = vmax.f32 %v4241, 0.0
      %v4997 = vmax.f32 %v4432, 0.0
      %v4998 = vmax.f32 %v4434, 0.0
      %v4999 = vmax.f32 %v4625, 0.0
      %v5000 = vmax.f32 %v4627, 0.0
      %v5001 = vmax.f32 %v4793, 0.0
      %v5002 = vmax.f32 %v4245, 0.0
      %v5003 = vmax.f32 %v4247, 0.0
      %v5004 = vmax.f32 %v4438, 0.0
      %v5005 = vmax.f32 %v4440, 0.0
      %v5006 = vmax.f32 %v4631, 0.0
      %v5007 = vmax.f32 %v4633, 0.0
      %v5008 = vmax.f32 %v4798, 0.0
      %v5009 = vmax.f32 %v4249, 0.0
      %v5010 = vmax.f32 %v4251, 0.0
      %v5011 = vmax.f32 %v4442, 0.0
      %v5012 = vmax.f32 %v4444, 0.0
      %v5013 = vmax.f32 %v4635, 0.0
      %v5014 = vmax.f32 %v4637, 0.0
      %v5015 = vmax.f32 %v4801, 0.0
      %v5016 = vmax.f32 %v4255, 0.0
      %v5017 = vmax.f32 %v4257, 0.0
      %v5018 = vmax.f32 %v4448, 0.0
      %v5019 = vmax.f32 %v4450, 0.0
      %v5020 = vmax.f32 %v4641, 0.0
      %v5021 = vmax.f32 %v4643, 0.0
      %v5022 = vmax.f32 %v4806, 0.0
      %v5023 = vmax.f32 %v4259, 0.0
      %v5024 = vmax.f32 %v4261, 0.0
      %v5025 = vmax.f32 %v4452, 0.0
      %v5026 = vmax.f32 %v4454, 0.0
      %v5027 = vmax.f32 %v4645, 0.0
      %v5028 = vmax.f32 %v4647, 0.0
      %v5029 = vmax.f32 %v4809, 0.0
      %v5030 = vmax.f32 %v4265, 0.0
      %v5031 = vmax.f32 %v4267, 0.0
      %v5032 = vmax.f32 %v4458, 0.0
      %v5033 = vmax.f32 %v4460, 0.0
      %v5034 = vmax.f32 %v4651, 0.0
      %v5035 = vmax.f32 %v4653, 0.0
      %v5036 = vmax.f32 %v4814, 0.0
      %v5037 = vmax.f32 %v4269, 0.0
      %v5038 = vmax.f32 %v4271, 0.0
      %v5039 = vmax.f32 %v4462, 0.0
      %v5040 = vmax.f32 %v4464, 0.0
      %v5041 = vmax.f32 %v4655, 0.0
      %v5042 = vmax.f32 %v4657, 0.0
      %v5043 = vmax.f32 %v4817, 0.0
      %5044 = vst [vmem:[%s339] sm:$0xff] %v4820
      %5045 = vst [vmem:[%s339 + $0x8] sm:$0xff] %v4821
      %5046 = vst [vmem:[%s339 + $0x10] sm:$0xff] %v4822
      %5047 = vst [vmem:[%s339 + $0x18] sm:$0xff] %v4823
      %5048 = vst [vmem:[%s339 + $0x20] sm:$0xff] %v4824
      %5049 = vst [vmem:[%s339 + $0x28] sm:$0xff] %v4825
      %5050 = vst [vmem:[%s339 + $0x30] sm:$0xff] %v4826
      %5051 = vst [vmem:[%s339 + $0x38] sm:$0xff] %v4827
      %5052 = vst [vmem:[%s339 + $0x40] sm:$0xff] %v4828
      %5053 = vst [vmem:[%s339 + $0x48] sm:$0xff] %v4829
      %5054 = vst [vmem:[%s339 + $0x50] sm:$0xff] %v4830
      %5055 = vst [vmem:[%s339 + $0x58] sm:$0xff] %v4831
      %5056 = vst [vmem:[%s339 + $0x60] sm:$0xff] %v4832
      %5057 = vst [vmem:[%s339 + $0x68] sm:$0xff] %v4833
      %5058 = vst [vmem:[%s339 + $0x70] sm:$0xff] %v4834
      %5059 = vst [vmem:[%s339 + $0x78] sm:$0xff] %v4835
      %5060 = vst [vmem:[%s339 + $0x80] sm:$0xff] %v4836
      %5061 = vst [vmem:[%s339 + $0x88] sm:$0xff] %v4837
      %5062 = vst [vmem:[%s339 + $0x90] sm:$0xff] %v4838
      %5063 = vst [vmem:[%s339 + $0x98] sm:$0xff] %v4839
      %5064 = vst [vmem:[%s339 + $0xa0] sm:$0xff] %v4840
      %5065 = vst [vmem:[%s339 + $0xa8] sm:$0xff] %v4841
      %5066 = vst [vmem:[%s339 + $0xb0] sm:$0xff] %v4842
      %5067 = vst [vmem:[%s339 + $0xb8] sm:$0xff] %v4843
      %5068 = vst [vmem:[%s339 + $0xc0] sm:$0xff] %v4844
      %5069 = vst [vmem:[%s339 + $0xc8] sm:$0xff] %v4845
      %5070 = vst [vmem:[%s339 + $0xd0] sm:$0xff] %v4846
      %5071 = vst [vmem:[%s339 + $0xd8] sm:$0xff] %v4847
      %5072 = vst [vmem:[%s339 + $0xe0] sm:$0xff] %v4848
      %5073 = vst [vmem:[%s339 + $0xe8] sm:$0xff] %v4849
      %5074 = vst [vmem:[%s339 + $0xf0] sm:$0xff] %v4850
      %5075 = vst [vmem:[%s339 + $0xf8] sm:$0xff] %v4851
      %5076 = vst [vmem:[%s339 + $0x100] sm:$0xff] %v4852
      %5077 = vst [vmem:[%s339 + $0x108] sm:$0xff] %v4853
      %5078 = vst [vmem:[%s339 + $0x110] sm:$0xff] %v4854
      %5079 = vst [vmem:[%s339 + $0x118] sm:$0xff] %v4855
      %5080 = vst [vmem:[%s339 + $0x120] sm:$0xff] %v4856
      %5081 = vst [vmem:[%s339 + $0x128] sm:$0xff] %v4857
      %5082 = vst [vmem:[%s339 + $0x130] sm:$0xff] %v4858
      %5083 = vst [vmem:[%s339 + $0x138] sm:$0xff] %v4859
      %5084 = vst [vmem:[%s339 + $0x140] sm:$0xff] %v4860
      %5085 = vst [vmem:[%s339 + $0x148] sm:$0xff] %v4861
      %5086 = vst [vmem:[%s339 + $0x150] sm:$0xff] %v4862
      %5087 = vst [vmem:[%s339 + $0x158] sm:$0xff] %v4863
      %5088 = vst [vmem:[%s339 + $0x160] sm:$0xff] %v4864
      %5089 = vst [vmem:[%s339 + $0x168] sm:$0xff] %v4865
      %5090 = vst [vmem:[%s339 + $0x170] sm:$0xff] %v4866
      %5091 = vst [vmem:[%s339 + $0x178] sm:$0xff] %v4867
      %5092 = vst [vmem:[%s339 + $0x180] sm:$0xff] %v4868
      %5093 = vst [vmem:[%s339 + $0x188] sm:$0xff] %v4869
      %5094 = vst [vmem:[%s339 + $0x190] sm:$0xff] %v4870
      %5095 = vst [vmem:[%s339 + $0x198] sm:$0xff] %v4871
      %5096 = vst [vmem:[%s339 + $0x1a0] sm:$0xff] %v4872
      %5097 = vst [vmem:[%s339 + $0x1a8] sm:$0xff] %v4873
      %5098 = vst [vmem:[%s339 + $0x1b0] sm:$0xff] %v4874
      %5099 = vst [vmem:[%s339 + $0x1b8] sm:$0xff] %v4875
      %5100 = vst [vmem:[%s339 + $0x1c0] sm:$0xff] %v4876
      %5101 = vst [vmem:[%s339 + $0x1c8] sm:$0xff] %v4877
      %5102 = vst [vmem:[%s339 + $0x1d0] sm:$0xff] %v4878
      %5103 = vst [vmem:[%s339 + $0x1d8] sm:$0xff] %v4879
      %5104 = vst [vmem:[%s339 + $0x1e0] sm:$0xff] %v4880
      %5105 = vst [vmem:[%s339 + $0x1e8] sm:$0xff] %v4881
      %5106 = vst [vmem:[%s339 + $0x1f0] sm:$0xff] %v4882
      %5107 = vst [vmem:[%s339 + $0x1f8] sm:$0xff] %v4883
      %5108 = vst [vmem:[%s339 + $0x200] sm:$0xff] %v4884
      %5109 = vst [vmem:[%s339 + $0x208] sm:$0xff] %v4885
      %5110 = vst [vmem:[%s339 + $0x210] sm:$0xff] %v4886
      %5111 = vst [vmem:[%s339 + $0x218] sm:$0xff] %v4887
      %5112 = vst [vmem:[%s339 + $0x220] sm:$0xff] %v4888
      %5113 = vst [vmem:[%s339 + $0x228] sm:$0xff] %v4889
      %5114 = vst [vmem:[%s339 + $0x230] sm:$0xff] %v4890
      %5115 = vst [vmem:[%s339 + $0x238] sm:$0xff] %v4891
      %5116 = vst [vmem:[%s339 + $0x240] sm:$0xff] %v4892
      %5117 = vst [vmem:[%s339 + $0x248] sm:$0xff] %v4893
      %5118 = vst [vmem:[%s339 + $0x250] sm:$0xff] %v4894
      %5119 = vst [vmem:[%s339 + $0x258] sm:$0xff] %v4895
      %5120 = vst [vmem:[%s339 + $0x260] sm:$0xff] %v4896
      %5121 = vst [vmem:[%s339 + $0x268] sm:$0xff] %v4897
      %5122 = vst [vmem:[%s339 + $0x270] sm:$0xff] %v4898
      %5123 = vst [vmem:[%s339 + $0x278] sm:$0xff] %v4899
      %5124 = vst [vmem:[%s339 + $0x280] sm:$0xff] %v4900
      %5125 = vst [vmem:[%s339 + $0x288] sm:$0xff] %v4901
      %5126 = vst [vmem:[%s339 + $0x290] sm:$0xff] %v4902
      %5127 = vst [vmem:[%s339 + $0x298] sm:$0xff] %v4903
      %5128 = vst [vmem:[%s339 + $0x2a0] sm:$0xff] %v4904
      %5129 = vst [vmem:[%s339 + $0x2a8] sm:$0xff] %v4905
      %5130 = vst [vmem:[%s339 + $0x2b0] sm:$0xff] %v4906
      %5131 = vst [vmem:[%s339 + $0x2b8] sm:$0xff] %v4907
      %5132 = vst [vmem:[%s339 + $0x2c0] sm:$0xff] %v4908
      %5133 = vst [vmem:[%s339 + $0x2c8] sm:$0xff] %v4909
      %5134 = vst [vmem:[%s339 + $0x2d0] sm:$0xff] %v4910
      %5135 = vst [vmem:[%s339 + $0x2d8] sm:$0xff] %v4911
      %5136 = vst [vmem:[%s339 + $0x2e0] sm:$0xff] %v4912
      %5137 = vst [vmem:[%s339 + $0x2e8] sm:$0xff] %v4913
      %5138 = vst [vmem:[%s339 + $0x2f0] sm:$0xff] %v4914
      %5139 = vst [vmem:[%s339 + $0x2f8] sm:$0xff] %v4915
      %5140 = vst [vmem:[%s339 + $0x300] sm:$0xff] %v4916
      %5141 = vst [vmem:[%s339 + $0x308] sm:$0xff] %v4917
      %5142 = vst [vmem:[%s339 + $0x310] sm:$0xff] %v4918
      %5143 = vst [vmem:[%s339 + $0x318] sm:$0xff] %v4919
      %5144 = vst [vmem:[%s339 + $0x320] sm:$0xff] %v4920
      %5145 = vst [vmem:[%s339 + $0x328] sm:$0xff] %v4921
      %5146 = vst [vmem:[%s339 + $0x330] sm:$0xff] %v4922
      %5147 = vst [vmem:[%s339 + $0x338] sm:$0xff] %v4923
      %5148 = vst [vmem:[%s339 + $0x340] sm:$0xff] %v4924
      %5149 = vst [vmem:[%s339 + $0x348] sm:$0xff] %v4925
      %5150 = vst [vmem:[%s339 + $0x350] sm:$0xff] %v4926
      %5151 = vst [vmem:[%s339 + $0x358] sm:$0xff] %v4927
      %5152 = vst [vmem:[%s339 + $0x360] sm:$0xff] %v4928
      %5153 = vst [vmem:[%s339 + $0x368] sm:$0xff] %v4929
      %5154 = vst [vmem:[%s339 + $0x370] sm:$0xff] %v4930
      %5155 = vst [vmem:[%s339 + $0x378] sm:$0xff] %v4931
      %5156 = vst [vmem:[%s339 + $0x380] sm:$0xff] %v4932
      %5157 = vst [vmem:[%s339 + $0x388] sm:$0xff] %v4933
      %5158 = vst [vmem:[%s339 + $0x390] sm:$0xff] %v4934
      %5159 = vst [vmem:[%s339 + $0x398] sm:$0xff] %v4935
      %5160 = vst [vmem:[%s339 + $0x3a0] sm:$0xff] %v4936
      %5161 = vst [vmem:[%s339 + $0x3a8] sm:$0xff] %v4937
      %5162 = vst [vmem:[%s339 + $0x3b0] sm:$0xff] %v4938
      %5163 = vst [vmem:[%s339 + $0x3b8] sm:$0xff] %v4939
      %5164 = vst [vmem:[%s339 + $0x3c0] sm:$0xff] %v4940
      %5165 = vst [vmem:[%s339 + $0x3c8] sm:$0xff] %v4941
      %5166 = vst [vmem:[%s339 + $0x3d0] sm:$0xff] %v4942
      %5167 = vst [vmem:[%s339 + $0x3d8] sm:$0xff] %v4943
      %5168 = vst [vmem:[%s339 + $0x3e0] sm:$0xff] %v4944
      %5169 = vst [vmem:[%s339 + $0x3e8] sm:$0xff] %v4945
      %5170 = vst [vmem:[%s339 + $0x3f0] sm:$0xff] %v4946
      %5171 = vst [vmem:[%s339 + $0x3f8] sm:$0xff] %v4947
      %5172 = vst [vmem:[%s339 + $0x400] sm:$0xff] %v4948
      %5173 = vst [vmem:[%s339 + $0x408] sm:$0xff] %v4949
      %5174 = vst [vmem:[%s339 + $0x410] sm:$0xff] %v4950
      %5175 = vst [vmem:[%s339 + $0x418] sm:$0xff] %v4951
      %5176 = vst [vmem:[%s339 + $0x420] sm:$0xff] %v4952
      %5177 = vst [vmem:[%s339 + $0x428] sm:$0xff] %v4953
      %5178 = vst [vmem:[%s339 + $0x430] sm:$0xff] %v4954
      %5179 = vst [vmem:[%s339 + $0x438] sm:$0xff] %v4955
      %5180 = vst [vmem:[%s339 + $0x440] sm:$0xff] %v4956
      %5181 = vst [vmem:[%s339 + $0x448] sm:$0xff] %v4957
      %5182 = vst [vmem:[%s339 + $0x450] sm:$0xff] %v4958
      %5183 = vst [vmem:[%s339 + $0x458] sm:$0xff] %v4959
      %5184 = vst [vmem:[%s339 + $0x460] sm:$0xff] %v4960
      %5185 = vst [vmem:[%s339 + $0x468] sm:$0xff] %v4961
      %5186 = vst [vmem:[%s339 + $0x470] sm:$0xff] %v4962
      %5187 = vst [vmem:[%s339 + $0x478] sm:$0xff] %v4963
      %5188 = vst [vmem:[%s339 + $0x480] sm:$0xff] %v4964
      %5189 = vst [vmem:[%s339 + $0x488] sm:$0xff] %v4965
      %5190 = vst [vmem:[%s339 + $0x490] sm:$0xff] %v4966
      %5191 = vst [vmem:[%s339 + $0x498] sm:$0xff] %v4967
      %5192 = vst [vmem:[%s339 + $0x4a0] sm:$0xff] %v4968
      %5193 = vst [vmem:[%s339 + $0x4a8] sm:$0xff] %v4969
      %5194 = vst [vmem:[%s339 + $0x4b0] sm:$0xff] %v4970
      %5195 = vst [vmem:[%s339 + $0x4b8] sm:$0xff] %v4971
      %5196 = vst [vmem:[%s339 + $0x4c0] sm:$0xff] %v4972
      %5197 = vst [vmem:[%s339 + $0x4c8] sm:$0xff] %v4973
      %5198 = vst [vmem:[%s339 + $0x4d0] sm:$0xff] %v4974
      %5199 = vst [vmem:[%s339 + $0x4d8] sm:$0xff] %v4975
      %5200 = vst [vmem:[%s339 + $0x4e0] sm:$0xff] %v4976
      %5201 = vst [vmem:[%s339 + $0x4e8] sm:$0xff] %v4977
      %5202 = vst [vmem:[%s339 + $0x4f0] sm:$0xff] %v4978
      %5203 = vst [vmem:[%s339 + $0x4f8] sm:$0xff] %v4979
      %5204 = vst [vmem:[%s339 + $0x500] sm:$0xff] %v4980
      %5205 = vst [vmem:[%s339 + $0x508] sm:$0xff] %v4981
      %5206 = vst [vmem:[%s339 + $0x510] sm:$0xff] %v4982
      %5207 = vst [vmem:[%s339 + $0x518] sm:$0xff] %v4983
      %5208 = vst [vmem:[%s339 + $0x520] sm:$0xff] %v4984
      %5209 = vst [vmem:[%s339 + $0x528] sm:$0xff] %v4985
      %5210 = vst [vmem:[%s339 + $0x530] sm:$0xff] %v4986
      %5211 = vst [vmem:[%s339 + $0x538] sm:$0xff] %v4987
      %5212 = vst [vmem:[%s339 + $0x540] sm:$0xff] %v4988
      %5213 = vst [vmem:[%s339 + $0x548] sm:$0xff] %v4989
      %5214 = vst [vmem:[%s339 + $0x550] sm:$0xff] %v4990
      %5215 = vst [vmem:[%s339 + $0x558] sm:$0xff] %v4991
      %5216 = vst [vmem:[%s339 + $0x560] sm:$0xff] %v4992
      %5217 = vst [vmem:[%s339 + $0x568] sm:$0xff] %v4993
      %5218 = vst [vmem:[%s339 + $0x570] sm:$0xff] %v4994
      %5219 = vst [vmem:[%s339 + $0x578] sm:$0xff] %v4995
      %5220 = vst [vmem:[%s339 + $0x580] sm:$0xff] %v4996
      %5221 = vst [vmem:[%s339 + $0x588] sm:$0xff] %v4997
      %5222 = vst [vmem:[%s339 + $0x590] sm:$0xff] %v4998
      %5223 = vst [vmem:[%s339 + $0x598] sm:$0xff] %v4999
      %5224 = vst [vmem:[%s339 + $0x5a0] sm:$0xff] %v5000
      %5225 = vst [vmem:[%s339 + $0x5a8] sm:$0xff] %v5001
      %5226 = vst [vmem:[%s339 + $0x5b0] sm:$0xff] %v5002
      %5227 = vst [vmem:[%s339 + $0x5b8] sm:$0xff] %v5003
      %5228 = vst [vmem:[%s339 + $0x5c0] sm:$0xff] %v5004
      %5229 = vst [vmem:[%s339 + $0x5c8] sm:$0xff] %v5005
      %5230 = vst [vmem:[%s339 + $0x5d0] sm:$0xff] %v5006
      %5231 = vst [vmem:[%s339 + $0x5d8] sm:$0xff] %v5007
      %5232 = vst [vmem:[%s339 + $0x5e0] sm:$0xff] %v5008
      %5233 = vst [vmem:[%s339 + $0x5e8] sm:$0xff] %v5009
      %5234 = vst [vmem:[%s339 + $0x5f0] sm:$0xff] %v5010
      %5235 = vst [vmem:[%s339 + $0x5f8] sm:$0xff] %v5011
      %5236 = vst [vmem:[%s339 + $0x600] sm:$0xff] %v5012
      %5237 = vst [vmem:[%s339 + $0x608] sm:$0xff] %v5013
      %5238 = vst [vmem:[%s339 + $0x610] sm:$0xff] %v5014
      %5239 = vst [vmem:[%s339 + $0x618] sm:$0xff] %v5015
      %5240 = vst [vmem:[%s339 + $0x620] sm:$0xff] %v5016
      %5241 = vst [vmem:[%s339 + $0x628] sm:$0xff] %v5017
      %5242 = vst [vmem:[%s339 + $0x630] sm:$0xff] %v5018
      %5243 = vst [vmem:[%s339 + $0x638] sm:$0xff] %v5019
      %5244 = vst [vmem:[%s339 + $0x640] sm:$0xff] %v5020
      %5245 = vst [vmem:[%s339 + $0x648] sm:$0xff] %v5021
      %5246 = vst [vmem:[%s339 + $0x650] sm:$0xff] %v5022
      %5247 = vst [vmem:[%s339 + $0x658] sm:$0xff] %v5023
      %5248 = vst [vmem:[%s339 + $0x660] sm:$0xff] %v5024
      %5249 = vst [vmem:[%s339 + $0x668] sm:$0xff] %v5025
      %5250 = vst [vmem:[%s339 + $0x670] sm:$0xff] %v5026
      %5251 = vst [vmem:[%s339 + $0x678] sm:$0xff] %v5027
      %5252 = vst [vmem:[%s339 + $0x680] sm:$0xff] %v5028
      %5253 = vst [vmem:[%s339 + $0x688] sm:$0xff] %v5029
      %5254 = vst [vmem:[%s339 + $0x690] sm:$0xff] %v5030
      %5255 = vst [vmem:[%s339 + $0x698] sm:$0xff] %v5031
      %5256 = vst [vmem:[%s339 + $0x6a0] sm:$0xff] %v5032
      %5257 = vst [vmem:[%s339 + $0x6a8] sm:$0xff] %v5033
      %5258 = vst [vmem:[%s339 + $0x6b0] sm:$0xff] %v5034
      %5259 = vst [vmem:[%s339 + $0x6b8] sm:$0xff] %v5035
      %5260 = vst [vmem:[%s339 + $0x6c0] sm:$0xff] %v5036
      %5261 = vst [vmem:[%s339 + $0x6c8] sm:$0xff] %v5037
      %5262 = vst [vmem:[%s339 + $0x6d0] sm:$0xff] %v5038
      %5263 = vst [vmem:[%s339 + $0x6d8] sm:$0xff] %v5039
      %5264 = vst [vmem:[%s339 + $0x6e0] sm:$0xff] %v5040
      %5265 = vst [vmem:[%s339 + $0x6e8] sm:$0xff] %v5041
      %5266 = vst [vmem:[%s339 + $0x6f0] sm:$0xff] %v5042
      %5267 = vst [vmem:[%s339 + $0x6f8] sm:$0xff] %v5043
      %s5268 = smul.u32 32, %s20
      %p5269 = scmp.lt.s32.totalorder %s5268, 63
      %s5270 = scalar_select %p5269, %s5268, 63
      %s5271 = smul.addr %s5270, 7
      %s5272 = smul.addr %s5271, 8
      %s5273 = scalar_lea.vmem %s9, %s5272
      // Predicated region
      $region57: #{autoencoder_forward.1} parent=55 // pred_check
        %p5274 = pneg %p232
      $region58: #{autoencoder_forward.1} parent=55 // pred_check_branch
        %5276 = sbr.rel (%p5274) target = $region60
      $region59: #{autoencoder_forward.1} parent=55 // pred_region
        %s5277 = smul.u32 32, %s20
      $region60: #{autoencoder_forward.1} parent=55 // pred_fallthru
        _
    $region56: #{autoencoder_forward.1} parent=5 // pred_fallthru
      _
    %p5278 = scmp.le.s32.totalorder 2, %s15
    // Predicated region
    $region61: #{autoencoder_forward.1} parent=5 // pred_check
      %p5279 = pneg %p5278
    $region62: #{autoencoder_forward.1} parent=5 // pred_check_branch
      %5281 = sbr.rel (%p5279) target = $region64
    $region63: #{autoencoder_forward.1} parent=5 // pred_region
      %s5282 = ssub.s32 %s15, 2
      // Predicated region
      $region65: #{autoencoder_forward.1} parent=63 // pred_check
        %p5283 = pneg %p238
      $region66: #{autoencoder_forward.1} parent=63 // pred_check_branch
        %5285 = sbr.rel (%p5283) target = $region68
      $region67: #{autoencoder_forward.1} parent=63 // pred_region
        %s5286 = smul.u32 32, %s21
        %p5287 = scmp.lt.s32.totalorder %s5286, 63
        %s5288 = scalar_select %p5287, %s5286, 63
        %s5289 = smul.addr %s5288, 7
        %s5290 = smul.addr %s5289, 8
        %s5291 = scalar_lea.vmem %s9, %s5290
      $region68: #{autoencoder_forward.1} parent=63 // pred_fallthru
        _
    $region64: #{autoencoder_forward.1} parent=5 // pred_fallthru
      _
  $region6: #{autoencoder_forward.1} parent=0 // loop_footer
    %s19 = sadd.s32 1, %s15
  $region7: #{autoencoder_forward.1} parent=0 // loop_footer_branch
    %14 = sbr.rel target = $region3
  $region8: #{autoencoder_forward.1} parent=0 // loop_exit
    _

</llo_original>
